<compile_context>
chip_gen: v7x
topology: tpu7x:2x2x1
jax: 0.10.0
libtpu: 0.0.40
codegen_flags: <defaults>
</compile_context>

<pallas_src>
import jax
import jax.numpy as jnp
import numpy as np
from jax.experimental import pallas as pl
from jax.experimental.pallas import tpu as pltpu

PAD_F = 128  # lane-dense width used for the 3-wide input/output feature dims


def make_single_lstm_kernel(seq_len, pred_len, num_layers, hidden_dim,
                            matmul_dtype):
    H = hidden_dim
    L = num_layers

    def kernel(*refs):
        # refs = (obs, [w_fused, b] * L, w_hp, b_hp, out)
        obs_ref = refs[0]
        layer_refs = []
        idx = 1
        for _ in range(L):
            layer_refs.append((refs[idx], refs[idx + 1]))
            idx += 2
        w_hp_ref, b_hp_ref = refs[idx], refs[idx + 1]
        out_ref = refs[idx + 2]

        Bt = obs_ref.shape[1]

        # ---- Hoisted constants (computed once, reused by all 32 cells) ----
        lane = jax.lax.broadcasted_iota(jnp.int32, (Bt, 4 * H), 1)
        is_g = jnp.logical_and(lane >= 2 * H, lane < 3 * H)        # tanh gate
        pre_scale = jnp.where(is_g, jnp.float32(1.0), jnp.float32(0.5))
        b_fulls = [jnp.broadcast_to(b_ref[...], (Bt, 4 * H))
                   for (_, b_ref) in layer_refs]
        b_hp_full = jnp.broadcast_to(b_hp_ref[...], (Bt, PAD_F))

        def cell(x, h, c, w_ref, b_full):
            # Fused [x, h] @ [W_ih; W_hh] + (b_ih + b_hh): single MXU chain.
            xh = jnp.concatenate([x, h], axis=1).astype(matmul_dtype)
            gates = (jnp.dot(xh, w_ref[...],
                             preferred_element_type=jnp.float32)
                     + b_full)                                     # (Bt, 4H)
            # Single EUP pass: sigmoid(x) = 0.5*tanh(0.5x) + 0.5; the g gate
            # (lanes 2H..3H) uses tanh directly (pre_scale = 1 there).
            t = jnp.tanh(gates * pre_scale)
            act = jnp.where(is_g, t, 0.5 * t + 0.5)
            i_g = act[:, 0:H]
            f_g = act[:, H:2 * H]
            g_g = act[:, 2 * H:3 * H]
            o_g = act[:, 3 * H:4 * H]
            c_new = f_g * c + i_g * g_g
            h_new = o_g * jnp.tanh(c_new)
            return h_new, c_new

        # h_0 / c_0 are zeros; state stays in registers across both phases.
        hs = [jnp.zeros((Bt, H), jnp.float32) for _ in range(L)]
        cs = [jnp.zeros((Bt, H), jnp.float32) for _ in range(L)]

        # ---- Encoder (layer-major: each layer's weight reused across all
        #      seq_len consecutive matmuls; numerics identical) ----
        xs = [obs_ref[t] for t in range(seq_len)]                  # (Bt, PAD_F)
        for l in range(L):
            w_ref = layer_refs[l][0]
            b_full = b_fulls[l]
            h, c = hs[l], cs[l]
            outs = []
            for t in range(seq_len):
                h, c = cell(xs[t], h, c, w_ref, b_full)
                outs.append(h)
            hs[l], cs[l] = h, c
            xs = outs

        # ---- Decoder: autoregressive rollout (time-major, fully unrolled) ----
        x = obs_ref[seq_len - 1]          # last observed rel pos (lane-padded)
        for t in range(pred_len):
            for l in range(L):
                w_ref = layer_refs[l][0]
                hs[l], cs[l] = cell(x, hs[l], cs[l], w_ref, b_fulls[l])
                x = hs[l]
            pred = (jnp.dot(x.astype(matmul_dtype), w_hp_ref[...],
                            preferred_element_type=jnp.float32)
                    + b_hp_full)          # (Bt, PAD_F); lanes 3.. are exact 0
            out_ref[t] = pred             # lane-dense store
            x = pred                      # feedback hits zero-padded W rows

    return kernel


def single_lstm_forward(obs, params, num_layers, hidden_dim, pred_len,
                        matmul_dtype=jnp.float32):
    """obs: (seq_len, batch, 3), time-major like nn.LSTM's default layout."""
    seq_len, batch, in_dim = obs.shape
    H = hidden_dim
    assert in_dim == 3

    # Batch padding / tiling: min 8 sublanes; 128-row tiles for large batches,
    # sharded over the 'parallel' grid axis (uses v7x's second TensorCore).
    B_pad = max(8, -(-batch // 8) * 8)
    if B_pad > 128:
        B_pad = -(-B_pad // 128) * 128
        batch_tile = 128
    else:
        batch_tile = B_pad
    grid = (B_pad // batch_tile,)

    # Lane-dense padding of the 3-wide dims (zero-padded -> numerically exact).
    obs_p = jnp.zeros((seq_len, B_pad, PAD_F), jnp.float32)
    obs_p = obs_p.at[:, :batch, :in_dim].set(obs.astype(jnp.float32))

    fused_w, biases = [], []
    for l in range(num_layers):
        w_ih = params["w_ih"][l]                  # (in_l, 4H)
        w_hh = params["w_hh"][l]                  # (H, 4H)
        if l == 0:
            w_ih = jnp.zeros((PAD_F, 4 * H), jnp.float32).at[:in_dim, :].set(w_ih)
        fused_w.append(jnp.concatenate([w_ih, w_hh], axis=0).astype(matmul_dtype))
        biases.append(params["b"][l].astype(jnp.float32))   # fused b_ih + b_hh

    w_hp = jnp.zeros((H, PAD_F), jnp.float32).at[:, :3].set(params["w_hp"])
    w_hp = w_hp.astype(matmul_dtype)
    b_hp = jnp.zeros((1, PAD_F), jnp.float32).at[:, :3].set(params["b_hp"])

    args = [obs_p]
    in_specs = [pl.BlockSpec((seq_len, batch_tile, PAD_F), lambda b: (0, b, 0))]
    for l in range(num_layers):
        args += [fused_w[l], biases[l]]
        in_specs += [pl.BlockSpec(fused_w[l].shape, lambda b: (0, 0)),
                     pl.BlockSpec(biases[l].shape, lambda b: (0, 0))]
    args += [w_hp, b_hp]
    in_specs += [pl.BlockSpec(w_hp.shape, lambda b: (0, 0)),
                 pl.BlockSpec(b_hp.shape, lambda b: (0, 0))]

    kernel = make_single_lstm_kernel(seq_len, pred_len, num_layers, hidden_dim,
                                     matmul_dtype)

    out_p = pl.pallas_call(
        kernel,
        out_shape=jax.ShapeDtypeStruct((pred_len, B_pad, PAD_F), jnp.float32),
        grid_spec=pltpu.PrefetchScalarGridSpec(
            num_scalar_prefetch=0,
            grid=grid,
            in_specs=in_specs,
            out_specs=pl.BlockSpec((pred_len, batch_tile, PAD_F),
                                   lambda b: (0, b, 0)),
        ),
        compiler_params=pltpu.CompilerParams(
            dimension_semantics=("parallel",)),
    )(*args)

    return out_p[:, :batch, :3]


def init_params(key, hidden_dim, num_layers):
    """Deterministic PyTorch-style uniform(-1/sqrt(H), 1/sqrt(H)) init."""
    H = hidden_dim
    k = 1.0 / np.sqrt(H)
    keys = jax.random.split(key, 4 * num_layers + 2)
    w_ih, w_hh, b = [], [], []
    ki = 0
    for l in range(num_layers):
        in_dim = 3 if l == 0 else H
        w_ih.append(jax.random.uniform(keys[ki], (in_dim, 4 * H),
                                       jnp.float32, -k, k)); ki += 1
        w_hh.append(jax.random.uniform(keys[ki], (H, 4 * H),
                                       jnp.float32, -k, k)); ki += 1
        b_ih = jax.random.uniform(keys[ki], (1, 4 * H), jnp.float32, -k, k); ki += 1
        b_hh = jax.random.uniform(keys[ki], (1, 4 * H), jnp.float32, -k, k); ki += 1
        b.append(b_ih + b_hh)
    w_hp = jax.random.uniform(keys[ki], (H, 3), jnp.float32, -k, k); ki += 1
    b_hp = jax.random.uniform(keys[ki], (1, 3), jnp.float32, -k, k)
    return dict(w_ih=w_ih, w_hh=w_hh, b=b, w_hp=w_hp, b_hp=b_hp)


def reference_forward(obs, params, num_layers, hidden_dim, pred_len):
    """Pure-JAX reference mirroring the PyTorch forward semantics."""
    seq_len, batch, _ = obs.shape
    H = hidden_dim
    h = [jnp.zeros((batch, H), jnp.float32) for _ in range(num_layers)]
    c = [jnp.zeros((batch, H), jnp.float32) for _ in range(num_layers)]

    def cell(x, h_l, c_l, w_ih, w_hh, b):
        gates = x @ w_ih + h_l @ w_hh + b
        i = jax.nn.sigmoid(gates[:, :H])
        f = jax.nn.sigmoid(gates[:, H:2 * H])
        g = jnp.tanh(gates[:, 2 * H:3 * H])
        o = jax.nn.sigmoid(gates[:, 3 * H:])
        c_new = f * c_l + i * g
        h_new = o * jnp.tanh(c_new)
        return h_new, c_new

    for t in range(seq_len):
        x = obs[t]
        for l in range(num_layers):
            h[l], c[l] = cell(x, h[l], c[l],
                              params["w_ih"][l], params["w_hh"][l], params["b"][l])
            x = h[l]

    last_pos = obs[-1]
    preds = []
    for _ in range(pred_len):
        x = last_pos
        for l in range(num_layers):
            h[l], c[l] = cell(x, h[l], c[l],
                              params["w_ih"][l], params["w_hh"][l], params["b"][l])
            x = h[l]
        pred = x @ params["w_hp"] + params["b_hp"]
        preds.append(pred)
        last_pos = pred
    return jnp.stack(preds, axis=0)


if __name__ == "__main__":
    # Module hyperparameters (embedding_dim / drop_out are unused in forward).
    embedding_dim = 16
    hidden_dim = 32
    num_layers = 2
    pred_len = 8
    seq_len = 8
    batch = 4

    key = jax.random.PRNGKey(0)
    k_params, k_obs = jax.random.split(key)
    params = init_params(k_params, hidden_dim, num_layers)

    # obs_traj_rel: (seq_len, batch, 3) — relative displacements.
    obs_traj_rel = jax.random.normal(k_obs, (seq_len, batch, 3), jnp.float32)

    # matmul_dtype=jnp.bfloat16 would cut MXU issue further on v6e/v7x, but the
    # decoder is autoregressive over 8 steps, so keep f32 operands to hold the
    # 1e-3 tolerance exactly.
    out = single_lstm_forward(obs_traj_rel, params, num_layers, hidden_dim,
                              pred_len, matmul_dtype=jnp.float32)
    out = jax.block_until_ready(out)

    ref = reference_forward(obs_traj_rel, params, num_layers, hidden_dim, pred_len)
    np.testing.assert_allclose(np.asarray(out), np.asarray(ref),
                               rtol=1e-3, atol=1e-3)
    assert out.shape == (pred_len, batch, 3)

    print("KERNEL_OK")
</pallas_src>

<mosaic_0001>
module attributes {stable_mosaic.version = 11 : i64} {
  func.func @kernel(%arg0: i32, %arg1: memref<8x8x128xf32, #tpu.memory_space<vmem>>, %arg2: memref<160x128xf32, #tpu.memory_space<vmem>>, %arg3: memref<1x128xf32, #tpu.memory_space<vmem>>, %arg4: memref<64x128xf32, #tpu.memory_space<vmem>>, %arg5: memref<1x128xf32, #tpu.memory_space<vmem>>, %arg6: memref<32x128xf32, #tpu.memory_space<vmem>>, %arg7: memref<1x128xf32, #tpu.memory_space<vmem>>, %arg8: memref<8x8x128xf32, #tpu.memory_space<vmem>>) attributes {dimension_semantics = [#tpu.dimension_semantics<parallel>], iteration_bounds = array<i64: 1>, scalar_prefetch = 0 : i64, scratch_operands = 0 : i64, tpu.core_type = #tpu.core_type<tc>, window_params = [{transform_indices = @transform_0, window_bounds = array<i64: 8, 8, 128>}, {pipeline_mode = #tpu.pipeline_mode<synchronous>, transform_indices = @transform_1, window_bounds = array<i64: 160, 128>}, {pipeline_mode = #tpu.pipeline_mode<synchronous>, transform_indices = @transform_2, window_bounds = array<i64: 1, 128>}, {pipeline_mode = #tpu.pipeline_mode<synchronous>, transform_indices = @transform_3, window_bounds = array<i64: 64, 128>}, {pipeline_mode = #tpu.pipeline_mode<synchronous>, transform_indices = @transform_4, window_bounds = array<i64: 1, 128>}, {pipeline_mode = #tpu.pipeline_mode<synchronous>, transform_indices = @transform_5, window_bounds = array<i64: 32, 128>}, {pipeline_mode = #tpu.pipeline_mode<synchronous>, transform_indices = @transform_6, window_bounds = array<i64: 1, 128>}, {transform_indices = @transform_7, window_bounds = array<i64: 8, 8, 128>}]} {
    %0 = tpu.iota {dimensions = array<i32: 1>} : vector<8x128xi32>
    %c64_i32 = arith.constant 64 : i32
    %1 = vector.broadcast %c64_i32 : i32 to vector<8x128xi32>
    %2 = arith.cmpi sge, %0, %1 : vector<8x128xi32>
    %c96_i32 = arith.constant 96 : i32
    %3 = vector.broadcast %c96_i32 : i32 to vector<8x128xi32>
    %4 = arith.cmpi slt, %0, %3 : vector<8x128xi32>
    %5 = arith.andi %2, %4 : vector<8x128xi1>
    %cst = arith.constant 1.000000e+00 : f32
    %cst_0 = arith.constant 5.000000e-01 : f32
    %6 = vector.broadcast %cst : f32 to vector<8x128xf32>
    %7 = vector.broadcast %cst_0 : f32 to vector<8x128xf32>
    %8 = arith.select %5, %6, %7 : vector<8x128xi1>, vector<8x128xf32>
    %c0 = arith.constant 0 : index
    %c0_1 = arith.constant 0 : index
    %9 = vector.load %arg3[%c0, %c0_1] : memref<1x128xf32, #tpu.memory_space<vmem>>, vector<1x128xf32>
    %10 = vector.shape_cast %9 : vector<1x128xf32> to vector<1x128xf32>
    %11 = vector.broadcast %10 : vector<1x128xf32> to vector<8x128xf32>
    %c0_2 = arith.constant 0 : index
    %c0_3 = arith.constant 0 : index
    %12 = vector.load %arg5[%c0_2, %c0_3] : memref<1x128xf32, #tpu.memory_space<vmem>>, vector<1x128xf32>
    %13 = vector.shape_cast %12 : vector<1x128xf32> to vector<1x128xf32>
    %14 = vector.broadcast %13 : vector<1x128xf32> to vector<8x128xf32>
    %c0_4 = arith.constant 0 : index
    %c0_5 = arith.constant 0 : index
    %15 = vector.load %arg7[%c0_4, %c0_5] : memref<1x128xf32, #tpu.memory_space<vmem>>, vector<1x128xf32>
    %16 = vector.shape_cast %15 : vector<1x128xf32> to vector<1x128xf32>
    %17 = vector.broadcast %16 : vector<1x128xf32> to vector<8x128xf32>
    %cst_6 = arith.constant 0.000000e+00 : f32
    %18 = vector.broadcast %cst_6 : f32 to vector<8x32xf32>
    %cst_7 = arith.constant 0.000000e+00 : f32
    %19 = vector.broadcast %cst_7 : f32 to vector<8x32xf32>
    %cst_8 = arith.constant 0.000000e+00 : f32
    %20 = vector.broadcast %cst_8 : f32 to vector<8x32xf32>
    %cst_9 = arith.constant 0.000000e+00 : f32
    %21 = vector.broadcast %cst_9 : f32 to vector<8x32xf32>
    %c0_10 = arith.constant 0 : index
    %c0_11 = arith.constant 0 : index
    %c0_12 = arith.constant 0 : index
    %22 = vector.load %arg1[%c0_10, %c0_11, %c0_12] : memref<8x8x128xf32, #tpu.memory_space<vmem>>, vector<1x8x128xf32>
    %23 = vector.shape_cast %22 : vector<1x8x128xf32> to vector<8x128xf32>
    %c1 = arith.constant 1 : index
    %c0_13 = arith.constant 0 : index
    %c0_14 = arith.constant 0 : index
    %24 = vector.load %arg1[%c1, %c0_13, %c0_14] : memref<8x8x128xf32, #tpu.memory_space<vmem>>, vector<1x8x128xf32>
    %25 = vector.shape_cast %24 : vector<1x8x128xf32> to vector<8x128xf32>
    %c2 = arith.constant 2 : index
    %c0_15 = arith.constant 0 : index
    %c0_16 = arith.constant 0 : index
    %26 = vector.load %arg1[%c2, %c0_15, %c0_16] : memref<8x8x128xf32, #tpu.memory_space<vmem>>, vector<1x8x128xf32>
    %27 = vector.shape_cast %26 : vector<1x8x128xf32> to vector<8x128xf32>
    %c3 = arith.constant 3 : index
    %c0_17 = arith.constant 0 : index
    %c0_18 = arith.constant 0 : index
    %28 = vector.load %arg1[%c3, %c0_17, %c0_18] : memref<8x8x128xf32, #tpu.memory_space<vmem>>, vector<1x8x128xf32>
    %29 = vector.shape_cast %28 : vector<1x8x128xf32> to vector<8x128xf32>
    %c4 = arith.constant 4 : index
    %c0_19 = arith.constant 0 : index
    %c0_20 = arith.constant 0 : index
    %30 = vector.load %arg1[%c4, %c0_19, %c0_20] : memref<8x8x128xf32, #tpu.memory_space<vmem>>, vector<1x8x128xf32>
    %31 = vector.shape_cast %30 : vector<1x8x128xf32> to vector<8x128xf32>
    %c5 = arith.constant 5 : index
    %c0_21 = arith.constant 0 : index
    %c0_22 = arith.constant 0 : index
    %32 = vector.load %arg1[%c5, %c0_21, %c0_22] : memref<8x8x128xf32, #tpu.memory_space<vmem>>, vector<1x8x128xf32>
    %33 = vector.shape_cast %32 : vector<1x8x128xf32> to vector<8x128xf32>
    %c6 = arith.constant 6 : index
    %c0_23 = arith.constant 0 : index
    %c0_24 = arith.constant 0 : index
    %34 = vector.load %arg1[%c6, %c0_23, %c0_24] : memref<8x8x128xf32, #tpu.memory_space<vmem>>, vector<1x8x128xf32>
    %35 = vector.shape_cast %34 : vector<1x8x128xf32> to vector<8x128xf32>
    %c7 = arith.constant 7 : index
    %c0_25 = arith.constant 0 : index
    %c0_26 = arith.constant 0 : index
    %36 = vector.load %arg1[%c7, %c0_25, %c0_26] : memref<8x8x128xf32, #tpu.memory_space<vmem>>, vector<1x8x128xf32>
    %37 = vector.shape_cast %36 : vector<1x8x128xf32> to vector<8x128xf32>
    %38 = tpu.concatenate %23, %18 in 1 : vector<8x128xf32>, vector<8x32xf32> -> vector<8x160xf32>
    %c0_27 = arith.constant 0 : index
    %c0_28 = arith.constant 0 : index
    %39 = vector.load %arg2[%c0_27, %c0_28] : memref<160x128xf32, #tpu.memory_space<vmem>>, vector<160x128xf32>
    %cst_29 = arith.constant dense<0.000000e+00> : vector<8x128xf32>
    %40 = tpu.matmul %38, %39, %cst_29 {dimension_numbers = #tpu.dot_dimension_numbers<[1], [0], [0], [1], [0, 0, 1, 1], [], []>} : vector<8x160xf32>, vector<160x128xf32>, vector<8x128xf32> -> vector<8x128xf32>
    %41 = arith.addf %40, %11 : vector<8x128xf32>
    %42 = arith.mulf %41, %8 : vector<8x128xf32>
    %43 = math.tanh %42 : vector<8x128xf32>
    %cst_30 = arith.constant 5.000000e-01 : f32
    %44 = vector.broadcast %cst_30 : f32 to vector<8x128xf32>
    %45 = arith.mulf %44, %43 : vector<8x128xf32>
    %cst_31 = arith.constant 5.000000e-01 : f32
    %46 = vector.broadcast %cst_31 : f32 to vector<8x128xf32>
    %47 = arith.addf %45, %46 : vector<8x128xf32>
    %48 = arith.select %5, %43, %47 : vector<8x128xi1>, vector<8x128xf32>
    %49 = vector.extract_strided_slice %48 {offsets = [0, 0], sizes = [8, 32], strides = [1, 1]} : vector<8x128xf32> to vector<8x32xf32>
    %50 = vector.extract_strided_slice %48 {offsets = [0, 32], sizes = [8, 32], strides = [1, 1]} : vector<8x128xf32> to vector<8x32xf32>
    %51 = vector.extract_strided_slice %48 {offsets = [0, 64], sizes = [8, 32], strides = [1, 1]} : vector<8x128xf32> to vector<8x32xf32>
    %52 = vector.extract_strided_slice %48 {offsets = [0, 96], sizes = [8, 32], strides = [1, 1]} : vector<8x128xf32> to vector<8x32xf32>
    %53 = arith.mulf %50, %20 : vector<8x32xf32>
    %54 = arith.mulf %49, %51 : vector<8x32xf32>
    %55 = arith.addf %53, %54 : vector<8x32xf32>
    %56 = math.tanh %55 : vector<8x32xf32>
    %57 = arith.mulf %52, %56 : vector<8x32xf32>
    %58 = tpu.concatenate %25, %57 in 1 : vector<8x128xf32>, vector<8x32xf32> -> vector<8x160xf32>
    %c0_32 = arith.constant 0 : index
    %c0_33 = arith.constant 0 : index
    %59 = vector.load %arg2[%c0_32, %c0_33] : memref<160x128xf32, #tpu.memory_space<vmem>>, vector<160x128xf32>
    %cst_34 = arith.constant dense<0.000000e+00> : vector<8x128xf32>
    %60 = tpu.matmul %58, %59, %cst_34 {dimension_numbers = #tpu.dot_dimension_numbers<[1], [0], [0], [1], [0, 0, 1, 1], [], []>} : vector<8x160xf32>, vector<160x128xf32>, vector<8x128xf32> -> vector<8x128xf32>
    %61 = arith.addf %60, %11 : vector<8x128xf32>
    %62 = arith.mulf %61, %8 : vector<8x128xf32>
    %63 = math.tanh %62 : vector<8x128xf32>
    %cst_35 = arith.constant 5.000000e-01 : f32
    %64 = vector.broadcast %cst_35 : f32 to vector<8x128xf32>
    %65 = arith.mulf %64, %63 : vector<8x128xf32>
    %cst_36 = arith.constant 5.000000e-01 : f32
    %66 = vector.broadcast %cst_36 : f32 to vector<8x128xf32>
    %67 = arith.addf %65, %66 : vector<8x128xf32>
    %68 = arith.select %5, %63, %67 : vector<8x128xi1>, vector<8x128xf32>
    %69 = vector.extract_strided_slice %68 {offsets = [0, 0], sizes = [8, 32], strides = [1, 1]} : vector<8x128xf32> to vector<8x32xf32>
    %70 = vector.extract_strided_slice %68 {offsets = [0, 32], sizes = [8, 32], strides = [1, 1]} : vector<8x128xf32> to vector<8x32xf32>
    %71 = vector.extract_strided_slice %68 {offsets = [0, 64], sizes = [8, 32], strides = [1, 1]} : vector<8x128xf32> to vector<8x32xf32>
    %72 = vector.extract_strided_slice %68 {offsets = [0, 96], sizes = [8, 32], strides = [1, 1]} : vector<8x128xf32> to vector<8x32xf32>
    %73 = arith.mulf %70, %55 : vector<8x32xf32>
    %74 = arith.mulf %69, %71 : vector<8x32xf32>
    %75 = arith.addf %73, %74 : vector<8x32xf32>
    %76 = math.tanh %75 : vector<8x32xf32>
    %77 = arith.mulf %72, %76 : vector<8x32xf32>
    %78 = tpu.concatenate %27, %77 in 1 : vector<8x128xf32>, vector<8x32xf32> -> vector<8x160xf32>
    %c0_37 = arith.constant 0 : index
    %c0_38 = arith.constant 0 : index
    %79 = vector.load %arg2[%c0_37, %c0_38] : memref<160x128xf32, #tpu.memory_space<vmem>>, vector<160x128xf32>
    %cst_39 = arith.constant dense<0.000000e+00> : vector<8x128xf32>
    %80 = tpu.matmul %78, %79, %cst_39 {dimension_numbers = #tpu.dot_dimension_numbers<[1], [0], [0], [1], [0, 0, 1, 1], [], []>} : vector<8x160xf32>, vector<160x128xf32>, vector<8x128xf32> -> vector<8x128xf32>
    %81 = arith.addf %80, %11 : vector<8x128xf32>
    %82 = arith.mulf %81, %8 : vector<8x128xf32>
    %83 = math.tanh %82 : vector<8x128xf32>
    %cst_40 = arith.constant 5.000000e-01 : f32
    %84 = vector.broadcast %cst_40 : f32 to vector<8x128xf32>
    %85 = arith.mulf %84, %83 : vector<8x128xf32>
    %cst_41 = arith.constant 5.000000e-01 : f32
    %86 = vector.broadcast %cst_41 : f32 to vector<8x128xf32>
    %87 = arith.addf %85, %86 : vector<8x128xf32>
    %88 = arith.select %5, %83, %87 : vector<8x128xi1>, vector<8x128xf32>
    %89 = vector.extract_strided_slice %88 {offsets = [0, 0], sizes = [8, 32], strides = [1, 1]} : vector<8x128xf32> to vector<8x32xf32>
    %90 = vector.extract_strided_slice %88 {offsets = [0, 32], sizes = [8, 32], strides = [1, 1]} : vector<8x128xf32> to vector<8x32xf32>
    %91 = vector.extract_strided_slice %88 {offsets = [0, 64], sizes = [8, 32], strides = [1, 1]} : vector<8x128xf32> to vector<8x32xf32>
    %92 = vector.extract_strided_slice %88 {offsets = [0, 96], sizes = [8, 32], strides = [1, 1]} : vector<8x128xf32> to vector<8x32xf32>
    %93 = arith.mulf %90, %75 : vector<8x32xf32>
    %94 = arith.mulf %89, %91 : vector<8x32xf32>
    %95 = arith.addf %93, %94 : vector<8x32xf32>
    %96 = math.tanh %95 : vector<8x32xf32>
    %97 = arith.mulf %92, %96 : vector<8x32xf32>
    %98 = tpu.concatenate %29, %97 in 1 : vector<8x128xf32>, vector<8x32xf32> -> vector<8x160xf32>
    %c0_42 = arith.constant 0 : index
    %c0_43 = arith.constant 0 : index
    %99 = vector.load %arg2[%c0_42, %c0_43] : memref<160x128xf32, #tpu.memory_space<vmem>>, vector<160x128xf32>
    %cst_44 = arith.constant dense<0.000000e+00> : vector<8x128xf32>
    %100 = tpu.matmul %98, %99, %cst_44 {dimension_numbers = #tpu.dot_dimension_numbers<[1], [0], [0], [1], [0, 0, 1, 1], [], []>} : vector<8x160xf32>, vector<160x128xf32>, vector<8x128xf32> -> vector<8x128xf32>
    %101 = arith.addf %100, %11 : vector<8x128xf32>
    %102 = arith.mulf %101, %8 : vector<8x128xf32>
    %103 = math.tanh %102 : vector<8x128xf32>
    %cst_45 = arith.constant 5.000000e-01 : f32
    %104 = vector.broadcast %cst_45 : f32 to vector<8x128xf32>
    %105 = arith.mulf %104, %103 : vector<8x128xf32>
    %cst_46 = arith.constant 5.000000e-01 : f32
    %106 = vector.broadcast %cst_46 : f32 to vector<8x128xf32>
    %107 = arith.addf %105, %106 : vector<8x128xf32>
    %108 = arith.select %5, %103, %107 : vector<8x128xi1>, vector<8x128xf32>
    %109 = vector.extract_strided_slice %108 {offsets = [0, 0], sizes = [8, 32], strides = [1, 1]} : vector<8x128xf32> to vector<8x32xf32>
    %110 = vector.extract_strided_slice %108 {offsets = [0, 32], sizes = [8, 32], strides = [1, 1]} : vector<8x128xf32> to vector<8x32xf32>
    %111 = vector.extract_strided_slice %108 {offsets = [0, 64], sizes = [8, 32], strides = [1, 1]} : vector<8x128xf32> to vector<8x32xf32>
    %112 = vector.extract_strided_slice %108 {offsets = [0, 96], sizes = [8, 32], strides = [1, 1]} : vector<8x128xf32> to vector<8x32xf32>
    %113 = arith.mulf %110, %95 : vector<8x32xf32>
    %114 = arith.mulf %109, %111 : vector<8x32xf32>
    %115 = arith.addf %113, %114 : vector<8x32xf32>
    %116 = math.tanh %115 : vector<8x32xf32>
    %117 = arith.mulf %112, %116 : vector<8x32xf32>
    %118 = tpu.concatenate %31, %117 in 1 : vector<8x128xf32>, vector<8x32xf32> -> vector<8x160xf32>
    %c0_47 = arith.constant 0 : index
    %c0_48 = arith.constant 0 : index
    %119 = vector.load %arg2[%c0_47, %c0_48] : memref<160x128xf32, #tpu.memory_space<vmem>>, vector<160x128xf32>
    %cst_49 = arith.constant dense<0.000000e+00> : vector<8x128xf32>
    %120 = tpu.matmul %118, %119, %cst_49 {dimension_numbers = #tpu.dot_dimension_numbers<[1], [0], [0], [1], [0, 0, 1, 1], [], []>} : vector<8x160xf32>, vector<160x128xf32>, vector<8x128xf32> -> vector<8x128xf32>
    %121 = arith.addf %120, %11 : vector<8x128xf32>
    %122 = arith.mulf %121, %8 : vector<8x128xf32>
    %123 = math.tanh %122 : vector<8x128xf32>
    %cst_50 = arith.constant 5.000000e-01 : f32
    %124 = vector.broadcast %cst_50 : f32 to vector<8x128xf32>
    %125 = arith.mulf %124, %123 : vector<8x128xf32>
    %cst_51 = arith.constant 5.000000e-01 : f32
    %126 = vector.broadcast %cst_51 : f32 to vector<8x128xf32>
    %127 = arith.addf %125, %126 : vector<8x128xf32>
    %128 = arith.select %5, %123, %127 : vector<8x128xi1>, vector<8x128xf32>
    %129 = vector.extract_strided_slice %128 {offsets = [0, 0], sizes = [8, 32], strides = [1, 1]} : vector<8x128xf32> to vector<8x32xf32>
    %130 = vector.extract_strided_slice %128 {offsets = [0, 32], sizes = [8, 32], strides = [1, 1]} : vector<8x128xf32> to vector<8x32xf32>
    %131 = vector.extract_strided_slice %128 {offsets = [0, 64], sizes = [8, 32], strides = [1, 1]} : vector<8x128xf32> to vector<8x32xf32>
    %132 = vector.extract_strided_slice %128 {offsets = [0, 96], sizes = [8, 32], strides = [1, 1]} : vector<8x128xf32> to vector<8x32xf32>
    %133 = arith.mulf %130, %115 : vector<8x32xf32>
    %134 = arith.mulf %129, %131 : vector<8x32xf32>
    %135 = arith.addf %133, %134 : vector<8x32xf32>
    %136 = math.tanh %135 : vector<8x32xf32>
    %137 = arith.mulf %132, %136 : vector<8x32xf32>
    %138 = tpu.concatenate %33, %137 in 1 : vector<8x128xf32>, vector<8x32xf32> -> vector<8x160xf32>
    %c0_52 = arith.constant 0 : index
    %c0_53 = arith.constant 0 : index
    %139 = vector.load %arg2[%c0_52, %c0_53] : memref<160x128xf32, #tpu.memory_space<vmem>>, vector<160x128xf32>
    %cst_54 = arith.constant dense<0.000000e+00> : vector<8x128xf32>
    %140 = tpu.matmul %138, %139, %cst_54 {dimension_numbers = #tpu.dot_dimension_numbers<[1], [0], [0], [1], [0, 0, 1, 1], [], []>} : vector<8x160xf32>, vector<160x128xf32>, vector<8x128xf32> -> vector<8x128xf32>
    %141 = arith.addf %140, %11 : vector<8x128xf32>
    %142 = arith.mulf %141, %8 : vector<8x128xf32>
    %143 = math.tanh %142 : vector<8x128xf32>
    %cst_55 = arith.constant 5.000000e-01 : f32
    %144 = vector.broadcast %cst_55 : f32 to vector<8x128xf32>
    %145 = arith.mulf %144, %143 : vector<8x128xf32>
    %cst_56 = arith.constant 5.000000e-01 : f32
    %146 = vector.broadcast %cst_56 : f32 to vector<8x128xf32>
    %147 = arith.addf %145, %146 : vector<8x128xf32>
    %148 = arith.select %5, %143, %147 : vector<8x128xi1>, vector<8x128xf32>
    %149 = vector.extract_strided_slice %148 {offsets = [0, 0], sizes = [8, 32], strides = [1, 1]} : vector<8x128xf32> to vector<8x32xf32>
    %150 = vector.extract_strided_slice %148 {offsets = [0, 32], sizes = [8, 32], strides = [1, 1]} : vector<8x128xf32> to vector<8x32xf32>
    %151 = vector.extract_strided_slice %148 {offsets = [0, 64], sizes = [8, 32], strides = [1, 1]} : vector<8x128xf32> to vector<8x32xf32>
    %152 = vector.extract_strided_slice %148 {offsets = [0, 96], sizes = [8, 32], strides = [1, 1]} : vector<8x128xf32> to vector<8x32xf32>
    %153 = arith.mulf %150, %135 : vector<8x32xf32>
    %154 = arith.mulf %149, %151 : vector<8x32xf32>
    %155 = arith.addf %153, %154 : vector<8x32xf32>
    %156 = math.tanh %155 : vector<8x32xf32>
    %157 = arith.mulf %152, %156 : vector<8x32xf32>
    %158 = tpu.concatenate %35, %157 in 1 : vector<8x128xf32>, vector<8x32xf32> -> vector<8x160xf32>
    %c0_57 = arith.constant 0 : index
    %c0_58 = arith.constant 0 : index
    %159 = vector.load %arg2[%c0_57, %c0_58] : memref<160x128xf32, #tpu.memory_space<vmem>>, vector<160x128xf32>
    %cst_59 = arith.constant dense<0.000000e+00> : vector<8x128xf32>
    %160 = tpu.matmul %158, %159, %cst_59 {dimension_numbers = #tpu.dot_dimension_numbers<[1], [0], [0], [1], [0, 0, 1, 1], [], []>} : vector<8x160xf32>, vector<160x128xf32>, vector<8x128xf32> -> vector<8x128xf32>
    %161 = arith.addf %160, %11 : vector<8x128xf32>
    %162 = arith.mulf %161, %8 : vector<8x128xf32>
    %163 = math.tanh %162 : vector<8x128xf32>
    %cst_60 = arith.constant 5.000000e-01 : f32
    %164 = vector.broadcast %cst_60 : f32 to vector<8x128xf32>
    %165 = arith.mulf %164, %163 : vector<8x128xf32>
    %cst_61 = arith.constant 5.000000e-01 : f32
    %166 = vector.broadcast %cst_61 : f32 to vector<8x128xf32>
    %167 = arith.addf %165, %166 : vector<8x128xf32>
    %168 = arith.select %5, %163, %167 : vector<8x128xi1>, vector<8x128xf32>
    %169 = vector.extract_strided_slice %168 {offsets = [0, 0], sizes = [8, 32], strides = [1, 1]} : vector<8x128xf32> to vector<8x32xf32>
    %170 = vector.extract_strided_slice %168 {offsets = [0, 32], sizes = [8, 32], strides = [1, 1]} : vector<8x128xf32> to vector<8x32xf32>
    %171 = vector.extract_strided_slice %168 {offsets = [0, 64], sizes = [8, 32], strides = [1, 1]} : vector<8x128xf32> to vector<8x32xf32>
    %172 = vector.extract_strided_slice %168 {offsets = [0, 96], sizes = [8, 32], strides = [1, 1]} : vector<8x128xf32> to vector<8x32xf32>
    %173 = arith.mulf %170, %155 : vector<8x32xf32>
    %174 = arith.mulf %169, %171 : vector<8x32xf32>
    %175 = arith.addf %173, %174 : vector<8x32xf32>
    %176 = math.tanh %175 : vector<8x32xf32>
    %177 = arith.mulf %172, %176 : vector<8x32xf32>
    %178 = tpu.concatenate %37, %177 in 1 : vector<8x128xf32>, vector<8x32xf32> -> vector<8x160xf32>
    %c0_62 = arith.constant 0 : index
    %c0_63 = arith.constant 0 : index
    %179 = vector.load %arg2[%c0_62, %c0_63] : memref<160x128xf32, #tpu.memory_space<vmem>>, vector<160x128xf32>
    %cst_64 = arith.constant dense<0.000000e+00> : vector<8x128xf32>
    %180 = tpu.matmul %178, %179, %cst_64 {dimension_numbers = #tpu.dot_dimension_numbers<[1], [0], [0], [1], [0, 0, 1, 1], [], []>} : vector<8x160xf32>, vector<160x128xf32>, vector<8x128xf32> -> vector<8x128xf32>
    %181 = arith.addf %180, %11 : vector<8x128xf32>
    %182 = arith.mulf %181, %8 : vector<8x128xf32>
    %183 = math.tanh %182 : vector<8x128xf32>
    %cst_65 = arith.constant 5.000000e-01 : f32
    %184 = vector.broadcast %cst_65 : f32 to vector<8x128xf32>
    %185 = arith.mulf %184, %183 : vector<8x128xf32>
    %cst_66 = arith.constant 5.000000e-01 : f32
    %186 = vector.broadcast %cst_66 : f32 to vector<8x128xf32>
    %187 = arith.addf %185, %186 : vector<8x128xf32>
    %188 = arith.select %5, %183, %187 : vector<8x128xi1>, vector<8x128xf32>
    %189 = vector.extract_strided_slice %188 {offsets = [0, 0], sizes = [8, 32], strides = [1, 1]} : vector<8x128xf32> to vector<8x32xf32>
    %190 = vector.extract_strided_slice %188 {offsets = [0, 32], sizes = [8, 32], strides = [1, 1]} : vector<8x128xf32> to vector<8x32xf32>
    %191 = vector.extract_strided_slice %188 {offsets = [0, 64], sizes = [8, 32], strides = [1, 1]} : vector<8x128xf32> to vector<8x32xf32>
    %192 = vector.extract_strided_slice %188 {offsets = [0, 96], sizes = [8, 32], strides = [1, 1]} : vector<8x128xf32> to vector<8x32xf32>
    %193 = arith.mulf %190, %175 : vector<8x32xf32>
    %194 = arith.mulf %189, %191 : vector<8x32xf32>
    %195 = arith.addf %193, %194 : vector<8x32xf32>
    %196 = math.tanh %195 : vector<8x32xf32>
    %197 = arith.mulf %192, %196 : vector<8x32xf32>
    %198 = tpu.concatenate %57, %19 in 1 : vector<8x32xf32>, vector<8x32xf32> -> vector<8x64xf32>
    %c0_67 = arith.constant 0 : index
    %c0_68 = arith.constant 0 : index
    %199 = vector.load %arg4[%c0_67, %c0_68] : memref<64x128xf32, #tpu.memory_space<vmem>>, vector<64x128xf32>
    %cst_69 = arith.constant dense<0.000000e+00> : vector<8x128xf32>
    %200 = tpu.matmul %198, %199, %cst_69 {dimension_numbers = #tpu.dot_dimension_numbers<[1], [0], [0], [1], [0, 0, 1, 1], [], []>} : vector<8x64xf32>, vector<64x128xf32>, vector<8x128xf32> -> vector<8x128xf32>
    %201 = arith.addf %200, %14 : vector<8x128xf32>
    %202 = arith.mulf %201, %8 : vector<8x128xf32>
    %203 = math.tanh %202 : vector<8x128xf32>
    %cst_70 = arith.constant 5.000000e-01 : f32
    %204 = vector.broadcast %cst_70 : f32 to vector<8x128xf32>
    %205 = arith.mulf %204, %203 : vector<8x128xf32>
    %cst_71 = arith.constant 5.000000e-01 : f32
    %206 = vector.broadcast %cst_71 : f32 to vector<8x128xf32>
    %207 = arith.addf %205, %206 : vector<8x128xf32>
    %208 = arith.select %5, %203, %207 : vector<8x128xi1>, vector<8x128xf32>
    %209 = vector.extract_strided_slice %208 {offsets = [0, 0], sizes = [8, 32], strides = [1, 1]} : vector<8x128xf32> to vector<8x32xf32>
    %210 = vector.extract_strided_slice %208 {offsets = [0, 32], sizes = [8, 32], strides = [1, 1]} : vector<8x128xf32> to vector<8x32xf32>
    %211 = vector.extract_strided_slice %208 {offsets = [0, 64], sizes = [8, 32], strides = [1, 1]} : vector<8x128xf32> to vector<8x32xf32>
    %212 = vector.extract_strided_slice %208 {offsets = [0, 96], sizes = [8, 32], strides = [1, 1]} : vector<8x128xf32> to vector<8x32xf32>
    %213 = arith.mulf %210, %21 : vector<8x32xf32>
    %214 = arith.mulf %209, %211 : vector<8x32xf32>
    %215 = arith.addf %213, %214 : vector<8x32xf32>
    %216 = math.tanh %215 : vector<8x32xf32>
    %217 = arith.mulf %212, %216 : vector<8x32xf32>
    %218 = tpu.concatenate %77, %217 in 1 : vector<8x32xf32>, vector<8x32xf32> -> vector<8x64xf32>
    %c0_72 = arith.constant 0 : index
    %c0_73 = arith.constant 0 : index
    %219 = vector.load %arg4[%c0_72, %c0_73] : memref<64x128xf32, #tpu.memory_space<vmem>>, vector<64x128xf32>
    %cst_74 = arith.constant dense<0.000000e+00> : vector<8x128xf32>
    %220 = tpu.matmul %218, %219, %cst_74 {dimension_numbers = #tpu.dot_dimension_numbers<[1], [0], [0], [1], [0, 0, 1, 1], [], []>} : vector<8x64xf32>, vector<64x128xf32>, vector<8x128xf32> -> vector<8x128xf32>
    %221 = arith.addf %220, %14 : vector<8x128xf32>
    %222 = arith.mulf %221, %8 : vector<8x128xf32>
    %223 = math.tanh %222 : vector<8x128xf32>
    %cst_75 = arith.constant 5.000000e-01 : f32
    %224 = vector.broadcast %cst_75 : f32 to vector<8x128xf32>
    %225 = arith.mulf %224, %223 : vector<8x128xf32>
    %cst_76 = arith.constant 5.000000e-01 : f32
    %226 = vector.broadcast %cst_76 : f32 to vector<8x128xf32>
    %227 = arith.addf %225, %226 : vector<8x128xf32>
    %228 = arith.select %5, %223, %227 : vector<8x128xi1>, vector<8x128xf32>
    %229 = vector.extract_strided_slice %228 {offsets = [0, 0], sizes = [8, 32], strides = [1, 1]} : vector<8x128xf32> to vector<8x32xf32>
    %230 = vector.extract_strided_slice %228 {offsets = [0, 32], sizes = [8, 32], strides = [1, 1]} : vector<8x128xf32> to vector<8x32xf32>
    %231 = vector.extract_strided_slice %228 {offsets = [0, 64], sizes = [8, 32], strides = [1, 1]} : vector<8x128xf32> to vector<8x32xf32>
    %232 = vector.extract_strided_slice %228 {offsets = [0, 96], sizes = [8, 32], strides = [1, 1]} : vector<8x128xf32> to vector<8x32xf32>
    %233 = arith.mulf %230, %215 : vector<8x32xf32>
    %234 = arith.mulf %229, %231 : vector<8x32xf32>
    %235 = arith.addf %233, %234 : vector<8x32xf32>
    %236 = math.tanh %235 : vector<8x32xf32>
    %237 = arith.mulf %232, %236 : vector<8x32xf32>
    %238 = tpu.concatenate %97, %237 in 1 : vector<8x32xf32>, vector<8x32xf32> -> vector<8x64xf32>
    %c0_77 = arith.constant 0 : index
    %c0_78 = arith.constant 0 : index
    %239 = vector.load %arg4[%c0_77, %c0_78] : memref<64x128xf32, #tpu.memory_space<vmem>>, vector<64x128xf32>
    %cst_79 = arith.constant dense<0.000000e+00> : vector<8x128xf32>
    %240 = tpu.matmul %238, %239, %cst_79 {dimension_numbers = #tpu.dot_dimension_numbers<[1], [0], [0], [1], [0, 0, 1, 1], [], []>} : vector<8x64xf32>, vector<64x128xf32>, vector<8x128xf32> -> vector<8x128xf32>
    %241 = arith.addf %240, %14 : vector<8x128xf32>
    %242 = arith.mulf %241, %8 : vector<8x128xf32>
    %243 = math.tanh %242 : vector<8x128xf32>
    %cst_80 = arith.constant 5.000000e-01 : f32
    %244 = vector.broadcast %cst_80 : f32 to vector<8x128xf32>
    %245 = arith.mulf %244, %243 : vector<8x128xf32>
    %cst_81 = arith.constant 5.000000e-01 : f32
    %246 = vector.broadcast %cst_81 : f32 to vector<8x128xf32>
    %247 = arith.addf %245, %246 : vector<8x128xf32>
    %248 = arith.select %5, %243, %247 : vector<8x128xi1>, vector<8x128xf32>
    %249 = vector.extract_strided_slice %248 {offsets = [0, 0], sizes = [8, 32], strides = [1, 1]} : vector<8x128xf32> to vector<8x32xf32>
    %250 = vector.extract_strided_slice %248 {offsets = [0, 32], sizes = [8, 32], strides = [1, 1]} : vector<8x128xf32> to vector<8x32xf32>
    %251 = vector.extract_strided_slice %248 {offsets = [0, 64], sizes = [8, 32], strides = [1, 1]} : vector<8x128xf32> to vector<8x32xf32>
    %252 = vector.extract_strided_slice %248 {offsets = [0, 96], sizes = [8, 32], strides = [1, 1]} : vector<8x128xf32> to vector<8x32xf32>
    %253 = arith.mulf %250, %235 : vector<8x32xf32>
    %254 = arith.mulf %249, %251 : vector<8x32xf32>
    %255 = arith.addf %253, %254 : vector<8x32xf32>
    %256 = math.tanh %255 : vector<8x32xf32>
    %257 = arith.mulf %252, %256 : vector<8x32xf32>
    %258 = tpu.concatenate %117, %257 in 1 : vector<8x32xf32>, vector<8x32xf32> -> vector<8x64xf32>
    %c0_82 = arith.constant 0 : index
    %c0_83 = arith.constant 0 : index
    %259 = vector.load %arg4[%c0_82, %c0_83] : memref<64x128xf32, #tpu.memory_space<vmem>>, vector<64x128xf32>
    %cst_84 = arith.constant dense<0.000000e+00> : vector<8x128xf32>
    %260 = tpu.matmul %258, %259, %cst_84 {dimension_numbers = #tpu.dot_dimension_numbers<[1], [0], [0], [1], [0, 0, 1, 1], [], []>} : vector<8x64xf32>, vector<64x128xf32>, vector<8x128xf32> -> vector<8x128xf32>
    %261 = arith.addf %260, %14 : vector<8x128xf32>
    %262 = arith.mulf %261, %8 : vector<8x128xf32>
    %263 = math.tanh %262 : vector<8x128xf32>
    %cst_85 = arith.constant 5.000000e-01 : f32
    %264 = vector.broadcast %cst_85 : f32 to vector<8x128xf32>
    %265 = arith.mulf %264, %263 : vector<8x128xf32>
    %cst_86 = arith.constant 5.000000e-01 : f32
    %266 = vector.broadcast %cst_86 : f32 to vector<8x128xf32>
    %267 = arith.addf %265, %266 : vector<8x128xf32>
    %268 = arith.select %5, %263, %267 : vector<8x128xi1>, vector<8x128xf32>
    %269 = vector.extract_strided_slice %268 {offsets = [0, 0], sizes = [8, 32], strides = [1, 1]} : vector<8x128xf32> to vector<8x32xf32>
    %270 = vector.extract_strided_slice %268 {offsets = [0, 32], sizes = [8, 32], strides = [1, 1]} : vector<8x128xf32> to vector<8x32xf32>
    %271 = vector.extract_strided_slice %268 {offsets = [0, 64], sizes = [8, 32], strides = [1, 1]} : vector<8x128xf32> to vector<8x32xf32>
    %272 = vector.extract_strided_slice %268 {offsets = [0, 96], sizes = [8, 32], strides = [1, 1]} : vector<8x128xf32> to vector<8x32xf32>
    %273 = arith.mulf %270, %255 : vector<8x32xf32>
    %274 = arith.mulf %269, %271 : vector<8x32xf32>
    %275 = arith.addf %273, %274 : vector<8x32xf32>
    %276 = math.tanh %275 : vector<8x32xf32>
    %277 = arith.mulf %272, %276 : vector<8x32xf32>
    %278 = tpu.concatenate %137, %277 in 1 : vector<8x32xf32>, vector<8x32xf32> -> vector<8x64xf32>
    %c0_87 = arith.constant 0 : index
    %c0_88 = arith.constant 0 : index
    %279 = vector.load %arg4[%c0_87, %c0_88] : memref<64x128xf32, #tpu.memory_space<vmem>>, vector<64x128xf32>
    %cst_89 = arith.constant dense<0.000000e+00> : vector<8x128xf32>
    %280 = tpu.matmul %278, %279, %cst_89 {dimension_numbers = #tpu.dot_dimension_numbers<[1], [0], [0], [1], [0, 0, 1, 1], [], []>} : vector<8x64xf32>, vector<64x128xf32>, vector<8x128xf32> -> vector<8x128xf32>
    %281 = arith.addf %280, %14 : vector<8x128xf32>
    %282 = arith.mulf %281, %8 : vector<8x128xf32>
    %283 = math.tanh %282 : vector<8x128xf32>
    %cst_90 = arith.constant 5.000000e-01 : f32
    %284 = vector.broadcast %cst_90 : f32 to vector<8x128xf32>
    %285 = arith.mulf %284, %283 : vector<8x128xf32>
    %cst_91 = arith.constant 5.000000e-01 : f32
    %286 = vector.broadcast %cst_91 : f32 to vector<8x128xf32>
    %287 = arith.addf %285, %286 : vector<8x128xf32>
    %288 = arith.select %5, %283, %287 : vector<8x128xi1>, vector<8x128xf32>
    %289 = vector.extract_strided_slice %288 {offsets = [0, 0], sizes = [8, 32], strides = [1, 1]} : vector<8x128xf32> to vector<8x32xf32>
    %290 = vector.extract_strided_slice %288 {offsets = [0, 32], sizes = [8, 32], strides = [1, 1]} : vector<8x128xf32> to vector<8x32xf32>
    %291 = vector.extract_strided_slice %288 {offsets = [0, 64], sizes = [8, 32], strides = [1, 1]} : vector<8x128xf32> to vector<8x32xf32>
    %292 = vector.extract_strided_slice %288 {offsets = [0, 96], sizes = [8, 32], strides = [1, 1]} : vector<8x128xf32> to vector<8x32xf32>
    %293 = arith.mulf %290, %275 : vector<8x32xf32>
    %294 = arith.mulf %289, %291 : vector<8x32xf32>
    %295 = arith.addf %293, %294 : vector<8x32xf32>
    %296 = math.tanh %295 : vector<8x32xf32>
    %297 = arith.mulf %292, %296 : vector<8x32xf32>
    %298 = tpu.concatenate %157, %297 in 1 : vector<8x32xf32>, vector<8x32xf32> -> vector<8x64xf32>
    %c0_92 = arith.constant 0 : index
    %c0_93 = arith.constant 0 : index
    %299 = vector.load %arg4[%c0_92, %c0_93] : memref<64x128xf32, #tpu.memory_space<vmem>>, vector<64x128xf32>
    %cst_94 = arith.constant dense<0.000000e+00> : vector<8x128xf32>
    %300 = tpu.matmul %298, %299, %cst_94 {dimension_numbers = #tpu.dot_dimension_numbers<[1], [0], [0], [1], [0, 0, 1, 1], [], []>} : vector<8x64xf32>, vector<64x128xf32>, vector<8x128xf32> -> vector<8x128xf32>
    %301 = arith.addf %300, %14 : vector<8x128xf32>
    %302 = arith.mulf %301, %8 : vector<8x128xf32>
    %303 = math.tanh %302 : vector<8x128xf32>
    %cst_95 = arith.constant 5.000000e-01 : f32
    %304 = vector.broadcast %cst_95 : f32 to vector<8x128xf32>
    %305 = arith.mulf %304, %303 : vector<8x128xf32>
    %cst_96 = arith.constant 5.000000e-01 : f32
    %306 = vector.broadcast %cst_96 : f32 to vector<8x128xf32>
    %307 = arith.addf %305, %306 : vector<8x128xf32>
    %308 = arith.select %5, %303, %307 : vector<8x128xi1>, vector<8x128xf32>
    %309 = vector.extract_strided_slice %308 {offsets = [0, 0], sizes = [8, 32], strides = [1, 1]} : vector<8x128xf32> to vector<8x32xf32>
    %310 = vector.extract_strided_slice %308 {offsets = [0, 32], sizes = [8, 32], strides = [1, 1]} : vector<8x128xf32> to vector<8x32xf32>
    %311 = vector.extract_strided_slice %308 {offsets = [0, 64], sizes = [8, 32], strides = [1, 1]} : vector<8x128xf32> to vector<8x32xf32>
    %312 = vector.extract_strided_slice %308 {offsets = [0, 96], sizes = [8, 32], strides = [1, 1]} : vector<8x128xf32> to vector<8x32xf32>
    %313 = arith.mulf %310, %295 : vector<8x32xf32>
    %314 = arith.mulf %309, %311 : vector<8x32xf32>
    %315 = arith.addf %313, %314 : vector<8x32xf32>
    %316 = math.tanh %315 : vector<8x32xf32>
    %317 = arith.mulf %312, %316 : vector<8x32xf32>
    %318 = tpu.concatenate %177, %317 in 1 : vector<8x32xf32>, vector<8x32xf32> -> vector<8x64xf32>
    %c0_97 = arith.constant 0 : index
    %c0_98 = arith.constant 0 : index
    %319 = vector.load %arg4[%c0_97, %c0_98] : memref<64x128xf32, #tpu.memory_space<vmem>>, vector<64x128xf32>
    %cst_99 = arith.constant dense<0.000000e+00> : vector<8x128xf32>
    %320 = tpu.matmul %318, %319, %cst_99 {dimension_numbers = #tpu.dot_dimension_numbers<[1], [0], [0], [1], [0, 0, 1, 1], [], []>} : vector<8x64xf32>, vector<64x128xf32>, vector<8x128xf32> -> vector<8x128xf32>
    %321 = arith.addf %320, %14 : vector<8x128xf32>
    %322 = arith.mulf %321, %8 : vector<8x128xf32>
    %323 = math.tanh %322 : vector<8x128xf32>
    %cst_100 = arith.constant 5.000000e-01 : f32
    %324 = vector.broadcast %cst_100 : f32 to vector<8x128xf32>
    %325 = arith.mulf %324, %323 : vector<8x128xf32>
    %cst_101 = arith.constant 5.000000e-01 : f32
    %326 = vector.broadcast %cst_101 : f32 to vector<8x128xf32>
    %327 = arith.addf %325, %326 : vector<8x128xf32>
    %328 = arith.select %5, %323, %327 : vector<8x128xi1>, vector<8x128xf32>
    %329 = vector.extract_strided_slice %328 {offsets = [0, 0], sizes = [8, 32], strides = [1, 1]} : vector<8x128xf32> to vector<8x32xf32>
    %330 = vector.extract_strided_slice %328 {offsets = [0, 32], sizes = [8, 32], strides = [1, 1]} : vector<8x128xf32> to vector<8x32xf32>
    %331 = vector.extract_strided_slice %328 {offsets = [0, 64], sizes = [8, 32], strides = [1, 1]} : vector<8x128xf32> to vector<8x32xf32>
    %332 = vector.extract_strided_slice %328 {offsets = [0, 96], sizes = [8, 32], strides = [1, 1]} : vector<8x128xf32> to vector<8x32xf32>
    %333 = arith.mulf %330, %315 : vector<8x32xf32>
    %334 = arith.mulf %329, %331 : vector<8x32xf32>
    %335 = arith.addf %333, %334 : vector<8x32xf32>
    %336 = math.tanh %335 : vector<8x32xf32>
    %337 = arith.mulf %332, %336 : vector<8x32xf32>
    %338 = tpu.concatenate %197, %337 in 1 : vector<8x32xf32>, vector<8x32xf32> -> vector<8x64xf32>
    %c0_102 = arith.constant 0 : index
    %c0_103 = arith.constant 0 : index
    %339 = vector.load %arg4[%c0_102, %c0_103] : memref<64x128xf32, #tpu.memory_space<vmem>>, vector<64x128xf32>
    %cst_104 = arith.constant dense<0.000000e+00> : vector<8x128xf32>
    %340 = tpu.matmul %338, %339, %cst_104 {dimension_numbers = #tpu.dot_dimension_numbers<[1], [0], [0], [1], [0, 0, 1, 1], [], []>} : vector<8x64xf32>, vector<64x128xf32>, vector<8x128xf32> -> vector<8x128xf32>
    %341 = arith.addf %340, %14 : vector<8x128xf32>
    %342 = arith.mulf %341, %8 : vector<8x128xf32>
    %343 = math.tanh %342 : vector<8x128xf32>
    %cst_105 = arith.constant 5.000000e-01 : f32
    %344 = vector.broadcast %cst_105 : f32 to vector<8x128xf32>
    %345 = arith.mulf %344, %343 : vector<8x128xf32>
    %cst_106 = arith.constant 5.000000e-01 : f32
    %346 = vector.broadcast %cst_106 : f32 to vector<8x128xf32>
    %347 = arith.addf %345, %346 : vector<8x128xf32>
    %348 = arith.select %5, %343, %347 : vector<8x128xi1>, vector<8x128xf32>
    %349 = vector.extract_strided_slice %348 {offsets = [0, 0], sizes = [8, 32], strides = [1, 1]} : vector<8x128xf32> to vector<8x32xf32>
    %350 = vector.extract_strided_slice %348 {offsets = [0, 32], sizes = [8, 32], strides = [1, 1]} : vector<8x128xf32> to vector<8x32xf32>
    %351 = vector.extract_strided_slice %348 {offsets = [0, 64], sizes = [8, 32], strides = [1, 1]} : vector<8x128xf32> to vector<8x32xf32>
    %352 = vector.extract_strided_slice %348 {offsets = [0, 96], sizes = [8, 32], strides = [1, 1]} : vector<8x128xf32> to vector<8x32xf32>
    %353 = arith.mulf %350, %335 : vector<8x32xf32>
    %354 = arith.mulf %349, %351 : vector<8x32xf32>
    %355 = arith.addf %353, %354 : vector<8x32xf32>
    %356 = math.tanh %355 : vector<8x32xf32>
    %357 = arith.mulf %352, %356 : vector<8x32xf32>
    %c7_107 = arith.constant 7 : index
    %c0_108 = arith.constant 0 : index
    %c0_109 = arith.constant 0 : index
    %358 = vector.load %arg1[%c7_107, %c0_108, %c0_109] : memref<8x8x128xf32, #tpu.memory_space<vmem>>, vector<1x8x128xf32>
    %359 = vector.shape_cast %358 : vector<1x8x128xf32> to vector<8x128xf32>
    %360 = tpu.concatenate %359, %197 in 1 : vector<8x128xf32>, vector<8x32xf32> -> vector<8x160xf32>
    %c0_110 = arith.constant 0 : index
    %c0_111 = arith.constant 0 : index
    %361 = vector.load %arg2[%c0_110, %c0_111] : memref<160x128xf32, #tpu.memory_space<vmem>>, vector<160x128xf32>
    %cst_112 = arith.constant dense<0.000000e+00> : vector<8x128xf32>
    %362 = tpu.matmul %360, %361, %cst_112 {dimension_numbers = #tpu.dot_dimension_numbers<[1], [0], [0], [1], [0, 0, 1, 1], [], []>} : vector<8x160xf32>, vector<160x128xf32>, vector<8x128xf32> -> vector<8x128xf32>
    %363 = arith.addf %362, %11 : vector<8x128xf32>
    %364 = arith.mulf %363, %8 : vector<8x128xf32>
    %365 = math.tanh %364 : vector<8x128xf32>
    %cst_113 = arith.constant 5.000000e-01 : f32
    %366 = vector.broadcast %cst_113 : f32 to vector<8x128xf32>
    %367 = arith.mulf %366, %365 : vector<8x128xf32>
    %cst_114 = arith.constant 5.000000e-01 : f32
    %368 = vector.broadcast %cst_114 : f32 to vector<8x128xf32>
    %369 = arith.addf %367, %368 : vector<8x128xf32>
    %370 = arith.select %5, %365, %369 : vector<8x128xi1>, vector<8x128xf32>
    %371 = vector.extract_strided_slice %370 {offsets = [0, 0], sizes = [8, 32], strides = [1, 1]} : vector<8x128xf32> to vector<8x32xf32>
    %372 = vector.extract_strided_slice %370 {offsets = [0, 32], sizes = [8, 32], strides = [1, 1]} : vector<8x128xf32> to vector<8x32xf32>
    %373 = vector.extract_strided_slice %370 {offsets = [0, 64], sizes = [8, 32], strides = [1, 1]} : vector<8x128xf32> to vector<8x32xf32>
    %374 = vector.extract_strided_slice %370 {offsets = [0, 96], sizes = [8, 32], strides = [1, 1]} : vector<8x128xf32> to vector<8x32xf32>
    %375 = arith.mulf %372, %195 : vector<8x32xf32>
    %376 = arith.mulf %371, %373 : vector<8x32xf32>
    %377 = arith.addf %375, %376 : vector<8x32xf32>
    %378 = math.tanh %377 : vector<8x32xf32>
    %379 = arith.mulf %374, %378 : vector<8x32xf32>
    %380 = tpu.concatenate %379, %357 in 1 : vector<8x32xf32>, vector<8x32xf32> -> vector<8x64xf32>
    %c0_115 = arith.constant 0 : index
    %c0_116 = arith.constant 0 : index
    %381 = vector.load %arg4[%c0_115, %c0_116] : memref<64x128xf32, #tpu.memory_space<vmem>>, vector<64x128xf32>
    %cst_117 = arith.constant dense<0.000000e+00> : vector<8x128xf32>
    %382 = tpu.matmul %380, %381, %cst_117 {dimension_numbers = #tpu.dot_dimension_numbers<[1], [0], [0], [1], [0, 0, 1, 1], [], []>} : vector<8x64xf32>, vector<64x128xf32>, vector<8x128xf32> -> vector<8x128xf32>
    %383 = arith.addf %382, %14 : vector<8x128xf32>
    %384 = arith.mulf %383, %8 : vector<8x128xf32>
    %385 = math.tanh %384 : vector<8x128xf32>
    %cst_118 = arith.constant 5.000000e-01 : f32
    %386 = vector.broadcast %cst_118 : f32 to vector<8x128xf32>
    %387 = arith.mulf %386, %385 : vector<8x128xf32>
    %cst_119 = arith.constant 5.000000e-01 : f32
    %388 = vector.broadcast %cst_119 : f32 to vector<8x128xf32>
    %389 = arith.addf %387, %388 : vector<8x128xf32>
    %390 = arith.select %5, %385, %389 : vector<8x128xi1>, vector<8x128xf32>
    %391 = vector.extract_strided_slice %390 {offsets = [0, 0], sizes = [8, 32], strides = [1, 1]} : vector<8x128xf32> to vector<8x32xf32>
    %392 = vector.extract_strided_slice %390 {offsets = [0, 32], sizes = [8, 32], strides = [1, 1]} : vector<8x128xf32> to vector<8x32xf32>
    %393 = vector.extract_strided_slice %390 {offsets = [0, 64], sizes = [8, 32], strides = [1, 1]} : vector<8x128xf32> to vector<8x32xf32>
    %394 = vector.extract_strided_slice %390 {offsets = [0, 96], sizes = [8, 32], strides = [1, 1]} : vector<8x128xf32> to vector<8x32xf32>
    %395 = arith.mulf %392, %355 : vector<8x32xf32>
    %396 = arith.mulf %391, %393 : vector<8x32xf32>
    %397 = arith.addf %395, %396 : vector<8x32xf32>
    %398 = math.tanh %397 : vector<8x32xf32>
    %399 = arith.mulf %394, %398 : vector<8x32xf32>
    %c0_120 = arith.constant 0 : index
    %c0_121 = arith.constant 0 : index
    %400 = vector.load %arg6[%c0_120, %c0_121] : memref<32x128xf32, #tpu.memory_space<vmem>>, vector<32x128xf32>
    %cst_122 = arith.constant dense<0.000000e+00> : vector<8x128xf32>
    %401 = tpu.matmul %399, %400, %cst_122 {dimension_numbers = #tpu.dot_dimension_numbers<[1], [0], [0], [1], [0, 0, 1, 1], [], []>} : vector<8x32xf32>, vector<32x128xf32>, vector<8x128xf32> -> vector<8x128xf32>
    %402 = arith.addf %401, %17 : vector<8x128xf32>
    %c0_123 = arith.constant 0 : index
    %c0_124 = arith.constant 0 : index
    %c0_125 = arith.constant 0 : index
    %403 = vector.load %arg8[%c0_123, %c0_124, %c0_125] : memref<8x8x128xf32, #tpu.memory_space<vmem>>, vector<1x8x128xf32>
    %404 = vector.shape_cast %403 : vector<1x8x128xf32> to vector<8x128xf32>
    %405 = vector.shape_cast %402 : vector<8x128xf32> to vector<1x8x128xf32>
    tpu.vector_store %arg8[%c0_123, %c0_124, %c0_125], %405 {strides = array<i32>} : memref<8x8x128xf32, #tpu.memory_space<vmem>>, vector<1x8x128xf32>,
    %406 = tpu.concatenate %402, %379 in 1 : vector<8x128xf32>, vector<8x32xf32> -> vector<8x160xf32>
    %c0_126 = arith.constant 0 : index
    %c0_127 = arith.constant 0 : index
    %407 = vector.load %arg2[%c0_126, %c0_127] : memref<160x128xf32, #tpu.memory_space<vmem>>, vector<160x128xf32>
    %cst_128 = arith.constant dense<0.000000e+00> : vector<8x128xf32>
    %408 = tpu.matmul %406, %407, %cst_128 {dimension_numbers = #tpu.dot_dimension_numbers<[1], [0], [0], [1], [0, 0, 1, 1], [], []>} : vector<8x160xf32>, vector<160x128xf32>, vector<8x128xf32> -> vector<8x128xf32>
    %409 = arith.addf %408, %11 : vector<8x128xf32>
    %410 = arith.mulf %409, %8 : vector<8x128xf32>
    %411 = math.tanh %410 : vector<8x128xf32>
    %cst_129 = arith.constant 5.000000e-01 : f32
    %412 = vector.broadcast %cst_129 : f32 to vector<8x128xf32>
    %413 = arith.mulf %412, %411 : vector<8x128xf32>
    %cst_130 = arith.constant 5.000000e-01 : f32
    %414 = vector.broadcast %cst_130 : f32 to vector<8x128xf32>
    %415 = arith.addf %413, %414 : vector<8x128xf32>
    %416 = arith.select %5, %411, %415 : vector<8x128xi1>, vector<8x128xf32>
    %417 = vector.extract_strided_slice %416 {offsets = [0, 0], sizes = [8, 32], strides = [1, 1]} : vector<8x128xf32> to vector<8x32xf32>
    %418 = vector.extract_strided_slice %416 {offsets = [0, 32], sizes = [8, 32], strides = [1, 1]} : vector<8x128xf32> to vector<8x32xf32>
    %419 = vector.extract_strided_slice %416 {offsets = [0, 64], sizes = [8, 32], strides = [1, 1]} : vector<8x128xf32> to vector<8x32xf32>
    %420 = vector.extract_strided_slice %416 {offsets = [0, 96], sizes = [8, 32], strides = [1, 1]} : vector<8x128xf32> to vector<8x32xf32>
    %421 = arith.mulf %418, %377 : vector<8x32xf32>
    %422 = arith.mulf %417, %419 : vector<8x32xf32>
    %423 = arith.addf %421, %422 : vector<8x32xf32>
    %424 = math.tanh %423 : vector<8x32xf32>
    %425 = arith.mulf %420, %424 : vector<8x32xf32>
    %426 = tpu.concatenate %425, %399 in 1 : vector<8x32xf32>, vector<8x32xf32> -> vector<8x64xf32>
    %c0_131 = arith.constant 0 : index
    %c0_132 = arith.constant 0 : index
    %427 = vector.load %arg4[%c0_131, %c0_132] : memref<64x128xf32, #tpu.memory_space<vmem>>, vector<64x128xf32>
    %cst_133 = arith.constant dense<0.000000e+00> : vector<8x128xf32>
    %428 = tpu.matmul %426, %427, %cst_133 {dimension_numbers = #tpu.dot_dimension_numbers<[1], [0], [0], [1], [0, 0, 1, 1], [], []>} : vector<8x64xf32>, vector<64x128xf32>, vector<8x128xf32> -> vector<8x128xf32>
    %429 = arith.addf %428, %14 : vector<8x128xf32>
    %430 = arith.mulf %429, %8 : vector<8x128xf32>
    %431 = math.tanh %430 : vector<8x128xf32>
    %cst_134 = arith.constant 5.000000e-01 : f32
    %432 = vector.broadcast %cst_134 : f32 to vector<8x128xf32>
    %433 = arith.mulf %432, %431 : vector<8x128xf32>
    %cst_135 = arith.constant 5.000000e-01 : f32
    %434 = vector.broadcast %cst_135 : f32 to vector<8x128xf32>
    %435 = arith.addf %433, %434 : vector<8x128xf32>
    %436 = arith.select %5, %431, %435 : vector<8x128xi1>, vector<8x128xf32>
    %437 = vector.extract_strided_slice %436 {offsets = [0, 0], sizes = [8, 32], strides = [1, 1]} : vector<8x128xf32> to vector<8x32xf32>
    %438 = vector.extract_strided_slice %436 {offsets = [0, 32], sizes = [8, 32], strides = [1, 1]} : vector<8x128xf32> to vector<8x32xf32>
    %439 = vector.extract_strided_slice %436 {offsets = [0, 64], sizes = [8, 32], strides = [1, 1]} : vector<8x128xf32> to vector<8x32xf32>
    %440 = vector.extract_strided_slice %436 {offsets = [0, 96], sizes = [8, 32], strides = [1, 1]} : vector<8x128xf32> to vector<8x32xf32>
    %441 = arith.mulf %438, %397 : vector<8x32xf32>
    %442 = arith.mulf %437, %439 : vector<8x32xf32>
    %443 = arith.addf %441, %442 : vector<8x32xf32>
    %444 = math.tanh %443 : vector<8x32xf32>
    %445 = arith.mulf %440, %444 : vector<8x32xf32>
    %c0_136 = arith.constant 0 : index
    %c0_137 = arith.constant 0 : index
    %446 = vector.load %arg6[%c0_136, %c0_137] : memref<32x128xf32, #tpu.memory_space<vmem>>, vector<32x128xf32>
    %cst_138 = arith.constant dense<0.000000e+00> : vector<8x128xf32>
    %447 = tpu.matmul %445, %446, %cst_138 {dimension_numbers = #tpu.dot_dimension_numbers<[1], [0], [0], [1], [0, 0, 1, 1], [], []>} : vector<8x32xf32>, vector<32x128xf32>, vector<8x128xf32> -> vector<8x128xf32>
    %448 = arith.addf %447, %17 : vector<8x128xf32>
    %c1_139 = arith.constant 1 : index
    %c0_140 = arith.constant 0 : index
    %c0_141 = arith.constant 0 : index
    %449 = vector.load %arg8[%c1_139, %c0_140, %c0_141] : memref<8x8x128xf32, #tpu.memory_space<vmem>>, vector<1x8x128xf32>
    %450 = vector.shape_cast %449 : vector<1x8x128xf32> to vector<8x128xf32>
    %451 = vector.shape_cast %448 : vector<8x128xf32> to vector<1x8x128xf32>
    tpu.vector_store %arg8[%c1_139, %c0_140, %c0_141], %451 {strides = array<i32>} : memref<8x8x128xf32, #tpu.memory_space<vmem>>, vector<1x8x128xf32>,
    %452 = tpu.concatenate %448, %425 in 1 : vector<8x128xf32>, vector<8x32xf32> -> vector<8x160xf32>
    %c0_142 = arith.constant 0 : index
    %c0_143 = arith.constant 0 : index
    %453 = vector.load %arg2[%c0_142, %c0_143] : memref<160x128xf32, #tpu.memory_space<vmem>>, vector<160x128xf32>
    %cst_144 = arith.constant dense<0.000000e+00> : vector<8x128xf32>
    %454 = tpu.matmul %452, %453, %cst_144 {dimension_numbers = #tpu.dot_dimension_numbers<[1], [0], [0], [1], [0, 0, 1, 1], [], []>} : vector<8x160xf32>, vector<160x128xf32>, vector<8x128xf32> -> vector<8x128xf32>
    %455 = arith.addf %454, %11 : vector<8x128xf32>
    %456 = arith.mulf %455, %8 : vector<8x128xf32>
    %457 = math.tanh %456 : vector<8x128xf32>
    %cst_145 = arith.constant 5.000000e-01 : f32
    %458 = vector.broadcast %cst_145 : f32 to vector<8x128xf32>
    %459 = arith.mulf %458, %457 : vector<8x128xf32>
    %cst_146 = arith.constant 5.000000e-01 : f32
    %460 = vector.broadcast %cst_146 : f32 to vector<8x128xf32>
    %461 = arith.addf %459, %460 : vector<8x128xf32>
    %462 = arith.select %5, %457, %461 : vector<8x128xi1>, vector<8x128xf32>
    %463 = vector.extract_strided_slice %462 {offsets = [0, 0], sizes = [8, 32], strides = [1, 1]} : vector<8x128xf32> to vector<8x32xf32>
    %464 = vector.extract_strided_slice %462 {offsets = [0, 32], sizes = [8, 32], strides = [1, 1]} : vector<8x128xf32> to vector<8x32xf32>
    %465 = vector.extract_strided_slice %462 {offsets = [0, 64], sizes = [8, 32], strides = [1, 1]} : vector<8x128xf32> to vector<8x32xf32>
    %466 = vector.extract_strided_slice %462 {offsets = [0, 96], sizes = [8, 32], strides = [1, 1]} : vector<8x128xf32> to vector<8x32xf32>
    %467 = arith.mulf %464, %423 : vector<8x32xf32>
    %468 = arith.mulf %463, %465 : vector<8x32xf32>
    %469 = arith.addf %467, %468 : vector<8x32xf32>
    %470 = math.tanh %469 : vector<8x32xf32>
    %471 = arith.mulf %466, %470 : vector<8x32xf32>
    %472 = tpu.concatenate %471, %445 in 1 : vector<8x32xf32>, vector<8x32xf32> -> vector<8x64xf32>
    %c0_147 = arith.constant 0 : index
    %c0_148 = arith.constant 0 : index
    %473 = vector.load %arg4[%c0_147, %c0_148] : memref<64x128xf32, #tpu.memory_space<vmem>>, vector<64x128xf32>
    %cst_149 = arith.constant dense<0.000000e+00> : vector<8x128xf32>
    %474 = tpu.matmul %472, %473, %cst_149 {dimension_numbers = #tpu.dot_dimension_numbers<[1], [0], [0], [1], [0, 0, 1, 1], [], []>} : vector<8x64xf32>, vector<64x128xf32>, vector<8x128xf32> -> vector<8x128xf32>
    %475 = arith.addf %474, %14 : vector<8x128xf32>
    %476 = arith.mulf %475, %8 : vector<8x128xf32>
    %477 = math.tanh %476 : vector<8x128xf32>
    %cst_150 = arith.constant 5.000000e-01 : f32
    %478 = vector.broadcast %cst_150 : f32 to vector<8x128xf32>
    %479 = arith.mulf %478, %477 : vector<8x128xf32>
    %cst_151 = arith.constant 5.000000e-01 : f32
    %480 = vector.broadcast %cst_151 : f32 to vector<8x128xf32>
    %481 = arith.addf %479, %480 : vector<8x128xf32>
    %482 = arith.select %5, %477, %481 : vector<8x128xi1>, vector<8x128xf32>
    %483 = vector.extract_strided_slice %482 {offsets = [0, 0], sizes = [8, 32], strides = [1, 1]} : vector<8x128xf32> to vector<8x32xf32>
    %484 = vector.extract_strided_slice %482 {offsets = [0, 32], sizes = [8, 32], strides = [1, 1]} : vector<8x128xf32> to vector<8x32xf32>
    %485 = vector.extract_strided_slice %482 {offsets = [0, 64], sizes = [8, 32], strides = [1, 1]} : vector<8x128xf32> to vector<8x32xf32>
    %486 = vector.extract_strided_slice %482 {offsets = [0, 96], sizes = [8, 32], strides = [1, 1]} : vector<8x128xf32> to vector<8x32xf32>
    %487 = arith.mulf %484, %443 : vector<8x32xf32>
    %488 = arith.mulf %483, %485 : vector<8x32xf32>
    %489 = arith.addf %487, %488 : vector<8x32xf32>
    %490 = math.tanh %489 : vector<8x32xf32>
    %491 = arith.mulf %486, %490 : vector<8x32xf32>
    %c0_152 = arith.constant 0 : index
    %c0_153 = arith.constant 0 : index
    %492 = vector.load %arg6[%c0_152, %c0_153] : memref<32x128xf32, #tpu.memory_space<vmem>>, vector<32x128xf32>
    %cst_154 = arith.constant dense<0.000000e+00> : vector<8x128xf32>
    %493 = tpu.matmul %491, %492, %cst_154 {dimension_numbers = #tpu.dot_dimension_numbers<[1], [0], [0], [1], [0, 0, 1, 1], [], []>} : vector<8x32xf32>, vector<32x128xf32>, vector<8x128xf32> -> vector<8x128xf32>
    %494 = arith.addf %493, %17 : vector<8x128xf32>
    %c2_155 = arith.constant 2 : index
    %c0_156 = arith.constant 0 : index
    %c0_157 = arith.constant 0 : index
    %495 = vector.load %arg8[%c2_155, %c0_156, %c0_157] : memref<8x8x128xf32, #tpu.memory_space<vmem>>, vector<1x8x128xf32>
    %496 = vector.shape_cast %495 : vector<1x8x128xf32> to vector<8x128xf32>
    %497 = vector.shape_cast %494 : vector<8x128xf32> to vector<1x8x128xf32>
    tpu.vector_store %arg8[%c2_155, %c0_156, %c0_157], %497 {strides = array<i32>} : memref<8x8x128xf32, #tpu.memory_space<vmem>>, vector<1x8x128xf32>,
    %498 = tpu.concatenate %494, %471 in 1 : vector<8x128xf32>, vector<8x32xf32> -> vector<8x160xf32>
    %c0_158 = arith.constant 0 : index
    %c0_159 = arith.constant 0 : index
    %499 = vector.load %arg2[%c0_158, %c0_159] : memref<160x128xf32, #tpu.memory_space<vmem>>, vector<160x128xf32>
    %cst_160 = arith.constant dense<0.000000e+00> : vector<8x128xf32>
    %500 = tpu.matmul %498, %499, %cst_160 {dimension_numbers = #tpu.dot_dimension_numbers<[1], [0], [0], [1], [0, 0, 1, 1], [], []>} : vector<8x160xf32>, vector<160x128xf32>, vector<8x128xf32> -> vector<8x128xf32>
    %501 = arith.addf %500, %11 : vector<8x128xf32>
    %502 = arith.mulf %501, %8 : vector<8x128xf32>
    %503 = math.tanh %502 : vector<8x128xf32>
    %cst_161 = arith.constant 5.000000e-01 : f32
    %504 = vector.broadcast %cst_161 : f32 to vector<8x128xf32>
    %505 = arith.mulf %504, %503 : vector<8x128xf32>
    %cst_162 = arith.constant 5.000000e-01 : f32
    %506 = vector.broadcast %cst_162 : f32 to vector<8x128xf32>
    %507 = arith.addf %505, %506 : vector<8x128xf32>
    %508 = arith.select %5, %503, %507 : vector<8x128xi1>, vector<8x128xf32>
    %509 = vector.extract_strided_slice %508 {offsets = [0, 0], sizes = [8, 32], strides = [1, 1]} : vector<8x128xf32> to vector<8x32xf32>
    %510 = vector.extract_strided_slice %508 {offsets = [0, 32], sizes = [8, 32], strides = [1, 1]} : vector<8x128xf32> to vector<8x32xf32>
    %511 = vector.extract_strided_slice %508 {offsets = [0, 64], sizes = [8, 32], strides = [1, 1]} : vector<8x128xf32> to vector<8x32xf32>
    %512 = vector.extract_strided_slice %508 {offsets = [0, 96], sizes = [8, 32], strides = [1, 1]} : vector<8x128xf32> to vector<8x32xf32>
    %513 = arith.mulf %510, %469 : vector<8x32xf32>
    %514 = arith.mulf %509, %511 : vector<8x32xf32>
    %515 = arith.addf %513, %514 : vector<8x32xf32>
    %516 = math.tanh %515 : vector<8x32xf32>
    %517 = arith.mulf %512, %516 : vector<8x32xf32>
    %518 = tpu.concatenate %517, %491 in 1 : vector<8x32xf32>, vector<8x32xf32> -> vector<8x64xf32>
    %c0_163 = arith.constant 0 : index
    %c0_164 = arith.constant 0 : index
    %519 = vector.load %arg4[%c0_163, %c0_164] : memref<64x128xf32, #tpu.memory_space<vmem>>, vector<64x128xf32>
    %cst_165 = arith.constant dense<0.000000e+00> : vector<8x128xf32>
    %520 = tpu.matmul %518, %519, %cst_165 {dimension_numbers = #tpu.dot_dimension_numbers<[1], [0], [0], [1], [0, 0, 1, 1], [], []>} : vector<8x64xf32>, vector<64x128xf32>, vector<8x128xf32> -> vector<8x128xf32>
    %521 = arith.addf %520, %14 : vector<8x128xf32>
    %522 = arith.mulf %521, %8 : vector<8x128xf32>
    %523 = math.tanh %522 : vector<8x128xf32>
    %cst_166 = arith.constant 5.000000e-01 : f32
    %524 = vector.broadcast %cst_166 : f32 to vector<8x128xf32>
    %525 = arith.mulf %524, %523 : vector<8x128xf32>
    %cst_167 = arith.constant 5.000000e-01 : f32
    %526 = vector.broadcast %cst_167 : f32 to vector<8x128xf32>
    %527 = arith.addf %525, %526 : vector<8x128xf32>
    %528 = arith.select %5, %523, %527 : vector<8x128xi1>, vector<8x128xf32>
    %529 = vector.extract_strided_slice %528 {offsets = [0, 0], sizes = [8, 32], strides = [1, 1]} : vector<8x128xf32> to vector<8x32xf32>
    %530 = vector.extract_strided_slice %528 {offsets = [0, 32], sizes = [8, 32], strides = [1, 1]} : vector<8x128xf32> to vector<8x32xf32>
    %531 = vector.extract_strided_slice %528 {offsets = [0, 64], sizes = [8, 32], strides = [1, 1]} : vector<8x128xf32> to vector<8x32xf32>
    %532 = vector.extract_strided_slice %528 {offsets = [0, 96], sizes = [8, 32], strides = [1, 1]} : vector<8x128xf32> to vector<8x32xf32>
    %533 = arith.mulf %530, %489 : vector<8x32xf32>
    %534 = arith.mulf %529, %531 : vector<8x32xf32>
    %535 = arith.addf %533, %534 : vector<8x32xf32>
    %536 = math.tanh %535 : vector<8x32xf32>
    %537 = arith.mulf %532, %536 : vector<8x32xf32>
    %c0_168 = arith.constant 0 : index
    %c0_169 = arith.constant 0 : index
    %538 = vector.load %arg6[%c0_168, %c0_169] : memref<32x128xf32, #tpu.memory_space<vmem>>, vector<32x128xf32>
    %cst_170 = arith.constant dense<0.000000e+00> : vector<8x128xf32>
    %539 = tpu.matmul %537, %538, %cst_170 {dimension_numbers = #tpu.dot_dimension_numbers<[1], [0], [0], [1], [0, 0, 1, 1], [], []>} : vector<8x32xf32>, vector<32x128xf32>, vector<8x128xf32> -> vector<8x128xf32>
    %540 = arith.addf %539, %17 : vector<8x128xf32>
    %c3_171 = arith.constant 3 : index
    %c0_172 = arith.constant 0 : index
    %c0_173 = arith.constant 0 : index
    %541 = vector.load %arg8[%c3_171, %c0_172, %c0_173] : memref<8x8x128xf32, #tpu.memory_space<vmem>>, vector<1x8x128xf32>
    %542 = vector.shape_cast %541 : vector<1x8x128xf32> to vector<8x128xf32>
    %543 = vector.shape_cast %540 : vector<8x128xf32> to vector<1x8x128xf32>
    tpu.vector_store %arg8[%c3_171, %c0_172, %c0_173], %543 {strides = array<i32>} : memref<8x8x128xf32, #tpu.memory_space<vmem>>, vector<1x8x128xf32>,
    %544 = tpu.concatenate %540, %517 in 1 : vector<8x128xf32>, vector<8x32xf32> -> vector<8x160xf32>
    %c0_174 = arith.constant 0 : index
    %c0_175 = arith.constant 0 : index
    %545 = vector.load %arg2[%c0_174, %c0_175] : memref<160x128xf32, #tpu.memory_space<vmem>>, vector<160x128xf32>
    %cst_176 = arith.constant dense<0.000000e+00> : vector<8x128xf32>
    %546 = tpu.matmul %544, %545, %cst_176 {dimension_numbers = #tpu.dot_dimension_numbers<[1], [0], [0], [1], [0, 0, 1, 1], [], []>} : vector<8x160xf32>, vector<160x128xf32>, vector<8x128xf32> -> vector<8x128xf32>
    %547 = arith.addf %546, %11 : vector<8x128xf32>
    %548 = arith.mulf %547, %8 : vector<8x128xf32>
    %549 = math.tanh %548 : vector<8x128xf32>
    %cst_177 = arith.constant 5.000000e-01 : f32
    %550 = vector.broadcast %cst_177 : f32 to vector<8x128xf32>
    %551 = arith.mulf %550, %549 : vector<8x128xf32>
    %cst_178 = arith.constant 5.000000e-01 : f32
    %552 = vector.broadcast %cst_178 : f32 to vector<8x128xf32>
    %553 = arith.addf %551, %552 : vector<8x128xf32>
    %554 = arith.select %5, %549, %553 : vector<8x128xi1>, vector<8x128xf32>
    %555 = vector.extract_strided_slice %554 {offsets = [0, 0], sizes = [8, 32], strides = [1, 1]} : vector<8x128xf32> to vector<8x32xf32>
    %556 = vector.extract_strided_slice %554 {offsets = [0, 32], sizes = [8, 32], strides = [1, 1]} : vector<8x128xf32> to vector<8x32xf32>
    %557 = vector.extract_strided_slice %554 {offsets = [0, 64], sizes = [8, 32], strides = [1, 1]} : vector<8x128xf32> to vector<8x32xf32>
    %558 = vector.extract_strided_slice %554 {offsets = [0, 96], sizes = [8, 32], strides = [1, 1]} : vector<8x128xf32> to vector<8x32xf32>
    %559 = arith.mulf %556, %515 : vector<8x32xf32>
    %560 = arith.mulf %555, %557 : vector<8x32xf32>
    %561 = arith.addf %559, %560 : vector<8x32xf32>
    %562 = math.tanh %561 : vector<8x32xf32>
    %563 = arith.mulf %558, %562 : vector<8x32xf32>
    %564 = tpu.concatenate %563, %537 in 1 : vector<8x32xf32>, vector<8x32xf32> -> vector<8x64xf32>
    %c0_179 = arith.constant 0 : index
    %c0_180 = arith.constant 0 : index
    %565 = vector.load %arg4[%c0_179, %c0_180] : memref<64x128xf32, #tpu.memory_space<vmem>>, vector<64x128xf32>
    %cst_181 = arith.constant dense<0.000000e+00> : vector<8x128xf32>
    %566 = tpu.matmul %564, %565, %cst_181 {dimension_numbers = #tpu.dot_dimension_numbers<[1], [0], [0], [1], [0, 0, 1, 1], [], []>} : vector<8x64xf32>, vector<64x128xf32>, vector<8x128xf32> -> vector<8x128xf32>
    %567 = arith.addf %566, %14 : vector<8x128xf32>
    %568 = arith.mulf %567, %8 : vector<8x128xf32>
    %569 = math.tanh %568 : vector<8x128xf32>
    %cst_182 = arith.constant 5.000000e-01 : f32
    %570 = vector.broadcast %cst_182 : f32 to vector<8x128xf32>
    %571 = arith.mulf %570, %569 : vector<8x128xf32>
    %cst_183 = arith.constant 5.000000e-01 : f32
    %572 = vector.broadcast %cst_183 : f32 to vector<8x128xf32>
    %573 = arith.addf %571, %572 : vector<8x128xf32>
    %574 = arith.select %5, %569, %573 : vector<8x128xi1>, vector<8x128xf32>
    %575 = vector.extract_strided_slice %574 {offsets = [0, 0], sizes = [8, 32], strides = [1, 1]} : vector<8x128xf32> to vector<8x32xf32>
    %576 = vector.extract_strided_slice %574 {offsets = [0, 32], sizes = [8, 32], strides = [1, 1]} : vector<8x128xf32> to vector<8x32xf32>
    %577 = vector.extract_strided_slice %574 {offsets = [0, 64], sizes = [8, 32], strides = [1, 1]} : vector<8x128xf32> to vector<8x32xf32>
    %578 = vector.extract_strided_slice %574 {offsets = [0, 96], sizes = [8, 32], strides = [1, 1]} : vector<8x128xf32> to vector<8x32xf32>
    %579 = arith.mulf %576, %535 : vector<8x32xf32>
    %580 = arith.mulf %575, %577 : vector<8x32xf32>
    %581 = arith.addf %579, %580 : vector<8x32xf32>
    %582 = math.tanh %581 : vector<8x32xf32>
    %583 = arith.mulf %578, %582 : vector<8x32xf32>
    %c0_184 = arith.constant 0 : index
    %c0_185 = arith.constant 0 : index
    %584 = vector.load %arg6[%c0_184, %c0_185] : memref<32x128xf32, #tpu.memory_space<vmem>>, vector<32x128xf32>
    %cst_186 = arith.constant dense<0.000000e+00> : vector<8x128xf32>
    %585 = tpu.matmul %583, %584, %cst_186 {dimension_numbers = #tpu.dot_dimension_numbers<[1], [0], [0], [1], [0, 0, 1, 1], [], []>} : vector<8x32xf32>, vector<32x128xf32>, vector<8x128xf32> -> vector<8x128xf32>
    %586 = arith.addf %585, %17 : vector<8x128xf32>
    %c4_187 = arith.constant 4 : index
    %c0_188 = arith.constant 0 : index
    %c0_189 = arith.constant 0 : index
    %587 = vector.load %arg8[%c4_187, %c0_188, %c0_189] : memref<8x8x128xf32, #tpu.memory_space<vmem>>, vector<1x8x128xf32>
    %588 = vector.shape_cast %587 : vector<1x8x128xf32> to vector<8x128xf32>
    %589 = vector.shape_cast %586 : vector<8x128xf32> to vector<1x8x128xf32>
    tpu.vector_store %arg8[%c4_187, %c0_188, %c0_189], %589 {strides = array<i32>} : memref<8x8x128xf32, #tpu.memory_space<vmem>>, vector<1x8x128xf32>,
    %590 = tpu.concatenate %586, %563 in 1 : vector<8x128xf32>, vector<8x32xf32> -> vector<8x160xf32>
    %c0_190 = arith.constant 0 : index
    %c0_191 = arith.constant 0 : index
    %591 = vector.load %arg2[%c0_190, %c0_191] : memref<160x128xf32, #tpu.memory_space<vmem>>, vector<160x128xf32>
    %cst_192 = arith.constant dense<0.000000e+00> : vector<8x128xf32>
    %592 = tpu.matmul %590, %591, %cst_192 {dimension_numbers = #tpu.dot_dimension_numbers<[1], [0], [0], [1], [0, 0, 1, 1], [], []>} : vector<8x160xf32>, vector<160x128xf32>, vector<8x128xf32> -> vector<8x128xf32>
    %593 = arith.addf %592, %11 : vector<8x128xf32>
    %594 = arith.mulf %593, %8 : vector<8x128xf32>
    %595 = math.tanh %594 : vector<8x128xf32>
    %cst_193 = arith.constant 5.000000e-01 : f32
    %596 = vector.broadcast %cst_193 : f32 to vector<8x128xf32>
    %597 = arith.mulf %596, %595 : vector<8x128xf32>
    %cst_194 = arith.constant 5.000000e-01 : f32
    %598 = vector.broadcast %cst_194 : f32 to vector<8x128xf32>
    %599 = arith.addf %597, %598 : vector<8x128xf32>
    %600 = arith.select %5, %595, %599 : vector<8x128xi1>, vector<8x128xf32>
    %601 = vector.extract_strided_slice %600 {offsets = [0, 0], sizes = [8, 32], strides = [1, 1]} : vector<8x128xf32> to vector<8x32xf32>
    %602 = vector.extract_strided_slice %600 {offsets = [0, 32], sizes = [8, 32], strides = [1, 1]} : vector<8x128xf32> to vector<8x32xf32>
    %603 = vector.extract_strided_slice %600 {offsets = [0, 64], sizes = [8, 32], strides = [1, 1]} : vector<8x128xf32> to vector<8x32xf32>
    %604 = vector.extract_strided_slice %600 {offsets = [0, 96], sizes = [8, 32], strides = [1, 1]} : vector<8x128xf32> to vector<8x32xf32>
    %605 = arith.mulf %602, %561 : vector<8x32xf32>
    %606 = arith.mulf %601, %603 : vector<8x32xf32>
    %607 = arith.addf %605, %606 : vector<8x32xf32>
    %608 = math.tanh %607 : vector<8x32xf32>
    %609 = arith.mulf %604, %608 : vector<8x32xf32>
    %610 = tpu.concatenate %609, %583 in 1 : vector<8x32xf32>, vector<8x32xf32> -> vector<8x64xf32>
    %c0_195 = arith.constant 0 : index
    %c0_196 = arith.constant 0 : index
    %611 = vector.load %arg4[%c0_195, %c0_196] : memref<64x128xf32, #tpu.memory_space<vmem>>, vector<64x128xf32>
    %cst_197 = arith.constant dense<0.000000e+00> : vector<8x128xf32>
    %612 = tpu.matmul %610, %611, %cst_197 {dimension_numbers = #tpu.dot_dimension_numbers<[1], [0], [0], [1], [0, 0, 1, 1], [], []>} : vector<8x64xf32>, vector<64x128xf32>, vector<8x128xf32> -> vector<8x128xf32>
    %613 = arith.addf %612, %14 : vector<8x128xf32>
    %614 = arith.mulf %613, %8 : vector<8x128xf32>
    %615 = math.tanh %614 : vector<8x128xf32>
    %cst_198 = arith.constant 5.000000e-01 : f32
    %616 = vector.broadcast %cst_198 : f32 to vector<8x128xf32>
    %617 = arith.mulf %616, %615 : vector<8x128xf32>
    %cst_199 = arith.constant 5.000000e-01 : f32
    %618 = vector.broadcast %cst_199 : f32 to vector<8x128xf32>
    %619 = arith.addf %617, %618 : vector<8x128xf32>
    %620 = arith.select %5, %615, %619 : vector<8x128xi1>, vector<8x128xf32>
    %621 = vector.extract_strided_slice %620 {offsets = [0, 0], sizes = [8, 32], strides = [1, 1]} : vector<8x128xf32> to vector<8x32xf32>
    %622 = vector.extract_strided_slice %620 {offsets = [0, 32], sizes = [8, 32], strides = [1, 1]} : vector<8x128xf32> to vector<8x32xf32>
    %623 = vector.extract_strided_slice %620 {offsets = [0, 64], sizes = [8, 32], strides = [1, 1]} : vector<8x128xf32> to vector<8x32xf32>
    %624 = vector.extract_strided_slice %620 {offsets = [0, 96], sizes = [8, 32], strides = [1, 1]} : vector<8x128xf32> to vector<8x32xf32>
    %625 = arith.mulf %622, %581 : vector<8x32xf32>
    %626 = arith.mulf %621, %623 : vector<8x32xf32>
    %627 = arith.addf %625, %626 : vector<8x32xf32>
    %628 = math.tanh %627 : vector<8x32xf32>
    %629 = arith.mulf %624, %628 : vector<8x32xf32>
    %c0_200 = arith.constant 0 : index
    %c0_201 = arith.constant 0 : index
    %630 = vector.load %arg6[%c0_200, %c0_201] : memref<32x128xf32, #tpu.memory_space<vmem>>, vector<32x128xf32>
    %cst_202 = arith.constant dense<0.000000e+00> : vector<8x128xf32>
    %631 = tpu.matmul %629, %630, %cst_202 {dimension_numbers = #tpu.dot_dimension_numbers<[1], [0], [0], [1], [0, 0, 1, 1], [], []>} : vector<8x32xf32>, vector<32x128xf32>, vector<8x128xf32> -> vector<8x128xf32>
    %632 = arith.addf %631, %17 : vector<8x128xf32>
    %c5_203 = arith.constant 5 : index
    %c0_204 = arith.constant 0 : index
    %c0_205 = arith.constant 0 : index
    %633 = vector.load %arg8[%c5_203, %c0_204, %c0_205] : memref<8x8x128xf32, #tpu.memory_space<vmem>>, vector<1x8x128xf32>
    %634 = vector.shape_cast %633 : vector<1x8x128xf32> to vector<8x128xf32>
    %635 = vector.shape_cast %632 : vector<8x128xf32> to vector<1x8x128xf32>
    tpu.vector_store %arg8[%c5_203, %c0_204, %c0_205], %635 {strides = array<i32>} : memref<8x8x128xf32, #tpu.memory_space<vmem>>, vector<1x8x128xf32>,
    %636 = tpu.concatenate %632, %609 in 1 : vector<8x128xf32>, vector<8x32xf32> -> vector<8x160xf32>
    %c0_206 = arith.constant 0 : index
    %c0_207 = arith.constant 0 : index
    %637 = vector.load %arg2[%c0_206, %c0_207] : memref<160x128xf32, #tpu.memory_space<vmem>>, vector<160x128xf32>
    %cst_208 = arith.constant dense<0.000000e+00> : vector<8x128xf32>
    %638 = tpu.matmul %636, %637, %cst_208 {dimension_numbers = #tpu.dot_dimension_numbers<[1], [0], [0], [1], [0, 0, 1, 1], [], []>} : vector<8x160xf32>, vector<160x128xf32>, vector<8x128xf32> -> vector<8x128xf32>
    %639 = arith.addf %638, %11 : vector<8x128xf32>
    %640 = arith.mulf %639, %8 : vector<8x128xf32>
    %641 = math.tanh %640 : vector<8x128xf32>
    %cst_209 = arith.constant 5.000000e-01 : f32
    %642 = vector.broadcast %cst_209 : f32 to vector<8x128xf32>
    %643 = arith.mulf %642, %641 : vector<8x128xf32>
    %cst_210 = arith.constant 5.000000e-01 : f32
    %644 = vector.broadcast %cst_210 : f32 to vector<8x128xf32>
    %645 = arith.addf %643, %644 : vector<8x128xf32>
    %646 = arith.select %5, %641, %645 : vector<8x128xi1>, vector<8x128xf32>
    %647 = vector.extract_strided_slice %646 {offsets = [0, 0], sizes = [8, 32], strides = [1, 1]} : vector<8x128xf32> to vector<8x32xf32>
    %648 = vector.extract_strided_slice %646 {offsets = [0, 32], sizes = [8, 32], strides = [1, 1]} : vector<8x128xf32> to vector<8x32xf32>
    %649 = vector.extract_strided_slice %646 {offsets = [0, 64], sizes = [8, 32], strides = [1, 1]} : vector<8x128xf32> to vector<8x32xf32>
    %650 = vector.extract_strided_slice %646 {offsets = [0, 96], sizes = [8, 32], strides = [1, 1]} : vector<8x128xf32> to vector<8x32xf32>
    %651 = arith.mulf %648, %607 : vector<8x32xf32>
    %652 = arith.mulf %647, %649 : vector<8x32xf32>
    %653 = arith.addf %651, %652 : vector<8x32xf32>
    %654 = math.tanh %653 : vector<8x32xf32>
    %655 = arith.mulf %650, %654 : vector<8x32xf32>
    %656 = tpu.concatenate %655, %629 in 1 : vector<8x32xf32>, vector<8x32xf32> -> vector<8x64xf32>
    %c0_211 = arith.constant 0 : index
    %c0_212 = arith.constant 0 : index
    %657 = vector.load %arg4[%c0_211, %c0_212] : memref<64x128xf32, #tpu.memory_space<vmem>>, vector<64x128xf32>
    %cst_213 = arith.constant dense<0.000000e+00> : vector<8x128xf32>
    %658 = tpu.matmul %656, %657, %cst_213 {dimension_numbers = #tpu.dot_dimension_numbers<[1], [0], [0], [1], [0, 0, 1, 1], [], []>} : vector<8x64xf32>, vector<64x128xf32>, vector<8x128xf32> -> vector<8x128xf32>
    %659 = arith.addf %658, %14 : vector<8x128xf32>
    %660 = arith.mulf %659, %8 : vector<8x128xf32>
    %661 = math.tanh %660 : vector<8x128xf32>
    %cst_214 = arith.constant 5.000000e-01 : f32
    %662 = vector.broadcast %cst_214 : f32 to vector<8x128xf32>
    %663 = arith.mulf %662, %661 : vector<8x128xf32>
    %cst_215 = arith.constant 5.000000e-01 : f32
    %664 = vector.broadcast %cst_215 : f32 to vector<8x128xf32>
    %665 = arith.addf %663, %664 : vector<8x128xf32>
    %666 = arith.select %5, %661, %665 : vector<8x128xi1>, vector<8x128xf32>
    %667 = vector.extract_strided_slice %666 {offsets = [0, 0], sizes = [8, 32], strides = [1, 1]} : vector<8x128xf32> to vector<8x32xf32>
    %668 = vector.extract_strided_slice %666 {offsets = [0, 32], sizes = [8, 32], strides = [1, 1]} : vector<8x128xf32> to vector<8x32xf32>
    %669 = vector.extract_strided_slice %666 {offsets = [0, 64], sizes = [8, 32], strides = [1, 1]} : vector<8x128xf32> to vector<8x32xf32>
    %670 = vector.extract_strided_slice %666 {offsets = [0, 96], sizes = [8, 32], strides = [1, 1]} : vector<8x128xf32> to vector<8x32xf32>
    %671 = arith.mulf %668, %627 : vector<8x32xf32>
    %672 = arith.mulf %667, %669 : vector<8x32xf32>
    %673 = arith.addf %671, %672 : vector<8x32xf32>
    %674 = math.tanh %673 : vector<8x32xf32>
    %675 = arith.mulf %670, %674 : vector<8x32xf32>
    %c0_216 = arith.constant 0 : index
    %c0_217 = arith.constant 0 : index
    %676 = vector.load %arg6[%c0_216, %c0_217] : memref<32x128xf32, #tpu.memory_space<vmem>>, vector<32x128xf32>
    %cst_218 = arith.constant dense<0.000000e+00> : vector<8x128xf32>
    %677 = tpu.matmul %675, %676, %cst_218 {dimension_numbers = #tpu.dot_dimension_numbers<[1], [0], [0], [1], [0, 0, 1, 1], [], []>} : vector<8x32xf32>, vector<32x128xf32>, vector<8x128xf32> -> vector<8x128xf32>
    %678 = arith.addf %677, %17 : vector<8x128xf32>
    %c6_219 = arith.constant 6 : index
    %c0_220 = arith.constant 0 : index
    %c0_221 = arith.constant 0 : index
    %679 = vector.load %arg8[%c6_219, %c0_220, %c0_221] : memref<8x8x128xf32, #tpu.memory_space<vmem>>, vector<1x8x128xf32>
    %680 = vector.shape_cast %679 : vector<1x8x128xf32> to vector<8x128xf32>
    %681 = vector.shape_cast %678 : vector<8x128xf32> to vector<1x8x128xf32>
    tpu.vector_store %arg8[%c6_219, %c0_220, %c0_221], %681 {strides = array<i32>} : memref<8x8x128xf32, #tpu.memory_space<vmem>>, vector<1x8x128xf32>,
    %682 = tpu.concatenate %678, %655 in 1 : vector<8x128xf32>, vector<8x32xf32> -> vector<8x160xf32>
    %c0_222 = arith.constant 0 : index
    %c0_223 = arith.constant 0 : index
    %683 = vector.load %arg2[%c0_222, %c0_223] : memref<160x128xf32, #tpu.memory_space<vmem>>, vector<160x128xf32>
    %cst_224 = arith.constant dense<0.000000e+00> : vector<8x128xf32>
    %684 = tpu.matmul %682, %683, %cst_224 {dimension_numbers = #tpu.dot_dimension_numbers<[1], [0], [0], [1], [0, 0, 1, 1], [], []>} : vector<8x160xf32>, vector<160x128xf32>, vector<8x128xf32> -> vector<8x128xf32>
    %685 = arith.addf %684, %11 : vector<8x128xf32>
    %686 = arith.mulf %685, %8 : vector<8x128xf32>
    %687 = math.tanh %686 : vector<8x128xf32>
    %cst_225 = arith.constant 5.000000e-01 : f32
    %688 = vector.broadcast %cst_225 : f32 to vector<8x128xf32>
    %689 = arith.mulf %688, %687 : vector<8x128xf32>
    %cst_226 = arith.constant 5.000000e-01 : f32
    %690 = vector.broadcast %cst_226 : f32 to vector<8x128xf32>
    %691 = arith.addf %689, %690 : vector<8x128xf32>
    %692 = arith.select %5, %687, %691 : vector<8x128xi1>, vector<8x128xf32>
    %693 = vector.extract_strided_slice %692 {offsets = [0, 0], sizes = [8, 32], strides = [1, 1]} : vector<8x128xf32> to vector<8x32xf32>
    %694 = vector.extract_strided_slice %692 {offsets = [0, 32], sizes = [8, 32], strides = [1, 1]} : vector<8x128xf32> to vector<8x32xf32>
    %695 = vector.extract_strided_slice %692 {offsets = [0, 64], sizes = [8, 32], strides = [1, 1]} : vector<8x128xf32> to vector<8x32xf32>
    %696 = vector.extract_strided_slice %692 {offsets = [0, 96], sizes = [8, 32], strides = [1, 1]} : vector<8x128xf32> to vector<8x32xf32>
    %697 = arith.mulf %694, %653 : vector<8x32xf32>
    %698 = arith.mulf %693, %695 : vector<8x32xf32>
    %699 = arith.addf %697, %698 : vector<8x32xf32>
    %700 = math.tanh %699 : vector<8x32xf32>
    %701 = arith.mulf %696, %700 : vector<8x32xf32>
    %702 = tpu.concatenate %701, %675 in 1 : vector<8x32xf32>, vector<8x32xf32> -> vector<8x64xf32>
    %c0_227 = arith.constant 0 : index
    %c0_228 = arith.constant 0 : index
    %703 = vector.load %arg4[%c0_227, %c0_228] : memref<64x128xf32, #tpu.memory_space<vmem>>, vector<64x128xf32>
    %cst_229 = arith.constant dense<0.000000e+00> : vector<8x128xf32>
    %704 = tpu.matmul %702, %703, %cst_229 {dimension_numbers = #tpu.dot_dimension_numbers<[1], [0], [0], [1], [0, 0, 1, 1], [], []>} : vector<8x64xf32>, vector<64x128xf32>, vector<8x128xf32> -> vector<8x128xf32>
    %705 = arith.addf %704, %14 : vector<8x128xf32>
    %706 = arith.mulf %705, %8 : vector<8x128xf32>
    %707 = math.tanh %706 : vector<8x128xf32>
    %cst_230 = arith.constant 5.000000e-01 : f32
    %708 = vector.broadcast %cst_230 : f32 to vector<8x128xf32>
    %709 = arith.mulf %708, %707 : vector<8x128xf32>
    %cst_231 = arith.constant 5.000000e-01 : f32
    %710 = vector.broadcast %cst_231 : f32 to vector<8x128xf32>
    %711 = arith.addf %709, %710 : vector<8x128xf32>
    %712 = arith.select %5, %707, %711 : vector<8x128xi1>, vector<8x128xf32>
    %713 = vector.extract_strided_slice %712 {offsets = [0, 0], sizes = [8, 32], strides = [1, 1]} : vector<8x128xf32> to vector<8x32xf32>
    %714 = vector.extract_strided_slice %712 {offsets = [0, 32], sizes = [8, 32], strides = [1, 1]} : vector<8x128xf32> to vector<8x32xf32>
    %715 = vector.extract_strided_slice %712 {offsets = [0, 64], sizes = [8, 32], strides = [1, 1]} : vector<8x128xf32> to vector<8x32xf32>
    %716 = vector.extract_strided_slice %712 {offsets = [0, 96], sizes = [8, 32], strides = [1, 1]} : vector<8x128xf32> to vector<8x32xf32>
    %717 = arith.mulf %714, %673 : vector<8x32xf32>
    %718 = arith.mulf %713, %715 : vector<8x32xf32>
    %719 = arith.addf %717, %718 : vector<8x32xf32>
    %720 = math.tanh %719 : vector<8x32xf32>
    %721 = arith.mulf %716, %720 : vector<8x32xf32>
    %c0_232 = arith.constant 0 : index
    %c0_233 = arith.constant 0 : index
    %722 = vector.load %arg6[%c0_232, %c0_233] : memref<32x128xf32, #tpu.memory_space<vmem>>, vector<32x128xf32>
    %cst_234 = arith.constant dense<0.000000e+00> : vector<8x128xf32>
    %723 = tpu.matmul %721, %722, %cst_234 {dimension_numbers = #tpu.dot_dimension_numbers<[1], [0], [0], [1], [0, 0, 1, 1], [], []>} : vector<8x32xf32>, vector<32x128xf32>, vector<8x128xf32> -> vector<8x128xf32>
    %724 = arith.addf %723, %17 : vector<8x128xf32>
    %c7_235 = arith.constant 7 : index
    %c0_236 = arith.constant 0 : index
    %c0_237 = arith.constant 0 : index
    %725 = vector.load %arg8[%c7_235, %c0_236, %c0_237] : memref<8x8x128xf32, #tpu.memory_space<vmem>>, vector<1x8x128xf32>
    %726 = vector.shape_cast %725 : vector<1x8x128xf32> to vector<8x128xf32>
    %727 = vector.shape_cast %724 : vector<8x128xf32> to vector<1x8x128xf32>
    tpu.vector_store %arg8[%c7_235, %c0_236, %c0_237], %727 {strides = array<i32>} : memref<8x8x128xf32, #tpu.memory_space<vmem>>, vector<1x8x128xf32>,
    return
  }
  func.func @transform_0(%arg0: i32) -> (i32, i32, i32) {
    %c0_i32 = arith.constant 0 : i32
    %c0_i32_0 = arith.constant 0 : i32
    %c0_i32_1 = arith.constant 0 : i32
    return %c0_i32, %arg0, %c0_i32_0 : i32, i32, i32
  }
  func.func @transform_1(%arg0: i32) -> (i32, i32) {
    %c0_i32 = arith.constant 0 : i32
    %c0_i32_0 = arith.constant 0 : i32
    %c0_i32_1 = arith.constant 0 : i32
    return %c0_i32, %c0_i32_0 : i32, i32
  }
  func.func @transform_2(%arg0: i32) -> (i32, i32) {
    %c0_i32 = arith.constant 0 : i32
    %c0_i32_0 = arith.constant 0 : i32
    %c0_i32_1 = arith.constant 0 : i32
    return %c0_i32, %c0_i32_0 : i32, i32
  }
  func.func @transform_3(%arg0: i32) -> (i32, i32) {
    %c0_i32 = arith.constant 0 : i32
    %c0_i32_0 = arith.constant 0 : i32
    %c0_i32_1 = arith.constant 0 : i32
    return %c0_i32, %c0_i32_0 : i32, i32
  }
  func.func @transform_4(%arg0: i32) -> (i32, i32) {
    %c0_i32 = arith.constant 0 : i32
    %c0_i32_0 = arith.constant 0 : i32
    %c0_i32_1 = arith.constant 0 : i32
    return %c0_i32, %c0_i32_0 : i32, i32
  }
  func.func @transform_5(%arg0: i32) -> (i32, i32) {
    %c0_i32 = arith.constant 0 : i32
    %c0_i32_0 = arith.constant 0 : i32
    %c0_i32_1 = arith.constant 0 : i32
    return %c0_i32, %c0_i32_0 : i32, i32
  }
  func.func @transform_6(%arg0: i32) -> (i32, i32) {
    %c0_i32 = arith.constant 0 : i32
    %c0_i32_0 = arith.constant 0 : i32
    %c0_i32_1 = arith.constant 0 : i32
    return %c0_i32, %c0_i32_0 : i32, i32
  }
  func.func @transform_7(%arg0: i32) -> (i32, i32, i32) {
    %c0_i32 = arith.constant 0 : i32
    %c0_i32_0 = arith.constant 0 : i32
    %c0_i32_1 = arith.constant 0 : i32
    return %c0_i32, %arg0, %c0_i32_0 : i32, i32, i32
  }
}

</mosaic_0001>

<llo_original>
// kernel: tpu_custom_call.1
$region0: #{tpu_custom_call.1}
  #allocation0 [shape = 'u32[]', space=smem, size = 0x4, offset = 0x4, fixed_abs, tag = 'smem constant byte address 0x4 - core index']
  #allocation1 [shape = 'u32[144,128]{1,0:T(1,128)}', space=vmem, size = 0x12000, scoped, tag = 'internal scratch']
  %s0 = inlined_call_operand.hbm [shape: f32[8,8,128], index: 0, kind: input, shape index: {}]
  %s1 = inlined_call_operand.hbm [shape: f32[160,128], index: 1, kind: input, shape index: {}]
  %s2 = inlined_call_operand.vmem [shape: f32[1,128], index: 2, kind: input, shape index: {}]
  %s3 = inlined_call_operand.hbm [shape: f32[64,128], index: 3, kind: input, shape index: {}]
  %s4 = inlined_call_operand.vmem [shape: f32[1,128], index: 4, kind: input, shape index: {}]
  %s5 = inlined_call_operand.hbm [shape: f32[32,128], index: 5, kind: input, shape index: {}]
  %s6 = inlined_call_operand.vmem [shape: f32[1,128], index: 6, kind: input, shape index: {}]
  %s7 = inlined_call_operand.hbm [shape: f32[8,8,128], index: 7, kind: output, shape index: {}]
  %s8 = sld [smem:[#allocation0]]
  $region54: #{tpu_custom_call.1} parent=0
    _
  %s10 = ssub.s32 1, %s8
  %s11 = scalar_select 0, %s10, %s8
  $region1: #{tpu_custom_call.1} parent=0
    #allocation2 [shape = 'u8[32768]{0}', space=vmem, size = 0x8000, scoped, tag = 'input window, operand 0, single buffered']
    #allocation3 [shape = 's32[1]{0}', space=sflag, size = 0x4, scoped, tag = 'scoped memory for tpu_custom_call.1']
    #allocation4 [shape = 's32[1]{0}', space=sflag, size = 0x4, scoped, tag = 'scoped memory for tpu_custom_call.1']
    #allocation5 [shape = 'u8[81920]{0}', space=vmem, size = 0x14000, scoped, tag = 'input window, operand 1, single buffered']
    #allocation6 [shape = 's32[1]{0}', space=sflag, size = 0x4, scoped, tag = 'scoped memory for tpu_custom_call.1']
    #allocation7 [shape = 'u8[32768]{0}', space=vmem, size = 0x8000, scoped, tag = 'input window, operand 3, single buffered']
    #allocation8 [shape = 'u8[16384]{0}', space=vmem, size = 0x4000, scoped, tag = 'input window, operand 5, single buffered']
    #allocation9 [shape = 's32[1]{0}', space=sflag, size = 0x4, scoped, tag = 'scoped memory for tpu_custom_call.1']
    #allocation10 [shape = 'u8[32768]{0}', space=vmem, size = 0x8000, scoped, tag = 'output window, operand 0, single buffered']
    %12 = vsyncpa [#allocation3], 0
    %13 = vsyncpa [#allocation6], 0
    %14 = vsyncpa [#allocation9], 0
    %15 = vsyncpa [#allocation4], 0
    // Predicated region
    $region2: #{tpu_custom_call.1} parent=1 // pred_check
      _
    $region3: #{tpu_custom_call.1} parent=1 // pred_check_branch
      %17 = sbr.rel (0) target = $region5
    $region4: #{tpu_custom_call.1} parent=1 // pred_region
      %s19 = ssub.s32 1024, 1024
      %20 = vsyncadd [#allocation3], %s19
      %s21 = sshll.u32 [#allocation2], 4
      %s22 = int_to_ptr.vmem [resolvable:$true] %s21
      %27 = dma.hbm_to_vmem [thread:$0]  %s0, 1024, %s22, [#allocation3], 128, 128, 8
    $region5: #{tpu_custom_call.1} parent=1 // pred_fallthru
      _
    // Predicated region
    $region6: #{tpu_custom_call.1} parent=1 // pred_check
      _
    $region7: #{tpu_custom_call.1} parent=1 // pred_check_branch
      %29 = sbr.rel (0) target = $region9
    $region8: #{tpu_custom_call.1} parent=1 // pred_region
      %s31 = ssub.s32 2560, 2560
      %32 = vsyncadd [#allocation6], %s31
      %s33 = sshll.u32 [#allocation5], 4
      %s34 = int_to_ptr.vmem [resolvable:$true] %s33
      %39 = dma.hbm_to_vmem [thread:$0]  %s1, 2560, %s34, [#allocation6], 128, 128, 8
    $region9: #{tpu_custom_call.1} parent=1 // pred_fallthru
      _
    // Predicated region
    $region10: #{tpu_custom_call.1} parent=1 // pred_check
      _
    $region11: #{tpu_custom_call.1} parent=1 // pred_check_branch
      %41 = sbr.rel (0) target = $region13
    $region12: #{tpu_custom_call.1} parent=1 // pred_region
      _
    $region13: #{tpu_custom_call.1} parent=1 // pred_fallthru
      _
    // Predicated region
    $region14: #{tpu_custom_call.1} parent=1 // pred_check
      _
    $region15: #{tpu_custom_call.1} parent=1 // pred_check_branch
      %43 = sbr.rel (0) target = $region17
    $region16: #{tpu_custom_call.1} parent=1 // pred_region
      %s45 = ssub.s32 1024, 1024
      %46 = vsyncadd [#allocation6], %s45
      %s47 = sshll.u32 [#allocation7], 4
      %s48 = int_to_ptr.vmem [resolvable:$true] %s47
      %53 = dma.hbm_to_vmem [thread:$0]  %s3, 1024, %s48, [#allocation6], 128, 128, 8
    $region17: #{tpu_custom_call.1} parent=1 // pred_fallthru
      _
    // Predicated region
    $region18: #{tpu_custom_call.1} parent=1 // pred_check
      _
    $region19: #{tpu_custom_call.1} parent=1 // pred_check_branch
      %55 = sbr.rel (0) target = $region21
    $region20: #{tpu_custom_call.1} parent=1 // pred_region
      _
    $region21: #{tpu_custom_call.1} parent=1 // pred_fallthru
      _
    // Predicated region
    $region22: #{tpu_custom_call.1} parent=1 // pred_check
      _
    $region23: #{tpu_custom_call.1} parent=1 // pred_check_branch
      %57 = sbr.rel (0) target = $region25
    $region24: #{tpu_custom_call.1} parent=1 // pred_region
      %s59 = ssub.s32 512, 512
      %60 = vsyncadd [#allocation9], %s59
      %s61 = sshll.u32 [#allocation8], 4
      %s62 = int_to_ptr.vmem [resolvable:$true] %s61
      %67 = dma.hbm_to_vmem [thread:$0]  %s5, 512, %s62, [#allocation9], 128, 128, 8
    $region25: #{tpu_custom_call.1} parent=1 // pred_fallthru
      _
    // Predicated region
    $region26: #{tpu_custom_call.1} parent=1 // pred_check
      _
    $region27: #{tpu_custom_call.1} parent=1 // pred_check_branch
      %69 = sbr.rel (0) target = $region29
    $region28: #{tpu_custom_call.1} parent=1 // pred_region
      _
    $region29: #{tpu_custom_call.1} parent=1 // pred_fallthru
      _
    // Predicated region
    $region30: #{tpu_custom_call.1} parent=1 // pred_check
      _
    $region31: #{tpu_custom_call.1} parent=1 // pred_check_branch
      %71 = sbr.rel (0) target = $region33
    $region32: #{tpu_custom_call.1} parent=1 // pred_region
      %72 = dma.done [#allocation3], 1024
    $region33: #{tpu_custom_call.1} parent=1 // pred_fallthru
      _
    // Predicated region
    $region34: #{tpu_custom_call.1} parent=1 // pred_check
      _
    $region35: #{tpu_custom_call.1} parent=1 // pred_check_branch
      %74 = sbr.rel (0) target = $region37
    $region36: #{tpu_custom_call.1} parent=1 // pred_region
      %75 = dma.done [#allocation6], 2560
    $region37: #{tpu_custom_call.1} parent=1 // pred_fallthru
      _
    // Predicated region
    $region38: #{tpu_custom_call.1} parent=1 // pred_check
      _
    $region39: #{tpu_custom_call.1} parent=1 // pred_check_branch
      %77 = sbr.rel (0) target = $region41
    $region40: #{tpu_custom_call.1} parent=1 // pred_region
      %78 = dma.done [#allocation6], 1024
    $region41: #{tpu_custom_call.1} parent=1 // pred_fallthru
      _
    // Predicated region
    $region42: #{tpu_custom_call.1} parent=1 // pred_check
      _
    $region43: #{tpu_custom_call.1} parent=1 // pred_check_branch
      %80 = sbr.rel (0) target = $region45
    $region44: #{tpu_custom_call.1} parent=1 // pred_region
      %81 = dma.done [#allocation9], 512
    $region45: #{tpu_custom_call.1} parent=1 // pred_fallthru
      _
    %v82 = vlaneseq
    %v83 = vand.u32 %v82, 127
    %vm84 = vcmp.ge.s32.totalorder %v83, 64
    %vm85 = vcmp.lt.s32.totalorder %v83, 96
    %vm86 = vmand %vm84, %vm85
    %v87 = vsel %vm86, 1.0, 0.5
    %v88 = vld [vmem:[%s2] sm:$0x1]
    %v90 = vlaneseq
    %v91 = vshrl.u32 %v90, 7
    %v92 = vsub.s32 0, %v91
    %v93 = vrot.slane %v88, %v92
    %v95 = vld [vmem:[%s4] sm:$0x1]
    %v97 = vlaneseq
    %v98 = vshrl.u32 %v97, 7
    %v99 = vsub.s32 0, %v98
    %v100 = vrot.slane %v95, %v99
    %v102 = vld [vmem:[%s6] sm:$0x1]
    %v104 = vlaneseq
    %v105 = vshrl.u32 %v104, 7
    %v106 = vsub.s32 0, %v105
    %v107 = vrot.slane %v102, %v106
    %v109 = vld [vmem:[#allocation2] sm:$0xff]
    %s110 = scalar_lea.vmem [#allocation2], 8
    %v111 = vld [vmem:[%s110] sm:$0xff]
    %s112 = scalar_lea.vmem [#allocation2], 16
    %v113 = vld [vmem:[%s112] sm:$0xff]
    %s114 = scalar_lea.vmem [#allocation2], 24
    %v115 = vld [vmem:[%s114] sm:$0xff]
    %s116 = scalar_lea.vmem [#allocation2], 32
    %v117 = vld [vmem:[%s116] sm:$0xff]
    %s118 = scalar_lea.vmem [#allocation2], 40
    %v119 = vld [vmem:[%s118] sm:$0xff]
    %s120 = scalar_lea.vmem [#allocation2], 48
    %v121 = vld [vmem:[%s120] sm:$0xff]
    %s122 = scalar_lea.vmem [#allocation2], 56
    %v123 = vld [vmem:[%s122] sm:$0xff]
    %v124 = vld [vmem:[#allocation5] sm:$0xff]
    %v125 = vld [vmem:[#allocation5 + $0x8] sm:$0xff]
    %v126 = vld [vmem:[#allocation5 + $0x10] sm:$0xff]
    %v127 = vld [vmem:[#allocation5 + $0x18] sm:$0xff]
    %v128 = vld [vmem:[#allocation5 + $0x20] sm:$0xff]
    %v129 = vld [vmem:[#allocation5 + $0x28] sm:$0xff]
    %v130 = vld [vmem:[#allocation5 + $0x30] sm:$0xff]
    %v131 = vld [vmem:[#allocation5 + $0x38] sm:$0xff]
    %v132 = vld [vmem:[#allocation5 + $0x40] sm:$0xff]
    %v133 = vld [vmem:[#allocation5 + $0x48] sm:$0xff]
    %v134 = vld [vmem:[#allocation5 + $0x50] sm:$0xff]
    %v135 = vld [vmem:[#allocation5 + $0x58] sm:$0xff]
    %v136 = vld [vmem:[#allocation5 + $0x60] sm:$0xff]
    %v137 = vld [vmem:[#allocation5 + $0x68] sm:$0xff]
    %v138 = vld [vmem:[#allocation5 + $0x70] sm:$0xff]
    %v139 = vld [vmem:[#allocation5 + $0x78] sm:$0xff]
    %v140 = vld [vmem:[#allocation5 + $0x80] sm:$0xff]
    %v141 = vld [vmem:[#allocation5 + $0x88] sm:$0xff]
    %v142 = vld [vmem:[#allocation5 + $0x90] sm:$0xff]
    %v143 = vld [vmem:[#allocation5 + $0x98] sm:$0xff]
    %vm144 = vcmask 261120
    %v146 = vsel %vm144, 0.0, 0
    %148 = vmatprep.subr.mxu0 0.0
    %149 = vmatpush1.msra.mxu0 %v124
    %150 = vmatprep.subr.mxu0 0.0
    %151 = vmatpush1.msra.mxu0 %v125
    %152 = vmatprep.subr.mxu0 0.0
    %153 = vmatpush1.msra.mxu0 %v126
    %154 = vmatprep.subr.mxu0 0.0
    %155 = vmatpush1.msra.mxu0 %v127
    %156 = vmatprep.subr.mxu0 0.0
    %157 = vmatpush1.msra.mxu0 %v128
    %158 = vmatprep.subr.mxu0 0.0
    %159 = vmatpush1.msra.mxu0 %v129
    %160 = vmatprep.subr.mxu0 0.0
    %161 = vmatpush1.msra.mxu0 %v130
    %162 = vmatprep.subr.mxu0 0.0
    %163 = vmatpush1.msra.mxu0 %v131
    %164 = vmatprep.subr.mxu0 0.0
    %165 = vmatpush1.msra.mxu0 %v132
    %166 = vmatprep.subr.mxu0 0.0
    %167 = vmatpush1.msra.mxu0 %v133
    %168 = vmatprep.subr.mxu0 0.0
    %169 = vmatpush1.msra.mxu0 %v134
    %170 = vmatprep.subr.mxu0 0.0
    %171 = vmatpush1.msra.mxu0 %v135
    %172 = vmatprep.subr.mxu0 0.0
    %173 = vmatpush1.msra.mxu0 %v136
    %174 = vmatprep.subr.mxu0 0.0
    %175 = vmatpush1.msra.mxu0 %v137
    %176 = vmatprep.subr.mxu0 0.0
    %177 = vmatpush1.msra.mxu0 %v138
    %178 = vmatprep.subr.mxu0 0.0
    %179 = vmatpush1.msra.mxu0 %v139
    %180 = vmatprep.subr.mxu0 0.0
    %181 = vmatpush1.msra.mxu0 %v140
    %182 = vmatprep.subr.mxu0 0.0
    %183 = vmatpush1.msra.mxu0 %v141
    %184 = vmatprep.subr.mxu0 0.0
    %185 = vmatpush1.msra.mxu0 %v142
    %186 = vmatprep.subr.mxu0 0.0
    %187 = vmatpush1.msra.mxu0 %v143
    %188 = vmatprep.subr.mxu0 0.0
    %189 = vmatpush1.msra.mxu0 0.0
    %190 = vmatprep.subr.mxu0 0.0
    %191 = vmatpush1.msra.mxu0 0.0
    %192 = vmatprep.subr.mxu0 0.0
    %193 = vmatpush1.msra.mxu0 0.0
    %194 = vmatprep.subr.mxu0 0.0
    %195 = vmatpush1.msra.mxu0 0.0
    %196 = vmatprep.subr.mxu0 0.0
    %197 = vmatpush1.msra.mxu0 0.0
    %198 = vmatprep.subr.mxu0 0.0
    %199 = vmatpush1.msra.mxu0 0.0
    %200 = vmatprep.subr.mxu0 0.0
    %201 = vmatpush1.msra.mxu0 0.0
    %202 = vmatprep.subr.mxu0 0.0
    %203 = vmatpush1.msra.mxu0 0.0
    %204 = vmatprep.subr.mxu0 0.0
    %205 = vmatpush1.msra.mxu0 0.0
    %206 = vmatprep.subr.mxu0 0.0
    %207 = vmatpush1.msra.mxu0 0.0
    %208 = vmatprep.subr.mxu0 0.0
    %209 = vmatpush1.msra.mxu0 0.0
    %210 = vmatprep.subr.mxu0 0.0
    %211 = vmatpush1.msra.mxu0 0.0
    %212 = vmatprep.mubr.f32.mxu0 %v146
    %213 = vmatmul.mubr.f32.gmra.mrb[0].mxu0 %v109
    %v214 = vpop.f32.mrb[0].mxu0
    %v215 = vadd.f32 %v93, %v214
    %v216 = vpop.f32.mrb[0].mxu0
    %217 = vdwg.mxu0
    %v218 = vmul.f32 %v215, %v87
    %v219 = vtanh.pop %v218
    %v220 = vmul.f32 %v219, 0.5
    %v221 = vadd.f32 %v220, 0.5
    %v222 = vsel %vm86, %v219, %v221
    %v223 = vmul.f32 %v222, 0.0
    %225 = vrot.lane.b32.xlu0 %v222, 64
    %v226 = vpop.permute.xlu0 %225
    %v228 = vmul.f32 %v222, %v226
    %230 = vrot.lane.b32.xlu0 %v228, 32
    %v231 = vpop.permute.xlu0 %230
    %v233 = vadd.f32 %v223, %v231
    %v234 = vtanh.pop %v233
    %236 = vrot.lane.b32.xlu0 %v234, 64
    %v237 = vpop.permute.xlu0 %236
    %v239 = vmul.f32 %v222, %v237
    %241 = vrot.lane.b32.xlu0 %v239, 32
    %v242 = vpop.permute.xlu0 %241
    %v243 = vsel %vm144, %v242, 0
    %245 = vmatprep.subr.mxu0 0.0
    %246 = vmatpush1.msra.mxu0 %v124
    %247 = vmatprep.subr.mxu0 0.0
    %248 = vmatpush1.msra.mxu0 %v125
    %249 = vmatprep.subr.mxu0 0.0
    %250 = vmatpush1.msra.mxu0 %v126
    %251 = vmatprep.subr.mxu0 0.0
    %252 = vmatpush1.msra.mxu0 %v127
    %253 = vmatprep.subr.mxu0 0.0
    %254 = vmatpush1.msra.mxu0 %v128
    %255 = vmatprep.subr.mxu0 0.0
    %256 = vmatpush1.msra.mxu0 %v129
    %257 = vmatprep.subr.mxu0 0.0
    %258 = vmatpush1.msra.mxu0 %v130
    %259 = vmatprep.subr.mxu0 0.0
    %260 = vmatpush1.msra.mxu0 %v131
    %261 = vmatprep.subr.mxu0 0.0
    %262 = vmatpush1.msra.mxu0 %v132
    %263 = vmatprep.subr.mxu0 0.0
    %264 = vmatpush1.msra.mxu0 %v133
    %265 = vmatprep.subr.mxu0 0.0
    %266 = vmatpush1.msra.mxu0 %v134
    %267 = vmatprep.subr.mxu0 0.0
    %268 = vmatpush1.msra.mxu0 %v135
    %269 = vmatprep.subr.mxu0 0.0
    %270 = vmatpush1.msra.mxu0 %v136
    %271 = vmatprep.subr.mxu0 0.0
    %272 = vmatpush1.msra.mxu0 %v137
    %273 = vmatprep.subr.mxu0 0.0
    %274 = vmatpush1.msra.mxu0 %v138
    %275 = vmatprep.subr.mxu0 0.0
    %276 = vmatpush1.msra.mxu0 %v139
    %277 = vmatprep.subr.mxu0 0.0
    %278 = vmatpush1.msra.mxu0 %v140
    %279 = vmatprep.subr.mxu0 0.0
    %280 = vmatpush1.msra.mxu0 %v141
    %281 = vmatprep.subr.mxu0 0.0
    %282 = vmatpush1.msra.mxu0 %v142
    %283 = vmatprep.subr.mxu0 0.0
    %284 = vmatpush1.msra.mxu0 %v143
    %285 = vmatprep.subr.mxu0 0.0
    %286 = vmatpush1.msra.mxu0 0.0
    %287 = vmatprep.subr.mxu0 0.0
    %288 = vmatpush1.msra.mxu0 0.0
    %289 = vmatprep.subr.mxu0 0.0
    %290 = vmatpush1.msra.mxu0 0.0
    %291 = vmatprep.subr.mxu0 0.0
    %292 = vmatpush1.msra.mxu0 0.0
    %293 = vmatprep.subr.mxu0 0.0
    %294 = vmatpush1.msra.mxu0 0.0
    %295 = vmatprep.subr.mxu0 0.0
    %296 = vmatpush1.msra.mxu0 0.0
    %297 = vmatprep.subr.mxu0 0.0
    %298 = vmatpush1.msra.mxu0 0.0
    %299 = vmatprep.subr.mxu0 0.0
    %300 = vmatpush1.msra.mxu0 0.0
    %301 = vmatprep.subr.mxu0 0.0
    %302 = vmatpush1.msra.mxu0 0.0
    %303 = vmatprep.subr.mxu0 0.0
    %304 = vmatpush1.msra.mxu0 0.0
    %305 = vmatprep.subr.mxu0 0.0
    %306 = vmatpush1.msra.mxu0 0.0
    %307 = vmatprep.subr.mxu0 0.0
    %308 = vmatpush1.msra.mxu0 0.0
    %309 = vmatprep.mubr.f32.mxu0 %v243
    %310 = vmatmul.mubr.f32.gmra.mrb[0].mxu0 %v111
    %v311 = vpop.f32.mrb[0].mxu0
    %v312 = vadd.f32 %v93, %v311
    %v313 = vpop.f32.mrb[0].mxu0
    %314 = vdwg.mxu0
    %v315 = vmul.f32 %v312, %v87
    %v316 = vtanh.pop %v315
    %v317 = vmul.f32 %v316, 0.5
    %v318 = vadd.f32 %v317, 0.5
    %v319 = vsel %vm86, %v316, %v318
    %v320 = vmul.f32 %v319, %v233
    %322 = vrot.lane.b32.xlu0 %v319, 64
    %v323 = vpop.permute.xlu0 %322
    %v325 = vmul.f32 %v319, %v323
    %327 = vrot.lane.b32.xlu0 %v325, 32
    %v328 = vpop.permute.xlu0 %327
    %v330 = vadd.f32 %v320, %v328
    %v331 = vtanh.pop %v330
    %333 = vrot.lane.b32.xlu0 %v331, 64
    %v334 = vpop.permute.xlu0 %333
    %v336 = vmul.f32 %v319, %v334
    %338 = vrot.lane.b32.xlu0 %v336, 32
    %v339 = vpop.permute.xlu0 %338
    %v340 = vsel %vm144, %v339, 0
    %342 = vmatprep.subr.mxu0 0.0
    %343 = vmatpush1.msra.mxu0 %v124
    %344 = vmatprep.subr.mxu0 0.0
    %345 = vmatpush1.msra.mxu0 %v125
    %346 = vmatprep.subr.mxu0 0.0
    %347 = vmatpush1.msra.mxu0 %v126
    %348 = vmatprep.subr.mxu0 0.0
    %349 = vmatpush1.msra.mxu0 %v127
    %350 = vmatprep.subr.mxu0 0.0
    %351 = vmatpush1.msra.mxu0 %v128
    %352 = vmatprep.subr.mxu0 0.0
    %353 = vmatpush1.msra.mxu0 %v129
    %354 = vmatprep.subr.mxu0 0.0
    %355 = vmatpush1.msra.mxu0 %v130
    %356 = vmatprep.subr.mxu0 0.0
    %357 = vmatpush1.msra.mxu0 %v131
    %358 = vmatprep.subr.mxu0 0.0
    %359 = vmatpush1.msra.mxu0 %v132
    %360 = vmatprep.subr.mxu0 0.0
    %361 = vmatpush1.msra.mxu0 %v133
    %362 = vmatprep.subr.mxu0 0.0
    %363 = vmatpush1.msra.mxu0 %v134
    %364 = vmatprep.subr.mxu0 0.0
    %365 = vmatpush1.msra.mxu0 %v135
    %366 = vmatprep.subr.mxu0 0.0
    %367 = vmatpush1.msra.mxu0 %v136
    %368 = vmatprep.subr.mxu0 0.0
    %369 = vmatpush1.msra.mxu0 %v137
    %370 = vmatprep.subr.mxu0 0.0
    %371 = vmatpush1.msra.mxu0 %v138
    %372 = vmatprep.subr.mxu0 0.0
    %373 = vmatpush1.msra.mxu0 %v139
    %374 = vmatprep.subr.mxu0 0.0
    %375 = vmatpush1.msra.mxu0 %v140
    %376 = vmatprep.subr.mxu0 0.0
    %377 = vmatpush1.msra.mxu0 %v141
    %378 = vmatprep.subr.mxu0 0.0
    %379 = vmatpush1.msra.mxu0 %v142
    %380 = vmatprep.subr.mxu0 0.0
    %381 = vmatpush1.msra.mxu0 %v143
    %382 = vmatprep.subr.mxu0 0.0
    %383 = vmatpush1.msra.mxu0 0.0
    %384 = vmatprep.subr.mxu0 0.0
    %385 = vmatpush1.msra.mxu0 0.0
    %386 = vmatprep.subr.mxu0 0.0
    %387 = vmatpush1.msra.mxu0 0.0
    %388 = vmatprep.subr.mxu0 0.0
    %389 = vmatpush1.msra.mxu0 0.0
    %390 = vmatprep.subr.mxu0 0.0
    %391 = vmatpush1.msra.mxu0 0.0
    %392 = vmatprep.subr.mxu0 0.0
    %393 = vmatpush1.msra.mxu0 0.0
    %394 = vmatprep.subr.mxu0 0.0
    %395 = vmatpush1.msra.mxu0 0.0
    %396 = vmatprep.subr.mxu0 0.0
    %397 = vmatpush1.msra.mxu0 0.0
    %398 = vmatprep.subr.mxu0 0.0
    %399 = vmatpush1.msra.mxu0 0.0
    %400 = vmatprep.subr.mxu0 0.0
    %401 = vmatpush1.msra.mxu0 0.0
    %402 = vmatprep.subr.mxu0 0.0
    %403 = vmatpush1.msra.mxu0 0.0
    %404 = vmatprep.subr.mxu0 0.0
    %405 = vmatpush1.msra.mxu0 0.0
    %406 = vmatprep.mubr.f32.mxu0 %v340
    %407 = vmatmul.mubr.f32.gmra.mrb[0].mxu0 %v113
    %v408 = vpop.f32.mrb[0].mxu0
    %v409 = vadd.f32 %v93, %v408
    %v410 = vpop.f32.mrb[0].mxu0
    %411 = vdwg.mxu0
    %v412 = vmul.f32 %v409, %v87
    %v413 = vtanh.pop %v412
    %v414 = vmul.f32 %v413, 0.5
    %v415 = vadd.f32 %v414, 0.5
    %v416 = vsel %vm86, %v413, %v415
    %v417 = vmul.f32 %v416, %v330
    %419 = vrot.lane.b32.xlu0 %v416, 64
    %v420 = vpop.permute.xlu0 %419
    %v422 = vmul.f32 %v416, %v420
    %424 = vrot.lane.b32.xlu0 %v422, 32
    %v425 = vpop.permute.xlu0 %424
    %v427 = vadd.f32 %v417, %v425
    %v428 = vtanh.pop %v427
    %430 = vrot.lane.b32.xlu0 %v428, 64
    %v431 = vpop.permute.xlu0 %430
    %v433 = vmul.f32 %v416, %v431
    %435 = vrot.lane.b32.xlu0 %v433, 32
    %v436 = vpop.permute.xlu0 %435
    %v437 = vsel %vm144, %v436, 0
    %439 = vmatprep.subr.mxu0 0.0
    %440 = vmatpush1.msra.mxu0 %v124
    %441 = vmatprep.subr.mxu0 0.0
    %442 = vmatpush1.msra.mxu0 %v125
    %443 = vmatprep.subr.mxu0 0.0
    %444 = vmatpush1.msra.mxu0 %v126
    %445 = vmatprep.subr.mxu0 0.0
    %446 = vmatpush1.msra.mxu0 %v127
    %447 = vmatprep.subr.mxu0 0.0
    %448 = vmatpush1.msra.mxu0 %v128
    %449 = vmatprep.subr.mxu0 0.0
    %450 = vmatpush1.msra.mxu0 %v129
    %451 = vmatprep.subr.mxu0 0.0
    %452 = vmatpush1.msra.mxu0 %v130
    %453 = vmatprep.subr.mxu0 0.0
    %454 = vmatpush1.msra.mxu0 %v131
    %455 = vmatprep.subr.mxu0 0.0
    %456 = vmatpush1.msra.mxu0 %v132
    %457 = vmatprep.subr.mxu0 0.0
    %458 = vmatpush1.msra.mxu0 %v133
    %459 = vmatprep.subr.mxu0 0.0
    %460 = vmatpush1.msra.mxu0 %v134
    %461 = vmatprep.subr.mxu0 0.0
    %462 = vmatpush1.msra.mxu0 %v135
    %463 = vmatprep.subr.mxu0 0.0
    %464 = vmatpush1.msra.mxu0 %v136
    %465 = vmatprep.subr.mxu0 0.0
    %466 = vmatpush1.msra.mxu0 %v137
    %467 = vmatprep.subr.mxu0 0.0
    %468 = vmatpush1.msra.mxu0 %v138
    %469 = vmatprep.subr.mxu0 0.0
    %470 = vmatpush1.msra.mxu0 %v139
    %471 = vmatprep.subr.mxu0 0.0
    %472 = vmatpush1.msra.mxu0 %v140
    %473 = vmatprep.subr.mxu0 0.0
    %474 = vmatpush1.msra.mxu0 %v141
    %475 = vmatprep.subr.mxu0 0.0
    %476 = vmatpush1.msra.mxu0 %v142
    %477 = vmatprep.subr.mxu0 0.0
    %478 = vmatpush1.msra.mxu0 %v143
    %479 = vmatprep.subr.mxu0 0.0
    %480 = vmatpush1.msra.mxu0 0.0
    %481 = vmatprep.subr.mxu0 0.0
    %482 = vmatpush1.msra.mxu0 0.0
    %483 = vmatprep.subr.mxu0 0.0
    %484 = vmatpush1.msra.mxu0 0.0
    %485 = vmatprep.subr.mxu0 0.0
    %486 = vmatpush1.msra.mxu0 0.0
    %487 = vmatprep.subr.mxu0 0.0
    %488 = vmatpush1.msra.mxu0 0.0
    %489 = vmatprep.subr.mxu0 0.0
    %490 = vmatpush1.msra.mxu0 0.0
    %491 = vmatprep.subr.mxu0 0.0
    %492 = vmatpush1.msra.mxu0 0.0
    %493 = vmatprep.subr.mxu0 0.0
    %494 = vmatpush1.msra.mxu0 0.0
    %495 = vmatprep.subr.mxu0 0.0
    %496 = vmatpush1.msra.mxu0 0.0
    %497 = vmatprep.subr.mxu0 0.0
    %498 = vmatpush1.msra.mxu0 0.0
    %499 = vmatprep.subr.mxu0 0.0
    %500 = vmatpush1.msra.mxu0 0.0
    %501 = vmatprep.subr.mxu0 0.0
    %502 = vmatpush1.msra.mxu0 0.0
    %503 = vmatprep.mubr.f32.mxu0 %v437
    %504 = vmatmul.mubr.f32.gmra.mrb[0].mxu0 %v115
    %v505 = vpop.f32.mrb[0].mxu0
    %v506 = vadd.f32 %v93, %v505
    %v507 = vpop.f32.mrb[0].mxu0
    %508 = vdwg.mxu0
    %v509 = vmul.f32 %v506, %v87
    %v510 = vtanh.pop %v509
    %v511 = vmul.f32 %v510, 0.5
    %v512 = vadd.f32 %v511, 0.5
    %v513 = vsel %vm86, %v510, %v512
    %v514 = vmul.f32 %v513, %v427
    %516 = vrot.lane.b32.xlu0 %v513, 64
    %v517 = vpop.permute.xlu0 %516
    %v519 = vmul.f32 %v513, %v517
    %521 = vrot.lane.b32.xlu0 %v519, 32
    %v522 = vpop.permute.xlu0 %521
    %v524 = vadd.f32 %v514, %v522
    %v525 = vtanh.pop %v524
    %527 = vrot.lane.b32.xlu0 %v525, 64
    %v528 = vpop.permute.xlu0 %527
    %v530 = vmul.f32 %v513, %v528
    %532 = vrot.lane.b32.xlu0 %v530, 32
    %v533 = vpop.permute.xlu0 %532
    %v534 = vsel %vm144, %v533, 0
    %536 = vmatprep.subr.mxu0 0.0
    %537 = vmatpush1.msra.mxu0 %v124
    %538 = vmatprep.subr.mxu0 0.0
    %539 = vmatpush1.msra.mxu0 %v125
    %540 = vmatprep.subr.mxu0 0.0
    %541 = vmatpush1.msra.mxu0 %v126
    %542 = vmatprep.subr.mxu0 0.0
    %543 = vmatpush1.msra.mxu0 %v127
    %544 = vmatprep.subr.mxu0 0.0
    %545 = vmatpush1.msra.mxu0 %v128
    %546 = vmatprep.subr.mxu0 0.0
    %547 = vmatpush1.msra.mxu0 %v129
    %548 = vmatprep.subr.mxu0 0.0
    %549 = vmatpush1.msra.mxu0 %v130
    %550 = vmatprep.subr.mxu0 0.0
    %551 = vmatpush1.msra.mxu0 %v131
    %552 = vmatprep.subr.mxu0 0.0
    %553 = vmatpush1.msra.mxu0 %v132
    %554 = vmatprep.subr.mxu0 0.0
    %555 = vmatpush1.msra.mxu0 %v133
    %556 = vmatprep.subr.mxu0 0.0
    %557 = vmatpush1.msra.mxu0 %v134
    %558 = vmatprep.subr.mxu0 0.0
    %559 = vmatpush1.msra.mxu0 %v135
    %560 = vmatprep.subr.mxu0 0.0
    %561 = vmatpush1.msra.mxu0 %v136
    %562 = vmatprep.subr.mxu0 0.0
    %563 = vmatpush1.msra.mxu0 %v137
    %564 = vmatprep.subr.mxu0 0.0
    %565 = vmatpush1.msra.mxu0 %v138
    %566 = vmatprep.subr.mxu0 0.0
    %567 = vmatpush1.msra.mxu0 %v139
    %568 = vmatprep.subr.mxu0 0.0
    %569 = vmatpush1.msra.mxu0 %v140
    %570 = vmatprep.subr.mxu0 0.0
    %571 = vmatpush1.msra.mxu0 %v141
    %572 = vmatprep.subr.mxu0 0.0
    %573 = vmatpush1.msra.mxu0 %v142
    %574 = vmatprep.subr.mxu0 0.0
    %575 = vmatpush1.msra.mxu0 %v143
    %576 = vmatprep.subr.mxu0 0.0
    %577 = vmatpush1.msra.mxu0 0.0
    %578 = vmatprep.subr.mxu0 0.0
    %579 = vmatpush1.msra.mxu0 0.0
    %580 = vmatprep.subr.mxu0 0.0
    %581 = vmatpush1.msra.mxu0 0.0
    %582 = vmatprep.subr.mxu0 0.0
    %583 = vmatpush1.msra.mxu0 0.0
    %584 = vmatprep.subr.mxu0 0.0
    %585 = vmatpush1.msra.mxu0 0.0
    %586 = vmatprep.subr.mxu0 0.0
    %587 = vmatpush1.msra.mxu0 0.0
    %588 = vmatprep.subr.mxu0 0.0
    %589 = vmatpush1.msra.mxu0 0.0
    %590 = vmatprep.subr.mxu0 0.0
    %591 = vmatpush1.msra.mxu0 0.0
    %592 = vmatprep.subr.mxu0 0.0
    %593 = vmatpush1.msra.mxu0 0.0
    %594 = vmatprep.subr.mxu0 0.0
    %595 = vmatpush1.msra.mxu0 0.0
    %596 = vmatprep.subr.mxu0 0.0
    %597 = vmatpush1.msra.mxu0 0.0
    %598 = vmatprep.subr.mxu0 0.0
    %599 = vmatpush1.msra.mxu0 0.0
    %600 = vmatprep.mubr.f32.mxu0 %v534
    %601 = vmatmul.mubr.f32.gmra.mrb[0].mxu0 %v117
    %v602 = vpop.f32.mrb[0].mxu0
    %v603 = vadd.f32 %v93, %v602
    %v604 = vpop.f32.mrb[0].mxu0
    %605 = vdwg.mxu0
    %v606 = vmul.f32 %v603, %v87
    %v607 = vtanh.pop %v606
    %v608 = vmul.f32 %v607, 0.5
    %v609 = vadd.f32 %v608, 0.5
    %v610 = vsel %vm86, %v607, %v609
    %v611 = vmul.f32 %v610, %v524
    %613 = vrot.lane.b32.xlu0 %v610, 64
    %v614 = vpop.permute.xlu0 %613
    %v616 = vmul.f32 %v610, %v614
    %618 = vrot.lane.b32.xlu0 %v616, 32
    %v619 = vpop.permute.xlu0 %618
    %v621 = vadd.f32 %v611, %v619
    %v622 = vtanh.pop %v621
    %624 = vrot.lane.b32.xlu0 %v622, 64
    %v625 = vpop.permute.xlu0 %624
    %v627 = vmul.f32 %v610, %v625
    %629 = vrot.lane.b32.xlu0 %v627, 32
    %v630 = vpop.permute.xlu0 %629
    %v631 = vsel %vm144, %v630, 0
    %633 = vmatprep.subr.mxu0 0.0
    %634 = vmatpush1.msra.mxu0 %v124
    %635 = vmatprep.subr.mxu0 0.0
    %636 = vmatpush1.msra.mxu0 %v125
    %637 = vmatprep.subr.mxu0 0.0
    %638 = vmatpush1.msra.mxu0 %v126
    %639 = vmatprep.subr.mxu0 0.0
    %640 = vmatpush1.msra.mxu0 %v127
    %641 = vmatprep.subr.mxu0 0.0
    %642 = vmatpush1.msra.mxu0 %v128
    %643 = vmatprep.subr.mxu0 0.0
    %644 = vmatpush1.msra.mxu0 %v129
    %645 = vmatprep.subr.mxu0 0.0
    %646 = vmatpush1.msra.mxu0 %v130
    %647 = vmatprep.subr.mxu0 0.0
    %648 = vmatpush1.msra.mxu0 %v131
    %649 = vmatprep.subr.mxu0 0.0
    %650 = vmatpush1.msra.mxu0 %v132
    %651 = vmatprep.subr.mxu0 0.0
    %652 = vmatpush1.msra.mxu0 %v133
    %653 = vmatprep.subr.mxu0 0.0
    %654 = vmatpush1.msra.mxu0 %v134
    %655 = vmatprep.subr.mxu0 0.0
    %656 = vmatpush1.msra.mxu0 %v135
    %657 = vmatprep.subr.mxu0 0.0
    %658 = vmatpush1.msra.mxu0 %v136
    %659 = vmatprep.subr.mxu0 0.0
    %660 = vmatpush1.msra.mxu0 %v137
    %661 = vmatprep.subr.mxu0 0.0
    %662 = vmatpush1.msra.mxu0 %v138
    %663 = vmatprep.subr.mxu0 0.0
    %664 = vmatpush1.msra.mxu0 %v139
    %665 = vmatprep.subr.mxu0 0.0
    %666 = vmatpush1.msra.mxu0 %v140
    %667 = vmatprep.subr.mxu0 0.0
    %668 = vmatpush1.msra.mxu0 %v141
    %669 = vmatprep.subr.mxu0 0.0
    %670 = vmatpush1.msra.mxu0 %v142
    %671 = vmatprep.subr.mxu0 0.0
    %672 = vmatpush1.msra.mxu0 %v143
    %673 = vmatprep.subr.mxu0 0.0
    %674 = vmatpush1.msra.mxu0 0.0
    %675 = vmatprep.subr.mxu0 0.0
    %676 = vmatpush1.msra.mxu0 0.0
    %677 = vmatprep.subr.mxu0 0.0
    %678 = vmatpush1.msra.mxu0 0.0
    %679 = vmatprep.subr.mxu0 0.0
    %680 = vmatpush1.msra.mxu0 0.0
    %681 = vmatprep.subr.mxu0 0.0
    %682 = vmatpush1.msra.mxu0 0.0
    %683 = vmatprep.subr.mxu0 0.0
    %684 = vmatpush1.msra.mxu0 0.0
    %685 = vmatprep.subr.mxu0 0.0
    %686 = vmatpush1.msra.mxu0 0.0
    %687 = vmatprep.subr.mxu0 0.0
    %688 = vmatpush1.msra.mxu0 0.0
    %689 = vmatprep.subr.mxu0 0.0
    %690 = vmatpush1.msra.mxu0 0.0
    %691 = vmatprep.subr.mxu0 0.0
    %692 = vmatpush1.msra.mxu0 0.0
    %693 = vmatprep.subr.mxu0 0.0
    %694 = vmatpush1.msra.mxu0 0.0
    %695 = vmatprep.subr.mxu0 0.0
    %696 = vmatpush1.msra.mxu0 0.0
    %697 = vmatprep.mubr.f32.mxu0 %v631
    %698 = vmatmul.mubr.f32.gmra.mrb[0].mxu0 %v119
    %v699 = vpop.f32.mrb[0].mxu0
    %v700 = vadd.f32 %v93, %v699
    %v701 = vpop.f32.mrb[0].mxu0
    %702 = vdwg.mxu0
    %v703 = vmul.f32 %v700, %v87
    %v704 = vtanh.pop %v703
    %v705 = vmul.f32 %v704, 0.5
    %v706 = vadd.f32 %v705, 0.5
    %v707 = vsel %vm86, %v704, %v706
    %v708 = vmul.f32 %v707, %v621
    %710 = vrot.lane.b32.xlu0 %v707, 64
    %v711 = vpop.permute.xlu0 %710
    %v713 = vmul.f32 %v707, %v711
    %715 = vrot.lane.b32.xlu0 %v713, 32
    %v716 = vpop.permute.xlu0 %715
    %v718 = vadd.f32 %v708, %v716
    %v719 = vtanh.pop %v718
    %721 = vrot.lane.b32.xlu0 %v719, 64
    %v722 = vpop.permute.xlu0 %721
    %v724 = vmul.f32 %v707, %v722
    %726 = vrot.lane.b32.xlu0 %v724, 32
    %v727 = vpop.permute.xlu0 %726
    %v728 = vsel %vm144, %v727, 0
    %730 = vmatprep.subr.mxu0 0.0
    %731 = vmatpush1.msra.mxu0 %v124
    %732 = vmatprep.subr.mxu0 0.0
    %733 = vmatpush1.msra.mxu0 %v125
    %734 = vmatprep.subr.mxu0 0.0
    %735 = vmatpush1.msra.mxu0 %v126
    %736 = vmatprep.subr.mxu0 0.0
    %737 = vmatpush1.msra.mxu0 %v127
    %738 = vmatprep.subr.mxu0 0.0
    %739 = vmatpush1.msra.mxu0 %v128
    %740 = vmatprep.subr.mxu0 0.0
    %741 = vmatpush1.msra.mxu0 %v129
    %742 = vmatprep.subr.mxu0 0.0
    %743 = vmatpush1.msra.mxu0 %v130
    %744 = vmatprep.subr.mxu0 0.0
    %745 = vmatpush1.msra.mxu0 %v131
    %746 = vmatprep.subr.mxu0 0.0
    %747 = vmatpush1.msra.mxu0 %v132
    %748 = vmatprep.subr.mxu0 0.0
    %749 = vmatpush1.msra.mxu0 %v133
    %750 = vmatprep.subr.mxu0 0.0
    %751 = vmatpush1.msra.mxu0 %v134
    %752 = vmatprep.subr.mxu0 0.0
    %753 = vmatpush1.msra.mxu0 %v135
    %754 = vmatprep.subr.mxu0 0.0
    %755 = vmatpush1.msra.mxu0 %v136
    %756 = vmatprep.subr.mxu0 0.0
    %757 = vmatpush1.msra.mxu0 %v137
    %758 = vmatprep.subr.mxu0 0.0
    %759 = vmatpush1.msra.mxu0 %v138
    %760 = vmatprep.subr.mxu0 0.0
    %761 = vmatpush1.msra.mxu0 %v139
    %762 = vmatprep.subr.mxu0 0.0
    %763 = vmatpush1.msra.mxu0 %v140
    %764 = vmatprep.subr.mxu0 0.0
    %765 = vmatpush1.msra.mxu0 %v141
    %766 = vmatprep.subr.mxu0 0.0
    %767 = vmatpush1.msra.mxu0 %v142
    %768 = vmatprep.subr.mxu0 0.0
    %769 = vmatpush1.msra.mxu0 %v143
    %770 = vmatprep.subr.mxu0 0.0
    %771 = vmatpush1.msra.mxu0 0.0
    %772 = vmatprep.subr.mxu0 0.0
    %773 = vmatpush1.msra.mxu0 0.0
    %774 = vmatprep.subr.mxu0 0.0
    %775 = vmatpush1.msra.mxu0 0.0
    %776 = vmatprep.subr.mxu0 0.0
    %777 = vmatpush1.msra.mxu0 0.0
    %778 = vmatprep.subr.mxu0 0.0
    %779 = vmatpush1.msra.mxu0 0.0
    %780 = vmatprep.subr.mxu0 0.0
    %781 = vmatpush1.msra.mxu0 0.0
    %782 = vmatprep.subr.mxu0 0.0
    %783 = vmatpush1.msra.mxu0 0.0
    %784 = vmatprep.subr.mxu0 0.0
    %785 = vmatpush1.msra.mxu0 0.0
    %786 = vmatprep.subr.mxu0 0.0
    %787 = vmatpush1.msra.mxu0 0.0
    %788 = vmatprep.subr.mxu0 0.0
    %789 = vmatpush1.msra.mxu0 0.0
    %790 = vmatprep.subr.mxu0 0.0
    %791 = vmatpush1.msra.mxu0 0.0
    %792 = vmatprep.subr.mxu0 0.0
    %793 = vmatpush1.msra.mxu0 0.0
    %794 = vmatprep.mubr.f32.mxu0 %v728
    %795 = vmatmul.mubr.f32.gmra.mrb[0].mxu0 %v121
    %v796 = vpop.f32.mrb[0].mxu0
    %v797 = vadd.f32 %v93, %v796
    %v798 = vpop.f32.mrb[0].mxu0
    %799 = vdwg.mxu0
    %v800 = vmul.f32 %v797, %v87
    %v801 = vtanh.pop %v800
    %v802 = vmul.f32 %v801, 0.5
    %v803 = vadd.f32 %v802, 0.5
    %v804 = vsel %vm86, %v801, %v803
    %v805 = vmul.f32 %v804, %v718
    %807 = vrot.lane.b32.xlu0 %v804, 64
    %v808 = vpop.permute.xlu0 %807
    %v810 = vmul.f32 %v804, %v808
    %812 = vrot.lane.b32.xlu0 %v810, 32
    %v813 = vpop.permute.xlu0 %812
    %v815 = vadd.f32 %v805, %v813
    %v816 = vtanh.pop %v815
    %818 = vrot.lane.b32.xlu0 %v816, 64
    %v819 = vpop.permute.xlu0 %818
    %v821 = vmul.f32 %v804, %v819
    %823 = vrot.lane.b32.xlu0 %v821, 32
    %v824 = vpop.permute.xlu0 %823
    %v825 = vsel %vm144, %v824, 0
    %827 = vmatprep.subr.mxu0 0.0
    %828 = vmatpush1.msra.mxu0 %v124
    %829 = vmatprep.subr.mxu0 0.0
    %830 = vmatpush1.msra.mxu0 %v125
    %831 = vmatprep.subr.mxu0 0.0
    %832 = vmatpush1.msra.mxu0 %v126
    %833 = vmatprep.subr.mxu0 0.0
    %834 = vmatpush1.msra.mxu0 %v127
    %835 = vmatprep.subr.mxu0 0.0
    %836 = vmatpush1.msra.mxu0 %v128
    %837 = vmatprep.subr.mxu0 0.0
    %838 = vmatpush1.msra.mxu0 %v129
    %839 = vmatprep.subr.mxu0 0.0
    %840 = vmatpush1.msra.mxu0 %v130
    %841 = vmatprep.subr.mxu0 0.0
    %842 = vmatpush1.msra.mxu0 %v131
    %843 = vmatprep.subr.mxu0 0.0
    %844 = vmatpush1.msra.mxu0 %v132
    %845 = vmatprep.subr.mxu0 0.0
    %846 = vmatpush1.msra.mxu0 %v133
    %847 = vmatprep.subr.mxu0 0.0
    %848 = vmatpush1.msra.mxu0 %v134
    %849 = vmatprep.subr.mxu0 0.0
    %850 = vmatpush1.msra.mxu0 %v135
    %851 = vmatprep.subr.mxu0 0.0
    %852 = vmatpush1.msra.mxu0 %v136
    %853 = vmatprep.subr.mxu0 0.0
    %854 = vmatpush1.msra.mxu0 %v137
    %855 = vmatprep.subr.mxu0 0.0
    %856 = vmatpush1.msra.mxu0 %v138
    %857 = vmatprep.subr.mxu0 0.0
    %858 = vmatpush1.msra.mxu0 %v139
    %859 = vmatprep.subr.mxu0 0.0
    %860 = vmatpush1.msra.mxu0 %v140
    %861 = vmatprep.subr.mxu0 0.0
    %862 = vmatpush1.msra.mxu0 %v141
    %863 = vmatprep.subr.mxu0 0.0
    %864 = vmatpush1.msra.mxu0 %v142
    %865 = vmatprep.subr.mxu0 0.0
    %866 = vmatpush1.msra.mxu0 %v143
    %867 = vmatprep.subr.mxu0 0.0
    %868 = vmatpush1.msra.mxu0 0.0
    %869 = vmatprep.subr.mxu0 0.0
    %870 = vmatpush1.msra.mxu0 0.0
    %871 = vmatprep.subr.mxu0 0.0
    %872 = vmatpush1.msra.mxu0 0.0
    %873 = vmatprep.subr.mxu0 0.0
    %874 = vmatpush1.msra.mxu0 0.0
    %875 = vmatprep.subr.mxu0 0.0
    %876 = vmatpush1.msra.mxu0 0.0
    %877 = vmatprep.subr.mxu0 0.0
    %878 = vmatpush1.msra.mxu0 0.0
    %879 = vmatprep.subr.mxu0 0.0
    %880 = vmatpush1.msra.mxu0 0.0
    %881 = vmatprep.subr.mxu0 0.0
    %882 = vmatpush1.msra.mxu0 0.0
    %883 = vmatprep.subr.mxu0 0.0
    %884 = vmatpush1.msra.mxu0 0.0
    %885 = vmatprep.subr.mxu0 0.0
    %886 = vmatpush1.msra.mxu0 0.0
    %887 = vmatprep.subr.mxu0 0.0
    %888 = vmatpush1.msra.mxu0 0.0
    %889 = vmatprep.subr.mxu0 0.0
    %890 = vmatpush1.msra.mxu0 0.0
    %891 = vmatprep.mubr.f32.mxu0 %v825
    %892 = vmatmul.mubr.f32.gmra.mrb[0].mxu0 %v123
    %v893 = vpop.f32.mrb[0].mxu0
    %v894 = vadd.f32 %v93, %v893
    %v895 = vpop.f32.mrb[0].mxu0
    %896 = vdwg.mxu0
    %v897 = vmul.f32 %v894, %v87
    %v898 = vtanh.pop %v897
    %v899 = vmul.f32 %v898, 0.5
    %v900 = vadd.f32 %v899, 0.5
    %v901 = vsel %vm86, %v898, %v900
    %v902 = vmul.f32 %v901, %v815
    %904 = vrot.lane.b32.xlu0 %v901, 64
    %v905 = vpop.permute.xlu0 %904
    %v907 = vmul.f32 %v901, %v905
    %909 = vrot.lane.b32.xlu0 %v907, 32
    %v910 = vpop.permute.xlu0 %909
    %v912 = vadd.f32 %v902, %v910
    %v913 = vtanh.pop %v912
    %915 = vrot.lane.b32.xlu0 %v913, 64
    %v916 = vpop.permute.xlu0 %915
    %v918 = vmul.f32 %v901, %v916
    %v920 = vsel %vm144, %v242, 0.0
    %v921 = vld [vmem:[#allocation7] sm:$0xff]
    %v922 = vld [vmem:[#allocation7 + $0x8] sm:$0xff]
    %v923 = vld [vmem:[#allocation7 + $0x10] sm:$0xff]
    %v924 = vld [vmem:[#allocation7 + $0x18] sm:$0xff]
    %v925 = vld [vmem:[#allocation7 + $0x20] sm:$0xff]
    %v926 = vld [vmem:[#allocation7 + $0x28] sm:$0xff]
    %v927 = vld [vmem:[#allocation7 + $0x30] sm:$0xff]
    %v928 = vld [vmem:[#allocation7 + $0x38] sm:$0xff]
    %vm929 = vcmask 523264
    %v931 = vsel %vm929, %v920, 0
    %933 = vmatprep.subr.mxu0 0.0
    %934 = vmatpush1.msra.mxu0 %v921
    %935 = vmatprep.subr.mxu0 0.0
    %936 = vmatpush1.msra.mxu0 %v922
    %937 = vmatprep.subr.mxu0 0.0
    %938 = vmatpush1.msra.mxu0 %v923
    %939 = vmatprep.subr.mxu0 0.0
    %940 = vmatpush1.msra.mxu0 %v924
    %941 = vmatprep.subr.mxu0 0.0
    %942 = vmatpush1.msra.mxu0 %v925
    %943 = vmatprep.subr.mxu0 0.0
    %944 = vmatpush1.msra.mxu0 %v926
    %945 = vmatprep.subr.mxu0 0.0
    %946 = vmatpush1.msra.mxu0 %v927
    %947 = vmatprep.subr.mxu0 0.0
    %948 = vmatpush1.msra.mxu0 %v928
    %949 = vmatprep.subr.mxu0 0.0
    %950 = vmatpush1.msra.mxu0 0.0
    %951 = vmatprep.subr.mxu0 0.0
    %952 = vmatpush1.msra.mxu0 0.0
    %953 = vmatprep.subr.mxu0 0.0
    %954 = vmatpush1.msra.mxu0 0.0
    %955 = vmatprep.subr.mxu0 0.0
    %956 = vmatpush1.msra.mxu0 0.0
    %957 = vmatprep.subr.mxu0 0.0
    %958 = vmatpush1.msra.mxu0 0.0
    %959 = vmatprep.subr.mxu0 0.0
    %960 = vmatpush1.msra.mxu0 0.0
    %961 = vmatprep.subr.mxu0 0.0
    %962 = vmatpush1.msra.mxu0 0.0
    %963 = vmatprep.subr.mxu0 0.0
    %964 = vmatpush1.msra.mxu0 0.0
    %965 = vmatprep.subr.mxu0 0.0
    %966 = vmatpush1.msra.mxu0 0.0
    %967 = vmatprep.subr.mxu0 0.0
    %968 = vmatpush1.msra.mxu0 0.0
    %969 = vmatprep.subr.mxu0 0.0
    %970 = vmatpush1.msra.mxu0 0.0
    %971 = vmatprep.subr.mxu0 0.0
    %972 = vmatpush1.msra.mxu0 0.0
    %973 = vmatprep.subr.mxu0 0.0
    %974 = vmatpush1.msra.mxu0 0.0
    %975 = vmatprep.subr.mxu0 0.0
    %976 = vmatpush1.msra.mxu0 0.0
    %977 = vmatprep.subr.mxu0 0.0
    %978 = vmatpush1.msra.mxu0 0.0
    %979 = vmatprep.subr.mxu0 0.0
    %980 = vmatpush1.msra.mxu0 0.0
    %981 = vmatprep.subr.mxu0 0.0
    %982 = vmatpush1.msra.mxu0 0.0
    %983 = vmatprep.subr.mxu0 0.0
    %984 = vmatpush1.msra.mxu0 0.0
    %985 = vmatprep.subr.mxu0 0.0
    %986 = vmatpush1.msra.mxu0 0.0
    %987 = vmatprep.subr.mxu0 0.0
    %988 = vmatpush1.msra.mxu0 0.0
    %989 = vmatprep.subr.mxu0 0.0
    %990 = vmatpush1.msra.mxu0 0.0
    %991 = vmatprep.subr.mxu0 0.0
    %992 = vmatpush1.msra.mxu0 0.0
    %993 = vmatprep.subr.mxu0 0.0
    %994 = vmatpush1.msra.mxu0 0.0
    %995 = vmatprep.subr.mxu0 0.0
    %996 = vmatpush1.msra.mxu0 0.0
    %997 = vmatprep.mubr.f32.mxu0 0.0
    %998 = vmatmul.mubr.f32.gmra.mrb[0].mxu0 %v931
    %v999 = vpop.f32.mrb[0].mxu0
    %v1000 = vadd.f32 %v100, %v999
    %v1001 = vpop.f32.mrb[0].mxu0
    %1002 = vdwg.mxu0
    %v1003 = vmul.f32 %v1000, %v87
    %v1004 = vtanh.pop %v1003
    %v1005 = vmul.f32 %v1004, 0.5
    %v1006 = vadd.f32 %v1005, 0.5
    %v1007 = vsel %vm86, %v1004, %v1006
    %v1008 = vmul.f32 %v1007, 0.0
    %1010 = vrot.lane.b32.xlu0 %v1007, 64
    %v1011 = vpop.permute.xlu0 %1010
    %v1013 = vmul.f32 %v1007, %v1011
    %1015 = vrot.lane.b32.xlu0 %v1013, 32
    %v1016 = vpop.permute.xlu0 %1015
    %v1018 = vadd.f32 %v1008, %v1016
    %v1019 = vtanh.pop %v1018
    %1021 = vrot.lane.b32.xlu0 %v1019, 64
    %v1022 = vpop.permute.xlu0 %1021
    %v1024 = vmul.f32 %v1007, %v1022
    %1027 = vrot.lane.b32.xlu0 %v1024, 64
    %v1028 = vpop.permute.xlu0 %1027
    %v1030 = vsel %vm144, %v339, %v1028
    %v1032 = vsel %vm929, %v1030, 0
    %1034 = vmatprep.subr.mxu0 0.0
    %1035 = vmatpush1.msra.mxu0 %v921
    %1036 = vmatprep.subr.mxu0 0.0
    %1037 = vmatpush1.msra.mxu0 %v922
    %1038 = vmatprep.subr.mxu0 0.0
    %1039 = vmatpush1.msra.mxu0 %v923
    %1040 = vmatprep.subr.mxu0 0.0
    %1041 = vmatpush1.msra.mxu0 %v924
    %1042 = vmatprep.subr.mxu0 0.0
    %1043 = vmatpush1.msra.mxu0 %v925
    %1044 = vmatprep.subr.mxu0 0.0
    %1045 = vmatpush1.msra.mxu0 %v926
    %1046 = vmatprep.subr.mxu0 0.0
    %1047 = vmatpush1.msra.mxu0 %v927
    %1048 = vmatprep.subr.mxu0 0.0
    %1049 = vmatpush1.msra.mxu0 %v928
    %1050 = vmatprep.subr.mxu0 0.0
    %1051 = vmatpush1.msra.mxu0 0.0
    %1052 = vmatprep.subr.mxu0 0.0
    %1053 = vmatpush1.msra.mxu0 0.0
    %1054 = vmatprep.subr.mxu0 0.0
    %1055 = vmatpush1.msra.mxu0 0.0
    %1056 = vmatprep.subr.mxu0 0.0
    %1057 = vmatpush1.msra.mxu0 0.0
    %1058 = vmatprep.subr.mxu0 0.0
    %1059 = vmatpush1.msra.mxu0 0.0
    %1060 = vmatprep.subr.mxu0 0.0
    %1061 = vmatpush1.msra.mxu0 0.0
    %1062 = vmatprep.subr.mxu0 0.0
    %1063 = vmatpush1.msra.mxu0 0.0
    %1064 = vmatprep.subr.mxu0 0.0
    %1065 = vmatpush1.msra.mxu0 0.0
    %1066 = vmatprep.subr.mxu0 0.0
    %1067 = vmatpush1.msra.mxu0 0.0
    %1068 = vmatprep.subr.mxu0 0.0
    %1069 = vmatpush1.msra.mxu0 0.0
    %1070 = vmatprep.subr.mxu0 0.0
    %1071 = vmatpush1.msra.mxu0 0.0
    %1072 = vmatprep.subr.mxu0 0.0
    %1073 = vmatpush1.msra.mxu0 0.0
    %1074 = vmatprep.subr.mxu0 0.0
    %1075 = vmatpush1.msra.mxu0 0.0
    %1076 = vmatprep.subr.mxu0 0.0
    %1077 = vmatpush1.msra.mxu0 0.0
    %1078 = vmatprep.subr.mxu0 0.0
    %1079 = vmatpush1.msra.mxu0 0.0
    %1080 = vmatprep.subr.mxu0 0.0
    %1081 = vmatpush1.msra.mxu0 0.0
    %1082 = vmatprep.subr.mxu0 0.0
    %1083 = vmatpush1.msra.mxu0 0.0
    %1084 = vmatprep.subr.mxu0 0.0
    %1085 = vmatpush1.msra.mxu0 0.0
    %1086 = vmatprep.subr.mxu0 0.0
    %1087 = vmatpush1.msra.mxu0 0.0
    %1088 = vmatprep.subr.mxu0 0.0
    %1089 = vmatpush1.msra.mxu0 0.0
    %1090 = vmatprep.subr.mxu0 0.0
    %1091 = vmatpush1.msra.mxu0 0.0
    %1092 = vmatprep.subr.mxu0 0.0
    %1093 = vmatpush1.msra.mxu0 0.0
    %1094 = vmatprep.subr.mxu0 0.0
    %1095 = vmatpush1.msra.mxu0 0.0
    %1096 = vmatprep.subr.mxu0 0.0
    %1097 = vmatpush1.msra.mxu0 0.0
    %1098 = vmatprep.mubr.f32.mxu0 0.0
    %1099 = vmatmul.mubr.f32.gmra.mrb[0].mxu0 %v1032
    %v1100 = vpop.f32.mrb[0].mxu0
    %v1101 = vadd.f32 %v100, %v1100
    %v1102 = vpop.f32.mrb[0].mxu0
    %1103 = vdwg.mxu0
    %v1104 = vmul.f32 %v1101, %v87
    %v1105 = vtanh.pop %v1104
    %v1106 = vmul.f32 %v1105, 0.5
    %v1107 = vadd.f32 %v1106, 0.5
    %v1108 = vsel %vm86, %v1105, %v1107
    %v1109 = vmul.f32 %v1108, %v1018
    %1111 = vrot.lane.b32.xlu0 %v1108, 64
    %v1112 = vpop.permute.xlu0 %1111
    %v1114 = vmul.f32 %v1108, %v1112
    %1116 = vrot.lane.b32.xlu0 %v1114, 32
    %v1117 = vpop.permute.xlu0 %1116
    %v1119 = vadd.f32 %v1109, %v1117
    %v1120 = vtanh.pop %v1119
    %1122 = vrot.lane.b32.xlu0 %v1120, 64
    %v1123 = vpop.permute.xlu0 %1122
    %v1125 = vmul.f32 %v1108, %v1123
    %1128 = vrot.lane.b32.xlu0 %v1125, 64
    %v1129 = vpop.permute.xlu0 %1128
    %v1131 = vsel %vm144, %v436, %v1129
    %v1133 = vsel %vm929, %v1131, 0
    %1135 = vmatprep.subr.mxu0 0.0
    %1136 = vmatpush1.msra.mxu0 %v921
    %1137 = vmatprep.subr.mxu0 0.0
    %1138 = vmatpush1.msra.mxu0 %v922
    %1139 = vmatprep.subr.mxu0 0.0
    %1140 = vmatpush1.msra.mxu0 %v923
    %1141 = vmatprep.subr.mxu0 0.0
    %1142 = vmatpush1.msra.mxu0 %v924
    %1143 = vmatprep.subr.mxu0 0.0
    %1144 = vmatpush1.msra.mxu0 %v925
    %1145 = vmatprep.subr.mxu0 0.0
    %1146 = vmatpush1.msra.mxu0 %v926
    %1147 = vmatprep.subr.mxu0 0.0
    %1148 = vmatpush1.msra.mxu0 %v927
    %1149 = vmatprep.subr.mxu0 0.0
    %1150 = vmatpush1.msra.mxu0 %v928
    %1151 = vmatprep.subr.mxu0 0.0
    %1152 = vmatpush1.msra.mxu0 0.0
    %1153 = vmatprep.subr.mxu0 0.0
    %1154 = vmatpush1.msra.mxu0 0.0
    %1155 = vmatprep.subr.mxu0 0.0
    %1156 = vmatpush1.msra.mxu0 0.0
    %1157 = vmatprep.subr.mxu0 0.0
    %1158 = vmatpush1.msra.mxu0 0.0
    %1159 = vmatprep.subr.mxu0 0.0
    %1160 = vmatpush1.msra.mxu0 0.0
    %1161 = vmatprep.subr.mxu0 0.0
    %1162 = vmatpush1.msra.mxu0 0.0
    %1163 = vmatprep.subr.mxu0 0.0
    %1164 = vmatpush1.msra.mxu0 0.0
    %1165 = vmatprep.subr.mxu0 0.0
    %1166 = vmatpush1.msra.mxu0 0.0
    %1167 = vmatprep.subr.mxu0 0.0
    %1168 = vmatpush1.msra.mxu0 0.0
    %1169 = vmatprep.subr.mxu0 0.0
    %1170 = vmatpush1.msra.mxu0 0.0
    %1171 = vmatprep.subr.mxu0 0.0
    %1172 = vmatpush1.msra.mxu0 0.0
    %1173 = vmatprep.subr.mxu0 0.0
    %1174 = vmatpush1.msra.mxu0 0.0
    %1175 = vmatprep.subr.mxu0 0.0
    %1176 = vmatpush1.msra.mxu0 0.0
    %1177 = vmatprep.subr.mxu0 0.0
    %1178 = vmatpush1.msra.mxu0 0.0
    %1179 = vmatprep.subr.mxu0 0.0
    %1180 = vmatpush1.msra.mxu0 0.0
    %1181 = vmatprep.subr.mxu0 0.0
    %1182 = vmatpush1.msra.mxu0 0.0
    %1183 = vmatprep.subr.mxu0 0.0
    %1184 = vmatpush1.msra.mxu0 0.0
    %1185 = vmatprep.subr.mxu0 0.0
    %1186 = vmatpush1.msra.mxu0 0.0
    %1187 = vmatprep.subr.mxu0 0.0
    %1188 = vmatpush1.msra.mxu0 0.0
    %1189 = vmatprep.subr.mxu0 0.0
    %1190 = vmatpush1.msra.mxu0 0.0
    %1191 = vmatprep.subr.mxu0 0.0
    %1192 = vmatpush1.msra.mxu0 0.0
    %1193 = vmatprep.subr.mxu0 0.0
    %1194 = vmatpush1.msra.mxu0 0.0
    %1195 = vmatprep.subr.mxu0 0.0
    %1196 = vmatpush1.msra.mxu0 0.0
    %1197 = vmatprep.subr.mxu0 0.0
    %1198 = vmatpush1.msra.mxu0 0.0
    %1199 = vmatprep.mubr.f32.mxu0 0.0
    %1200 = vmatmul.mubr.f32.gmra.mrb[0].mxu0 %v1133
    %v1201 = vpop.f32.mrb[0].mxu0
    %v1202 = vadd.f32 %v100, %v1201
    %v1203 = vpop.f32.mrb[0].mxu0
    %1204 = vdwg.mxu0
    %v1205 = vmul.f32 %v1202, %v87
    %v1206 = vtanh.pop %v1205
    %v1207 = vmul.f32 %v1206, 0.5
    %v1208 = vadd.f32 %v1207, 0.5
    %v1209 = vsel %vm86, %v1206, %v1208
    %v1210 = vmul.f32 %v1209, %v1119
    %1212 = vrot.lane.b32.xlu0 %v1209, 64
    %v1213 = vpop.permute.xlu0 %1212
    %v1215 = vmul.f32 %v1209, %v1213
    %1217 = vrot.lane.b32.xlu0 %v1215, 32
    %v1218 = vpop.permute.xlu0 %1217
    %v1220 = vadd.f32 %v1210, %v1218
    %v1221 = vtanh.pop %v1220
    %1223 = vrot.lane.b32.xlu0 %v1221, 64
    %v1224 = vpop.permute.xlu0 %1223
    %v1226 = vmul.f32 %v1209, %v1224
    %1229 = vrot.lane.b32.xlu0 %v1226, 64
    %v1230 = vpop.permute.xlu0 %1229
    %v1232 = vsel %vm144, %v533, %v1230
    %v1234 = vsel %vm929, %v1232, 0
    %1236 = vmatprep.subr.mxu0 0.0
    %1237 = vmatpush1.msra.mxu0 %v921
    %1238 = vmatprep.subr.mxu0 0.0
    %1239 = vmatpush1.msra.mxu0 %v922
    %1240 = vmatprep.subr.mxu0 0.0
    %1241 = vmatpush1.msra.mxu0 %v923
    %1242 = vmatprep.subr.mxu0 0.0
    %1243 = vmatpush1.msra.mxu0 %v924
    %1244 = vmatprep.subr.mxu0 0.0
    %1245 = vmatpush1.msra.mxu0 %v925
    %1246 = vmatprep.subr.mxu0 0.0
    %1247 = vmatpush1.msra.mxu0 %v926
    %1248 = vmatprep.subr.mxu0 0.0
    %1249 = vmatpush1.msra.mxu0 %v927
    %1250 = vmatprep.subr.mxu0 0.0
    %1251 = vmatpush1.msra.mxu0 %v928
    %1252 = vmatprep.subr.mxu0 0.0
    %1253 = vmatpush1.msra.mxu0 0.0
    %1254 = vmatprep.subr.mxu0 0.0
    %1255 = vmatpush1.msra.mxu0 0.0
    %1256 = vmatprep.subr.mxu0 0.0
    %1257 = vmatpush1.msra.mxu0 0.0
    %1258 = vmatprep.subr.mxu0 0.0
    %1259 = vmatpush1.msra.mxu0 0.0
    %1260 = vmatprep.subr.mxu0 0.0
    %1261 = vmatpush1.msra.mxu0 0.0
    %1262 = vmatprep.subr.mxu0 0.0
    %1263 = vmatpush1.msra.mxu0 0.0
    %1264 = vmatprep.subr.mxu0 0.0
    %1265 = vmatpush1.msra.mxu0 0.0
    %1266 = vmatprep.subr.mxu0 0.0
    %1267 = vmatpush1.msra.mxu0 0.0
    %1268 = vmatprep.subr.mxu0 0.0
    %1269 = vmatpush1.msra.mxu0 0.0
    %1270 = vmatprep.subr.mxu0 0.0
    %1271 = vmatpush1.msra.mxu0 0.0
    %1272 = vmatprep.subr.mxu0 0.0
    %1273 = vmatpush1.msra.mxu0 0.0
    %1274 = vmatprep.subr.mxu0 0.0
    %1275 = vmatpush1.msra.mxu0 0.0
    %1276 = vmatprep.subr.mxu0 0.0
    %1277 = vmatpush1.msra.mxu0 0.0
    %1278 = vmatprep.subr.mxu0 0.0
    %1279 = vmatpush1.msra.mxu0 0.0
    %1280 = vmatprep.subr.mxu0 0.0
    %1281 = vmatpush1.msra.mxu0 0.0
    %1282 = vmatprep.subr.mxu0 0.0
    %1283 = vmatpush1.msra.mxu0 0.0
    %1284 = vmatprep.subr.mxu0 0.0
    %1285 = vmatpush1.msra.mxu0 0.0
    %1286 = vmatprep.subr.mxu0 0.0
    %1287 = vmatpush1.msra.mxu0 0.0
    %1288 = vmatprep.subr.mxu0 0.0
    %1289 = vmatpush1.msra.mxu0 0.0
    %1290 = vmatprep.subr.mxu0 0.0
    %1291 = vmatpush1.msra.mxu0 0.0
    %1292 = vmatprep.subr.mxu0 0.0
    %1293 = vmatpush1.msra.mxu0 0.0
    %1294 = vmatprep.subr.mxu0 0.0
    %1295 = vmatpush1.msra.mxu0 0.0
    %1296 = vmatprep.subr.mxu0 0.0
    %1297 = vmatpush1.msra.mxu0 0.0
    %1298 = vmatprep.subr.mxu0 0.0
    %1299 = vmatpush1.msra.mxu0 0.0
    %1300 = vmatprep.mubr.f32.mxu0 0.0
    %1301 = vmatmul.mubr.f32.gmra.mrb[0].mxu0 %v1234
    %v1302 = vpop.f32.mrb[0].mxu0
    %v1303 = vadd.f32 %v100, %v1302
    %v1304 = vpop.f32.mrb[0].mxu0
    %1305 = vdwg.mxu0
    %v1306 = vmul.f32 %v1303, %v87
    %v1307 = vtanh.pop %v1306
    %v1308 = vmul.f32 %v1307, 0.5
    %v1309 = vadd.f32 %v1308, 0.5
    %v1310 = vsel %vm86, %v1307, %v1309
    %v1311 = vmul.f32 %v1310, %v1220
    %1313 = vrot.lane.b32.xlu0 %v1310, 64
    %v1314 = vpop.permute.xlu0 %1313
    %v1316 = vmul.f32 %v1310, %v1314
    %1318 = vrot.lane.b32.xlu0 %v1316, 32
    %v1319 = vpop.permute.xlu0 %1318
    %v1321 = vadd.f32 %v1311, %v1319
    %v1322 = vtanh.pop %v1321
    %1324 = vrot.lane.b32.xlu0 %v1322, 64
    %v1325 = vpop.permute.xlu0 %1324
    %v1327 = vmul.f32 %v1310, %v1325
    %1330 = vrot.lane.b32.xlu0 %v1327, 64
    %v1331 = vpop.permute.xlu0 %1330
    %v1333 = vsel %vm144, %v630, %v1331
    %v1335 = vsel %vm929, %v1333, 0
    %1337 = vmatprep.subr.mxu0 0.0
    %1338 = vmatpush1.msra.mxu0 %v921
    %1339 = vmatprep.subr.mxu0 0.0
    %1340 = vmatpush1.msra.mxu0 %v922
    %1341 = vmatprep.subr.mxu0 0.0
    %1342 = vmatpush1.msra.mxu0 %v923
    %1343 = vmatprep.subr.mxu0 0.0
    %1344 = vmatpush1.msra.mxu0 %v924
    %1345 = vmatprep.subr.mxu0 0.0
    %1346 = vmatpush1.msra.mxu0 %v925
    %1347 = vmatprep.subr.mxu0 0.0
    %1348 = vmatpush1.msra.mxu0 %v926
    %1349 = vmatprep.subr.mxu0 0.0
    %1350 = vmatpush1.msra.mxu0 %v927
    %1351 = vmatprep.subr.mxu0 0.0
    %1352 = vmatpush1.msra.mxu0 %v928
    %1353 = vmatprep.subr.mxu0 0.0
    %1354 = vmatpush1.msra.mxu0 0.0
    %1355 = vmatprep.subr.mxu0 0.0
    %1356 = vmatpush1.msra.mxu0 0.0
    %1357 = vmatprep.subr.mxu0 0.0
    %1358 = vmatpush1.msra.mxu0 0.0
    %1359 = vmatprep.subr.mxu0 0.0
    %1360 = vmatpush1.msra.mxu0 0.0
    %1361 = vmatprep.subr.mxu0 0.0
    %1362 = vmatpush1.msra.mxu0 0.0
    %1363 = vmatprep.subr.mxu0 0.0
    %1364 = vmatpush1.msra.mxu0 0.0
    %1365 = vmatprep.subr.mxu0 0.0
    %1366 = vmatpush1.msra.mxu0 0.0
    %1367 = vmatprep.subr.mxu0 0.0
    %1368 = vmatpush1.msra.mxu0 0.0
    %1369 = vmatprep.subr.mxu0 0.0
    %1370 = vmatpush1.msra.mxu0 0.0
    %1371 = vmatprep.subr.mxu0 0.0
    %1372 = vmatpush1.msra.mxu0 0.0
    %1373 = vmatprep.subr.mxu0 0.0
    %1374 = vmatpush1.msra.mxu0 0.0
    %1375 = vmatprep.subr.mxu0 0.0
    %1376 = vmatpush1.msra.mxu0 0.0
    %1377 = vmatprep.subr.mxu0 0.0
    %1378 = vmatpush1.msra.mxu0 0.0
    %1379 = vmatprep.subr.mxu0 0.0
    %1380 = vmatpush1.msra.mxu0 0.0
    %1381 = vmatprep.subr.mxu0 0.0
    %1382 = vmatpush1.msra.mxu0 0.0
    %1383 = vmatprep.subr.mxu0 0.0
    %1384 = vmatpush1.msra.mxu0 0.0
    %1385 = vmatprep.subr.mxu0 0.0
    %1386 = vmatpush1.msra.mxu0 0.0
    %1387 = vmatprep.subr.mxu0 0.0
    %1388 = vmatpush1.msra.mxu0 0.0
    %1389 = vmatprep.subr.mxu0 0.0
    %1390 = vmatpush1.msra.mxu0 0.0
    %1391 = vmatprep.subr.mxu0 0.0
    %1392 = vmatpush1.msra.mxu0 0.0
    %1393 = vmatprep.subr.mxu0 0.0
    %1394 = vmatpush1.msra.mxu0 0.0
    %1395 = vmatprep.subr.mxu0 0.0
    %1396 = vmatpush1.msra.mxu0 0.0
    %1397 = vmatprep.subr.mxu0 0.0
    %1398 = vmatpush1.msra.mxu0 0.0
    %1399 = vmatprep.subr.mxu0 0.0
    %1400 = vmatpush1.msra.mxu0 0.0
    %1401 = vmatprep.mubr.f32.mxu0 0.0
    %1402 = vmatmul.mubr.f32.gmra.mrb[0].mxu0 %v1335
    %v1403 = vpop.f32.mrb[0].mxu0
    %v1404 = vadd.f32 %v100, %v1403
    %v1405 = vpop.f32.mrb[0].mxu0
    %1406 = vdwg.mxu0
    %v1407 = vmul.f32 %v1404, %v87
    %v1408 = vtanh.pop %v1407
    %v1409 = vmul.f32 %v1408, 0.5
    %v1410 = vadd.f32 %v1409, 0.5
    %v1411 = vsel %vm86, %v1408, %v1410
    %v1412 = vmul.f32 %v1411, %v1321
    %1414 = vrot.lane.b32.xlu0 %v1411, 64
    %v1415 = vpop.permute.xlu0 %1414
    %v1417 = vmul.f32 %v1411, %v1415
    %1419 = vrot.lane.b32.xlu0 %v1417, 32
    %v1420 = vpop.permute.xlu0 %1419
    %v1422 = vadd.f32 %v1412, %v1420
    %v1423 = vtanh.pop %v1422
    %1425 = vrot.lane.b32.xlu0 %v1423, 64
    %v1426 = vpop.permute.xlu0 %1425
    %v1428 = vmul.f32 %v1411, %v1426
    %1431 = vrot.lane.b32.xlu0 %v1428, 64
    %v1432 = vpop.permute.xlu0 %1431
    %v1434 = vsel %vm144, %v727, %v1432
    %v1436 = vsel %vm929, %v1434, 0
    %1438 = vmatprep.subr.mxu0 0.0
    %1439 = vmatpush1.msra.mxu0 %v921
    %1440 = vmatprep.subr.mxu0 0.0
    %1441 = vmatpush1.msra.mxu0 %v922
    %1442 = vmatprep.subr.mxu0 0.0
    %1443 = vmatpush1.msra.mxu0 %v923
    %1444 = vmatprep.subr.mxu0 0.0
    %1445 = vmatpush1.msra.mxu0 %v924
    %1446 = vmatprep.subr.mxu0 0.0
    %1447 = vmatpush1.msra.mxu0 %v925
    %1448 = vmatprep.subr.mxu0 0.0
    %1449 = vmatpush1.msra.mxu0 %v926
    %1450 = vmatprep.subr.mxu0 0.0
    %1451 = vmatpush1.msra.mxu0 %v927
    %1452 = vmatprep.subr.mxu0 0.0
    %1453 = vmatpush1.msra.mxu0 %v928
    %1454 = vmatprep.subr.mxu0 0.0
    %1455 = vmatpush1.msra.mxu0 0.0
    %1456 = vmatprep.subr.mxu0 0.0
    %1457 = vmatpush1.msra.mxu0 0.0
    %1458 = vmatprep.subr.mxu0 0.0
    %1459 = vmatpush1.msra.mxu0 0.0
    %1460 = vmatprep.subr.mxu0 0.0
    %1461 = vmatpush1.msra.mxu0 0.0
    %1462 = vmatprep.subr.mxu0 0.0
    %1463 = vmatpush1.msra.mxu0 0.0
    %1464 = vmatprep.subr.mxu0 0.0
    %1465 = vmatpush1.msra.mxu0 0.0
    %1466 = vmatprep.subr.mxu0 0.0
    %1467 = vmatpush1.msra.mxu0 0.0
    %1468 = vmatprep.subr.mxu0 0.0
    %1469 = vmatpush1.msra.mxu0 0.0
    %1470 = vmatprep.subr.mxu0 0.0
    %1471 = vmatpush1.msra.mxu0 0.0
    %1472 = vmatprep.subr.mxu0 0.0
    %1473 = vmatpush1.msra.mxu0 0.0
    %1474 = vmatprep.subr.mxu0 0.0
    %1475 = vmatpush1.msra.mxu0 0.0
    %1476 = vmatprep.subr.mxu0 0.0
    %1477 = vmatpush1.msra.mxu0 0.0
    %1478 = vmatprep.subr.mxu0 0.0
    %1479 = vmatpush1.msra.mxu0 0.0
    %1480 = vmatprep.subr.mxu0 0.0
    %1481 = vmatpush1.msra.mxu0 0.0
    %1482 = vmatprep.subr.mxu0 0.0
    %1483 = vmatpush1.msra.mxu0 0.0
    %1484 = vmatprep.subr.mxu0 0.0
    %1485 = vmatpush1.msra.mxu0 0.0
    %1486 = vmatprep.subr.mxu0 0.0
    %1487 = vmatpush1.msra.mxu0 0.0
    %1488 = vmatprep.subr.mxu0 0.0
    %1489 = vmatpush1.msra.mxu0 0.0
    %1490 = vmatprep.subr.mxu0 0.0
    %1491 = vmatpush1.msra.mxu0 0.0
    %1492 = vmatprep.subr.mxu0 0.0
    %1493 = vmatpush1.msra.mxu0 0.0
    %1494 = vmatprep.subr.mxu0 0.0
    %1495 = vmatpush1.msra.mxu0 0.0
    %1496 = vmatprep.subr.mxu0 0.0
    %1497 = vmatpush1.msra.mxu0 0.0
    %1498 = vmatprep.subr.mxu0 0.0
    %1499 = vmatpush1.msra.mxu0 0.0
    %1500 = vmatprep.subr.mxu0 0.0
    %1501 = vmatpush1.msra.mxu0 0.0
    %1502 = vmatprep.mubr.f32.mxu0 0.0
    %1503 = vmatmul.mubr.f32.gmra.mrb[0].mxu0 %v1436
    %v1504 = vpop.f32.mrb[0].mxu0
    %v1505 = vadd.f32 %v100, %v1504
    %v1506 = vpop.f32.mrb[0].mxu0
    %1507 = vdwg.mxu0
    %v1508 = vmul.f32 %v1505, %v87
    %v1509 = vtanh.pop %v1508
    %v1510 = vmul.f32 %v1509, 0.5
    %v1511 = vadd.f32 %v1510, 0.5
    %v1512 = vsel %vm86, %v1509, %v1511
    %v1513 = vmul.f32 %v1512, %v1422
    %1515 = vrot.lane.b32.xlu0 %v1512, 64
    %v1516 = vpop.permute.xlu0 %1515
    %v1518 = vmul.f32 %v1512, %v1516
    %1520 = vrot.lane.b32.xlu0 %v1518, 32
    %v1521 = vpop.permute.xlu0 %1520
    %v1523 = vadd.f32 %v1513, %v1521
    %v1524 = vtanh.pop %v1523
    %1526 = vrot.lane.b32.xlu0 %v1524, 64
    %v1527 = vpop.permute.xlu0 %1526
    %v1529 = vmul.f32 %v1512, %v1527
    %1532 = vrot.lane.b32.xlu0 %v1529, 64
    %v1533 = vpop.permute.xlu0 %1532
    %v1535 = vsel %vm144, %v824, %v1533
    %v1537 = vsel %vm929, %v1535, 0
    %1539 = vmatprep.subr.mxu0 0.0
    %1540 = vmatpush1.msra.mxu0 %v921
    %1541 = vmatprep.subr.mxu0 0.0
    %1542 = vmatpush1.msra.mxu0 %v922
    %1543 = vmatprep.subr.mxu0 0.0
    %1544 = vmatpush1.msra.mxu0 %v923
    %1545 = vmatprep.subr.mxu0 0.0
    %1546 = vmatpush1.msra.mxu0 %v924
    %1547 = vmatprep.subr.mxu0 0.0
    %1548 = vmatpush1.msra.mxu0 %v925
    %1549 = vmatprep.subr.mxu0 0.0
    %1550 = vmatpush1.msra.mxu0 %v926
    %1551 = vmatprep.subr.mxu0 0.0
    %1552 = vmatpush1.msra.mxu0 %v927
    %1553 = vmatprep.subr.mxu0 0.0
    %1554 = vmatpush1.msra.mxu0 %v928
    %1555 = vmatprep.subr.mxu0 0.0
    %1556 = vmatpush1.msra.mxu0 0.0
    %1557 = vmatprep.subr.mxu0 0.0
    %1558 = vmatpush1.msra.mxu0 0.0
    %1559 = vmatprep.subr.mxu0 0.0
    %1560 = vmatpush1.msra.mxu0 0.0
    %1561 = vmatprep.subr.mxu0 0.0
    %1562 = vmatpush1.msra.mxu0 0.0
    %1563 = vmatprep.subr.mxu0 0.0
    %1564 = vmatpush1.msra.mxu0 0.0
    %1565 = vmatprep.subr.mxu0 0.0
    %1566 = vmatpush1.msra.mxu0 0.0
    %1567 = vmatprep.subr.mxu0 0.0
    %1568 = vmatpush1.msra.mxu0 0.0
    %1569 = vmatprep.subr.mxu0 0.0
    %1570 = vmatpush1.msra.mxu0 0.0
    %1571 = vmatprep.subr.mxu0 0.0
    %1572 = vmatpush1.msra.mxu0 0.0
    %1573 = vmatprep.subr.mxu0 0.0
    %1574 = vmatpush1.msra.mxu0 0.0
    %1575 = vmatprep.subr.mxu0 0.0
    %1576 = vmatpush1.msra.mxu0 0.0
    %1577 = vmatprep.subr.mxu0 0.0
    %1578 = vmatpush1.msra.mxu0 0.0
    %1579 = vmatprep.subr.mxu0 0.0
    %1580 = vmatpush1.msra.mxu0 0.0
    %1581 = vmatprep.subr.mxu0 0.0
    %1582 = vmatpush1.msra.mxu0 0.0
    %1583 = vmatprep.subr.mxu0 0.0
    %1584 = vmatpush1.msra.mxu0 0.0
    %1585 = vmatprep.subr.mxu0 0.0
    %1586 = vmatpush1.msra.mxu0 0.0
    %1587 = vmatprep.subr.mxu0 0.0
    %1588 = vmatpush1.msra.mxu0 0.0
    %1589 = vmatprep.subr.mxu0 0.0
    %1590 = vmatpush1.msra.mxu0 0.0
    %1591 = vmatprep.subr.mxu0 0.0
    %1592 = vmatpush1.msra.mxu0 0.0
    %1593 = vmatprep.subr.mxu0 0.0
    %1594 = vmatpush1.msra.mxu0 0.0
    %1595 = vmatprep.subr.mxu0 0.0
    %1596 = vmatpush1.msra.mxu0 0.0
    %1597 = vmatprep.subr.mxu0 0.0
    %1598 = vmatpush1.msra.mxu0 0.0
    %1599 = vmatprep.subr.mxu0 0.0
    %1600 = vmatpush1.msra.mxu0 0.0
    %1601 = vmatprep.subr.mxu0 0.0
    %1602 = vmatpush1.msra.mxu0 0.0
    %1603 = vmatprep.mubr.f32.mxu0 0.0
    %1604 = vmatmul.mubr.f32.gmra.mrb[0].mxu0 %v1537
    %v1605 = vpop.f32.mrb[0].mxu0
    %v1606 = vadd.f32 %v100, %v1605
    %v1607 = vpop.f32.mrb[0].mxu0
    %1608 = vdwg.mxu0
    %v1609 = vmul.f32 %v1606, %v87
    %v1610 = vtanh.pop %v1609
    %v1611 = vmul.f32 %v1610, 0.5
    %v1612 = vadd.f32 %v1611, 0.5
    %v1613 = vsel %vm86, %v1610, %v1612
    %v1614 = vmul.f32 %v1613, %v1523
    %1616 = vrot.lane.b32.xlu0 %v1613, 64
    %v1617 = vpop.permute.xlu0 %1616
    %v1619 = vmul.f32 %v1613, %v1617
    %1621 = vrot.lane.b32.xlu0 %v1619, 32
    %v1622 = vpop.permute.xlu0 %1621
    %v1624 = vadd.f32 %v1614, %v1622
    %v1625 = vtanh.pop %v1624
    %1627 = vrot.lane.b32.xlu0 %v1625, 64
    %v1628 = vpop.permute.xlu0 %1627
    %v1630 = vmul.f32 %v1613, %v1628
    %1632 = vrot.lane.b32.xlu0 %v918, 32
    %v1633 = vpop.permute.xlu0 %1632
    %1636 = vrot.lane.b32.xlu0 %v1630, 64
    %v1637 = vpop.permute.xlu0 %1636
    %v1639 = vsel %vm144, %v1633, %v1637
    %v1641 = vsel %vm929, %v1639, 0
    %1643 = vmatprep.subr.mxu0 0.0
    %1644 = vmatpush1.msra.mxu0 %v921
    %1645 = vmatprep.subr.mxu0 0.0
    %1646 = vmatpush1.msra.mxu0 %v922
    %1647 = vmatprep.subr.mxu0 0.0
    %1648 = vmatpush1.msra.mxu0 %v923
    %1649 = vmatprep.subr.mxu0 0.0
    %1650 = vmatpush1.msra.mxu0 %v924
    %1651 = vmatprep.subr.mxu0 0.0
    %1652 = vmatpush1.msra.mxu0 %v925
    %1653 = vmatprep.subr.mxu0 0.0
    %1654 = vmatpush1.msra.mxu0 %v926
    %1655 = vmatprep.subr.mxu0 0.0
    %1656 = vmatpush1.msra.mxu0 %v927
    %1657 = vmatprep.subr.mxu0 0.0
    %1658 = vmatpush1.msra.mxu0 %v928
    %1659 = vmatprep.subr.mxu0 0.0
    %1660 = vmatpush1.msra.mxu0 0.0
    %1661 = vmatprep.subr.mxu0 0.0
    %1662 = vmatpush1.msra.mxu0 0.0
    %1663 = vmatprep.subr.mxu0 0.0
    %1664 = vmatpush1.msra.mxu0 0.0
    %1665 = vmatprep.subr.mxu0 0.0
    %1666 = vmatpush1.msra.mxu0 0.0
    %1667 = vmatprep.subr.mxu0 0.0
    %1668 = vmatpush1.msra.mxu0 0.0
    %1669 = vmatprep.subr.mxu0 0.0
    %1670 = vmatpush1.msra.mxu0 0.0
    %1671 = vmatprep.subr.mxu0 0.0
    %1672 = vmatpush1.msra.mxu0 0.0
    %1673 = vmatprep.subr.mxu0 0.0
    %1674 = vmatpush1.msra.mxu0 0.0
    %1675 = vmatprep.subr.mxu0 0.0
    %1676 = vmatpush1.msra.mxu0 0.0
    %1677 = vmatprep.subr.mxu0 0.0
    %1678 = vmatpush1.msra.mxu0 0.0
    %1679 = vmatprep.subr.mxu0 0.0
    %1680 = vmatpush1.msra.mxu0 0.0
    %1681 = vmatprep.subr.mxu0 0.0
    %1682 = vmatpush1.msra.mxu0 0.0
    %1683 = vmatprep.subr.mxu0 0.0
    %1684 = vmatpush1.msra.mxu0 0.0
    %1685 = vmatprep.subr.mxu0 0.0
    %1686 = vmatpush1.msra.mxu0 0.0
    %1687 = vmatprep.subr.mxu0 0.0
    %1688 = vmatpush1.msra.mxu0 0.0
    %1689 = vmatprep.subr.mxu0 0.0
    %1690 = vmatpush1.msra.mxu0 0.0
    %1691 = vmatprep.subr.mxu0 0.0
    %1692 = vmatpush1.msra.mxu0 0.0
    %1693 = vmatprep.subr.mxu0 0.0
    %1694 = vmatpush1.msra.mxu0 0.0
    %1695 = vmatprep.subr.mxu0 0.0
    %1696 = vmatpush1.msra.mxu0 0.0
    %1697 = vmatprep.subr.mxu0 0.0
    %1698 = vmatpush1.msra.mxu0 0.0
    %1699 = vmatprep.subr.mxu0 0.0
    %1700 = vmatpush1.msra.mxu0 0.0
    %1701 = vmatprep.subr.mxu0 0.0
    %1702 = vmatpush1.msra.mxu0 0.0
    %1703 = vmatprep.subr.mxu0 0.0
    %1704 = vmatpush1.msra.mxu0 0.0
    %1705 = vmatprep.subr.mxu0 0.0
    %1706 = vmatpush1.msra.mxu0 0.0
    %1707 = vmatprep.mubr.f32.mxu0 0.0
    %1708 = vmatmul.mubr.f32.gmra.mrb[0].mxu0 %v1641
    %v1709 = vpop.f32.mrb[0].mxu0
    %v1710 = vadd.f32 %v100, %v1709
    %v1711 = vpop.f32.mrb[0].mxu0
    %1712 = vdwg.mxu0
    %v1713 = vmul.f32 %v1710, %v87
    %v1714 = vtanh.pop %v1713
    %v1715 = vmul.f32 %v1714, 0.5
    %v1716 = vadd.f32 %v1715, 0.5
    %v1717 = vsel %vm86, %v1714, %v1716
    %v1718 = vmul.f32 %v1717, %v1624
    %1720 = vrot.lane.b32.xlu0 %v1717, 64
    %v1721 = vpop.permute.xlu0 %1720
    %v1723 = vmul.f32 %v1717, %v1721
    %1725 = vrot.lane.b32.xlu0 %v1723, 32
    %v1726 = vpop.permute.xlu0 %1725
    %v1728 = vadd.f32 %v1718, %v1726
    %v1729 = vtanh.pop %v1728
    %1731 = vrot.lane.b32.xlu0 %v1729, 64
    %v1732 = vpop.permute.xlu0 %1731
    %v1734 = vmul.f32 %v1717, %v1732
    %v1735 = vsel %vm144, %v1633, 0
    %1737 = vmatprep.subr.mxu0 0.0
    %1738 = vmatpush1.msra.mxu0 %v124
    %1739 = vmatprep.subr.mxu0 0.0
    %1740 = vmatpush1.msra.mxu0 %v125
    %1741 = vmatprep.subr.mxu0 0.0
    %1742 = vmatpush1.msra.mxu0 %v126
    %1743 = vmatprep.subr.mxu0 0.0
    %1744 = vmatpush1.msra.mxu0 %v127
    %1745 = vmatprep.subr.mxu0 0.0
    %1746 = vmatpush1.msra.mxu0 %v128
    %1747 = vmatprep.subr.mxu0 0.0
    %1748 = vmatpush1.msra.mxu0 %v129
    %1749 = vmatprep.subr.mxu0 0.0
    %1750 = vmatpush1.msra.mxu0 %v130
    %1751 = vmatprep.subr.mxu0 0.0
    %1752 = vmatpush1.msra.mxu0 %v131
    %1753 = vmatprep.subr.mxu0 0.0
    %1754 = vmatpush1.msra.mxu0 %v132
    %1755 = vmatprep.subr.mxu0 0.0
    %1756 = vmatpush1.msra.mxu0 %v133
    %1757 = vmatprep.subr.mxu0 0.0
    %1758 = vmatpush1.msra.mxu0 %v134
    %1759 = vmatprep.subr.mxu0 0.0
    %1760 = vmatpush1.msra.mxu0 %v135
    %1761 = vmatprep.subr.mxu0 0.0
    %1762 = vmatpush1.msra.mxu0 %v136
    %1763 = vmatprep.subr.mxu0 0.0
    %1764 = vmatpush1.msra.mxu0 %v137
    %1765 = vmatprep.subr.mxu0 0.0
    %1766 = vmatpush1.msra.mxu0 %v138
    %1767 = vmatprep.subr.mxu0 0.0
    %1768 = vmatpush1.msra.mxu0 %v139
    %1769 = vmatprep.subr.mxu0 0.0
    %1770 = vmatpush1.msra.mxu0 %v140
    %1771 = vmatprep.subr.mxu0 0.0
    %1772 = vmatpush1.msra.mxu0 %v141
    %1773 = vmatprep.subr.mxu0 0.0
    %1774 = vmatpush1.msra.mxu0 %v142
    %1775 = vmatprep.subr.mxu0 0.0
    %1776 = vmatpush1.msra.mxu0 %v143
    %1777 = vmatprep.subr.mxu0 0.0
    %1778 = vmatpush1.msra.mxu0 0.0
    %1779 = vmatprep.subr.mxu0 0.0
    %1780 = vmatpush1.msra.mxu0 0.0
    %1781 = vmatprep.subr.mxu0 0.0
    %1782 = vmatpush1.msra.mxu0 0.0
    %1783 = vmatprep.subr.mxu0 0.0
    %1784 = vmatpush1.msra.mxu0 0.0
    %1785 = vmatprep.subr.mxu0 0.0
    %1786 = vmatpush1.msra.mxu0 0.0
    %1787 = vmatprep.subr.mxu0 0.0
    %1788 = vmatpush1.msra.mxu0 0.0
    %1789 = vmatprep.subr.mxu0 0.0
    %1790 = vmatpush1.msra.mxu0 0.0
    %1791 = vmatprep.subr.mxu0 0.0
    %1792 = vmatpush1.msra.mxu0 0.0
    %1793 = vmatprep.subr.mxu0 0.0
    %1794 = vmatpush1.msra.mxu0 0.0
    %1795 = vmatprep.subr.mxu0 0.0
    %1796 = vmatpush1.msra.mxu0 0.0
    %1797 = vmatprep.subr.mxu0 0.0
    %1798 = vmatpush1.msra.mxu0 0.0
    %1799 = vmatprep.subr.mxu0 0.0
    %1800 = vmatpush1.msra.mxu0 0.0
    %1801 = vmatprep.mubr.f32.mxu0 %v1735
    %1802 = vmatmul.mubr.f32.gmra.mrb[0].mxu0 %v123
    %v1803 = vpop.f32.mrb[0].mxu0
    %v1804 = vadd.f32 %v93, %v1803
    %v1805 = vpop.f32.mrb[0].mxu0
    %1806 = vdwg.mxu0
    %v1807 = vmul.f32 %v1804, %v87
    %v1808 = vtanh.pop %v1807
    %v1809 = vmul.f32 %v1808, 0.5
    %v1810 = vadd.f32 %v1809, 0.5
    %v1811 = vsel %vm86, %v1808, %v1810
    %v1812 = vmul.f32 %v1811, %v912
    %1814 = vrot.lane.b32.xlu0 %v1811, 64
    %v1815 = vpop.permute.xlu0 %1814
    %v1817 = vmul.f32 %v1811, %v1815
    %1819 = vrot.lane.b32.xlu0 %v1817, 32
    %v1820 = vpop.permute.xlu0 %1819
    %v1822 = vadd.f32 %v1812, %v1820
    %v1823 = vtanh.pop %v1822
    %1825 = vrot.lane.b32.xlu0 %v1823, 64
    %v1826 = vpop.permute.xlu0 %1825
    %v1828 = vmul.f32 %v1811, %v1826
    %1830 = vrot.lane.b32.xlu0 %v1828, 32
    %v1831 = vpop.permute.xlu0 %1830
    %1834 = vrot.lane.b32.xlu0 %v1734, 64
    %v1835 = vpop.permute.xlu0 %1834
    %v1837 = vsel %vm144, %v1831, %v1835
    %v1839 = vsel %vm929, %v1837, 0
    %1841 = vmatprep.subr.mxu0 0.0
    %1842 = vmatpush1.msra.mxu0 %v921
    %1843 = vmatprep.subr.mxu0 0.0
    %1844 = vmatpush1.msra.mxu0 %v922
    %1845 = vmatprep.subr.mxu0 0.0
    %1846 = vmatpush1.msra.mxu0 %v923
    %1847 = vmatprep.subr.mxu0 0.0
    %1848 = vmatpush1.msra.mxu0 %v924
    %1849 = vmatprep.subr.mxu0 0.0
    %1850 = vmatpush1.msra.mxu0 %v925
    %1851 = vmatprep.subr.mxu0 0.0
    %1852 = vmatpush1.msra.mxu0 %v926
    %1853 = vmatprep.subr.mxu0 0.0
    %1854 = vmatpush1.msra.mxu0 %v927
    %1855 = vmatprep.subr.mxu0 0.0
    %1856 = vmatpush1.msra.mxu0 %v928
    %1857 = vmatprep.subr.mxu0 0.0
    %1858 = vmatpush1.msra.mxu0 0.0
    %1859 = vmatprep.subr.mxu0 0.0
    %1860 = vmatpush1.msra.mxu0 0.0
    %1861 = vmatprep.subr.mxu0 0.0
    %1862 = vmatpush1.msra.mxu0 0.0
    %1863 = vmatprep.subr.mxu0 0.0
    %1864 = vmatpush1.msra.mxu0 0.0
    %1865 = vmatprep.subr.mxu0 0.0
    %1866 = vmatpush1.msra.mxu0 0.0
    %1867 = vmatprep.subr.mxu0 0.0
    %1868 = vmatpush1.msra.mxu0 0.0
    %1869 = vmatprep.subr.mxu0 0.0
    %1870 = vmatpush1.msra.mxu0 0.0
    %1871 = vmatprep.subr.mxu0 0.0
    %1872 = vmatpush1.msra.mxu0 0.0
    %1873 = vmatprep.subr.mxu0 0.0
    %1874 = vmatpush1.msra.mxu0 0.0
    %1875 = vmatprep.subr.mxu0 0.0
    %1876 = vmatpush1.msra.mxu0 0.0
    %1877 = vmatprep.subr.mxu0 0.0
    %1878 = vmatpush1.msra.mxu0 0.0
    %1879 = vmatprep.subr.mxu0 0.0
    %1880 = vmatpush1.msra.mxu0 0.0
    %1881 = vmatprep.subr.mxu0 0.0
    %1882 = vmatpush1.msra.mxu0 0.0
    %1883 = vmatprep.subr.mxu0 0.0
    %1884 = vmatpush1.msra.mxu0 0.0
    %1885 = vmatprep.subr.mxu0 0.0
    %1886 = vmatpush1.msra.mxu0 0.0
    %1887 = vmatprep.subr.mxu0 0.0
    %1888 = vmatpush1.msra.mxu0 0.0
    %1889 = vmatprep.subr.mxu0 0.0
    %1890 = vmatpush1.msra.mxu0 0.0
    %1891 = vmatprep.subr.mxu0 0.0
    %1892 = vmatpush1.msra.mxu0 0.0
    %1893 = vmatprep.subr.mxu0 0.0
    %1894 = vmatpush1.msra.mxu0 0.0
    %1895 = vmatprep.subr.mxu0 0.0
    %1896 = vmatpush1.msra.mxu0 0.0
    %1897 = vmatprep.subr.mxu0 0.0
    %1898 = vmatpush1.msra.mxu0 0.0
    %1899 = vmatprep.subr.mxu0 0.0
    %1900 = vmatpush1.msra.mxu0 0.0
    %1901 = vmatprep.subr.mxu0 0.0
    %1902 = vmatpush1.msra.mxu0 0.0
    %1903 = vmatprep.subr.mxu0 0.0
    %1904 = vmatpush1.msra.mxu0 0.0
    %1905 = vmatprep.mubr.f32.mxu0 0.0
    %1906 = vmatmul.mubr.f32.gmra.mrb[0].mxu0 %v1839
    %v1907 = vpop.f32.mrb[0].mxu0
    %v1908 = vadd.f32 %v100, %v1907
    %v1909 = vpop.f32.mrb[0].mxu0
    %1910 = vdwg.mxu0
    %v1911 = vmul.f32 %v1908, %v87
    %v1912 = vtanh.pop %v1911
    %v1913 = vmul.f32 %v1912, 0.5
    %v1914 = vadd.f32 %v1913, 0.5
    %v1915 = vsel %vm86, %v1912, %v1914
    %v1916 = vmul.f32 %v1915, %v1728
    %1918 = vrot.lane.b32.xlu0 %v1915, 64
    %v1919 = vpop.permute.xlu0 %1918
    %v1921 = vmul.f32 %v1915, %v1919
    %1923 = vrot.lane.b32.xlu0 %v1921, 32
    %v1924 = vpop.permute.xlu0 %1923
    %v1926 = vadd.f32 %v1916, %v1924
    %v1927 = vtanh.pop %v1926
    %1929 = vrot.lane.b32.xlu0 %v1927, 64
    %v1930 = vpop.permute.xlu0 %1929
    %v1932 = vmul.f32 %v1915, %v1930
    %v1933 = vld [vmem:[#allocation8] sm:$0xff]
    %v1934 = vld [vmem:[#allocation8 + $0x8] sm:$0xff]
    %v1935 = vld [vmem:[#allocation8 + $0x10] sm:$0xff]
    %v1936 = vld [vmem:[#allocation8 + $0x18] sm:$0xff]
    %1938 = vrot.lane.b32.xlu0 %v1932, 32
    %v1939 = vpop.permute.xlu0 %1938
    %v1940 = vsel %vm144, %v1939, 0
    %1942 = vmatprep.subr.mxu0 0.0
    %1943 = vmatpush1.msra.mxu0 %v1933
    %1944 = vmatprep.subr.mxu0 0.0
    %1945 = vmatpush1.msra.mxu0 %v1934
    %1946 = vmatprep.subr.mxu0 0.0
    %1947 = vmatpush1.msra.mxu0 %v1935
    %1948 = vmatprep.subr.mxu0 0.0
    %1949 = vmatpush1.msra.mxu0 %v1936
    %1950 = vmatprep.subr.mxu0 0.0
    %1951 = vmatpush1.msra.mxu0 0.0
    %1952 = vmatprep.subr.mxu0 0.0
    %1953 = vmatpush1.msra.mxu0 0.0
    %1954 = vmatprep.subr.mxu0 0.0
    %1955 = vmatpush1.msra.mxu0 0.0
    %1956 = vmatprep.subr.mxu0 0.0
    %1957 = vmatpush1.msra.mxu0 0.0
    %1958 = vmatprep.subr.mxu0 0.0
    %1959 = vmatpush1.msra.mxu0 0.0
    %1960 = vmatprep.subr.mxu0 0.0
    %1961 = vmatpush1.msra.mxu0 0.0
    %1962 = vmatprep.subr.mxu0 0.0
    %1963 = vmatpush1.msra.mxu0 0.0
    %1964 = vmatprep.subr.mxu0 0.0
    %1965 = vmatpush1.msra.mxu0 0.0
    %1966 = vmatprep.subr.mxu0 0.0
    %1967 = vmatpush1.msra.mxu0 0.0
    %1968 = vmatprep.subr.mxu0 0.0
    %1969 = vmatpush1.msra.mxu0 0.0
    %1970 = vmatprep.subr.mxu0 0.0
    %1971 = vmatpush1.msra.mxu0 0.0
    %1972 = vmatprep.subr.mxu0 0.0
    %1973 = vmatpush1.msra.mxu0 0.0
    %1974 = vmatprep.subr.mxu0 0.0
    %1975 = vmatpush1.msra.mxu0 0.0
    %1976 = vmatprep.subr.mxu0 0.0
    %1977 = vmatpush1.msra.mxu0 0.0
    %1978 = vmatprep.subr.mxu0 0.0
    %1979 = vmatpush1.msra.mxu0 0.0
    %1980 = vmatprep.subr.mxu0 0.0
    %1981 = vmatpush1.msra.mxu0 0.0
    %1982 = vmatprep.subr.mxu0 0.0
    %1983 = vmatpush1.msra.mxu0 0.0
    %1984 = vmatprep.subr.mxu0 0.0
    %1985 = vmatpush1.msra.mxu0 0.0
    %1986 = vmatprep.subr.mxu0 0.0
    %1987 = vmatpush1.msra.mxu0 0.0
    %1988 = vmatprep.subr.mxu0 0.0
    %1989 = vmatpush1.msra.mxu0 0.0
    %1990 = vmatprep.subr.mxu0 0.0
    %1991 = vmatpush1.msra.mxu0 0.0
    %1992 = vmatprep.subr.mxu0 0.0
    %1993 = vmatpush1.msra.mxu0 0.0
    %1994 = vmatprep.subr.mxu0 0.0
    %1995 = vmatpush1.msra.mxu0 0.0
    %1996 = vmatprep.subr.mxu0 0.0
    %1997 = vmatpush1.msra.mxu0 0.0
    %1998 = vmatprep.subr.mxu0 0.0
    %1999 = vmatpush1.msra.mxu0 0.0
    %2000 = vmatprep.subr.mxu0 0.0
    %2001 = vmatpush1.msra.mxu0 0.0
    %2002 = vmatprep.subr.mxu0 0.0
    %2003 = vmatpush1.msra.mxu0 0.0
    %2004 = vmatprep.subr.mxu0 0.0
    %2005 = vmatpush1.msra.mxu0 0.0
    %2006 = vmatprep.mubr.f32.mxu0 0.0
    %2007 = vmatmul.mubr.f32.gmra.mrb[0].mxu0 %v1940
    %v2008 = vpop.f32.mrb[0].mxu0
    %v2009 = vadd.f32 %v107, %v2008
    %v2010 = vpop.f32.mrb[0].mxu0
    %2011 = vdwg.mxu0
    %2012 = vst [vmem:[#allocation10] sm:$0xff] %v2009
    %v2013 = vld [vmem:[#allocation5] sm:$0xff]
    %v2014 = vld [vmem:[#allocation5 + $0x8] sm:$0xff]
    %v2015 = vld [vmem:[#allocation5 + $0x10] sm:$0xff]
    %v2016 = vld [vmem:[#allocation5 + $0x18] sm:$0xff]
    %v2017 = vld [vmem:[#allocation5 + $0x20] sm:$0xff]
    %v2018 = vld [vmem:[#allocation5 + $0x28] sm:$0xff]
    %v2019 = vld [vmem:[#allocation5 + $0x30] sm:$0xff]
    %v2020 = vld [vmem:[#allocation5 + $0x38] sm:$0xff]
    %v2021 = vld [vmem:[#allocation5 + $0x40] sm:$0xff]
    %v2022 = vld [vmem:[#allocation5 + $0x48] sm:$0xff]
    %v2023 = vld [vmem:[#allocation5 + $0x50] sm:$0xff]
    %v2024 = vld [vmem:[#allocation5 + $0x58] sm:$0xff]
    %v2025 = vld [vmem:[#allocation5 + $0x60] sm:$0xff]
    %v2026 = vld [vmem:[#allocation5 + $0x68] sm:$0xff]
    %v2027 = vld [vmem:[#allocation5 + $0x70] sm:$0xff]
    %v2028 = vld [vmem:[#allocation5 + $0x78] sm:$0xff]
    %v2029 = vld [vmem:[#allocation5 + $0x80] sm:$0xff]
    %v2030 = vld [vmem:[#allocation5 + $0x88] sm:$0xff]
    %v2031 = vld [vmem:[#allocation5 + $0x90] sm:$0xff]
    %v2032 = vld [vmem:[#allocation5 + $0x98] sm:$0xff]
    %v2033 = vsel %vm144, %v1831, 0
    %2035 = vmatprep.subr.mxu0 0.0
    %2036 = vmatpush1.msra.mxu0 %v2013
    %2037 = vmatprep.subr.mxu0 0.0
    %2038 = vmatpush1.msra.mxu0 %v2014
    %2039 = vmatprep.subr.mxu0 0.0
    %2040 = vmatpush1.msra.mxu0 %v2015
    %2041 = vmatprep.subr.mxu0 0.0
    %2042 = vmatpush1.msra.mxu0 %v2016
    %2043 = vmatprep.subr.mxu0 0.0
    %2044 = vmatpush1.msra.mxu0 %v2017
    %2045 = vmatprep.subr.mxu0 0.0
    %2046 = vmatpush1.msra.mxu0 %v2018
    %2047 = vmatprep.subr.mxu0 0.0
    %2048 = vmatpush1.msra.mxu0 %v2019
    %2049 = vmatprep.subr.mxu0 0.0
    %2050 = vmatpush1.msra.mxu0 %v2020
    %2051 = vmatprep.subr.mxu0 0.0
    %2052 = vmatpush1.msra.mxu0 %v2021
    %2053 = vmatprep.subr.mxu0 0.0
    %2054 = vmatpush1.msra.mxu0 %v2022
    %2055 = vmatprep.subr.mxu0 0.0
    %2056 = vmatpush1.msra.mxu0 %v2023
    %2057 = vmatprep.subr.mxu0 0.0
    %2058 = vmatpush1.msra.mxu0 %v2024
    %2059 = vmatprep.subr.mxu0 0.0
    %2060 = vmatpush1.msra.mxu0 %v2025
    %2061 = vmatprep.subr.mxu0 0.0
    %2062 = vmatpush1.msra.mxu0 %v2026
    %2063 = vmatprep.subr.mxu0 0.0
    %2064 = vmatpush1.msra.mxu0 %v2027
    %2065 = vmatprep.subr.mxu0 0.0
    %2066 = vmatpush1.msra.mxu0 %v2028
    %2067 = vmatprep.subr.mxu0 0.0
    %2068 = vmatpush1.msra.mxu0 %v2029
    %2069 = vmatprep.subr.mxu0 0.0
    %2070 = vmatpush1.msra.mxu0 %v2030
    %2071 = vmatprep.subr.mxu0 0.0
    %2072 = vmatpush1.msra.mxu0 %v2031
    %2073 = vmatprep.subr.mxu0 0.0
    %2074 = vmatpush1.msra.mxu0 %v2032
    %2075 = vmatprep.subr.mxu0 0.0
    %2076 = vmatpush1.msra.mxu0 0.0
    %2077 = vmatprep.subr.mxu0 0.0
    %2078 = vmatpush1.msra.mxu0 0.0
    %2079 = vmatprep.subr.mxu0 0.0
    %2080 = vmatpush1.msra.mxu0 0.0
    %2081 = vmatprep.subr.mxu0 0.0
    %2082 = vmatpush1.msra.mxu0 0.0
    %2083 = vmatprep.subr.mxu0 0.0
    %2084 = vmatpush1.msra.mxu0 0.0
    %2085 = vmatprep.subr.mxu0 0.0
    %2086 = vmatpush1.msra.mxu0 0.0
    %2087 = vmatprep.subr.mxu0 0.0
    %2088 = vmatpush1.msra.mxu0 0.0
    %2089 = vmatprep.subr.mxu0 0.0
    %2090 = vmatpush1.msra.mxu0 0.0
    %2091 = vmatprep.subr.mxu0 0.0
    %2092 = vmatpush1.msra.mxu0 0.0
    %2093 = vmatprep.subr.mxu0 0.0
    %2094 = vmatpush1.msra.mxu0 0.0
    %2095 = vmatprep.subr.mxu0 0.0
    %2096 = vmatpush1.msra.mxu0 0.0
    %2097 = vmatprep.subr.mxu0 0.0
    %2098 = vmatpush1.msra.mxu0 0.0
    %2099 = vmatprep.mubr.f32.mxu0 %v2033
    %2100 = vmatmul.mubr.f32.gmra.mrb[0].mxu0 %v2009
    %v2101 = vpop.f32.mrb[0].mxu0
    %v2102 = vadd.f32 %v93, %v2101
    %v2103 = vpop.f32.mrb[0].mxu0
    %2104 = vdwg.mxu0
    %v2105 = vmul.f32 %v2102, %v87
    %v2106 = vtanh.pop %v2105
    %v2107 = vmul.f32 %v2106, 0.5
    %v2108 = vadd.f32 %v2107, 0.5
    %v2109 = vsel %vm86, %v2106, %v2108
    %v2110 = vmul.f32 %v2109, %v1822
    %2112 = vrot.lane.b32.xlu0 %v2109, 64
    %v2113 = vpop.permute.xlu0 %2112
    %v2115 = vmul.f32 %v2109, %v2113
    %2117 = vrot.lane.b32.xlu0 %v2115, 32
    %v2118 = vpop.permute.xlu0 %2117
    %v2120 = vadd.f32 %v2110, %v2118
    %v2121 = vtanh.pop %v2120
    %2123 = vrot.lane.b32.xlu0 %v2121, 64
    %v2124 = vpop.permute.xlu0 %2123
    %v2126 = vmul.f32 %v2109, %v2124
    %2128 = vrot.lane.b32.xlu0 %v2126, 32
    %v2129 = vpop.permute.xlu0 %2128
    %2131 = vrot.lane.b32.xlu0 %v1932, 64
    %v2132 = vpop.permute.xlu0 %2131
    %v2134 = vsel %vm144, %v2129, %v2132
    %v2135 = vld [vmem:[#allocation7] sm:$0xff]
    %v2136 = vld [vmem:[#allocation7 + $0x8] sm:$0xff]
    %v2137 = vld [vmem:[#allocation7 + $0x10] sm:$0xff]
    %v2138 = vld [vmem:[#allocation7 + $0x18] sm:$0xff]
    %v2139 = vld [vmem:[#allocation7 + $0x20] sm:$0xff]
    %v2140 = vld [vmem:[#allocation7 + $0x28] sm:$0xff]
    %v2141 = vld [vmem:[#allocation7 + $0x30] sm:$0xff]
    %v2142 = vld [vmem:[#allocation7 + $0x38] sm:$0xff]
    %v2144 = vsel %vm929, %v2134, 0
    %2146 = vmatprep.subr.mxu0 0.0
    %2147 = vmatpush1.msra.mxu0 %v2135
    %2148 = vmatprep.subr.mxu0 0.0
    %2149 = vmatpush1.msra.mxu0 %v2136
    %2150 = vmatprep.subr.mxu0 0.0
    %2151 = vmatpush1.msra.mxu0 %v2137
    %2152 = vmatprep.subr.mxu0 0.0
    %2153 = vmatpush1.msra.mxu0 %v2138
    %2154 = vmatprep.subr.mxu0 0.0
    %2155 = vmatpush1.msra.mxu0 %v2139
    %2156 = vmatprep.subr.mxu0 0.0
    %2157 = vmatpush1.msra.mxu0 %v2140
    %2158 = vmatprep.subr.mxu0 0.0
    %2159 = vmatpush1.msra.mxu0 %v2141
    %2160 = vmatprep.subr.mxu0 0.0
    %2161 = vmatpush1.msra.mxu0 %v2142
    %2162 = vmatprep.subr.mxu0 0.0
    %2163 = vmatpush1.msra.mxu0 0.0
    %2164 = vmatprep.subr.mxu0 0.0
    %2165 = vmatpush1.msra.mxu0 0.0
    %2166 = vmatprep.subr.mxu0 0.0
    %2167 = vmatpush1.msra.mxu0 0.0
    %2168 = vmatprep.subr.mxu0 0.0
    %2169 = vmatpush1.msra.mxu0 0.0
    %2170 = vmatprep.subr.mxu0 0.0
    %2171 = vmatpush1.msra.mxu0 0.0
    %2172 = vmatprep.subr.mxu0 0.0
    %2173 = vmatpush1.msra.mxu0 0.0
    %2174 = vmatprep.subr.mxu0 0.0
    %2175 = vmatpush1.msra.mxu0 0.0
    %2176 = vmatprep.subr.mxu0 0.0
    %2177 = vmatpush1.msra.mxu0 0.0
    %2178 = vmatprep.subr.mxu0 0.0
    %2179 = vmatpush1.msra.mxu0 0.0
    %2180 = vmatprep.subr.mxu0 0.0
    %2181 = vmatpush1.msra.mxu0 0.0
    %2182 = vmatprep.subr.mxu0 0.0
    %2183 = vmatpush1.msra.mxu0 0.0
    %2184 = vmatprep.subr.mxu0 0.0
    %2185 = vmatpush1.msra.mxu0 0.0
    %2186 = vmatprep.subr.mxu0 0.0
    %2187 = vmatpush1.msra.mxu0 0.0
    %2188 = vmatprep.subr.mxu0 0.0
    %2189 = vmatpush1.msra.mxu0 0.0
    %2190 = vmatprep.subr.mxu0 0.0
    %2191 = vmatpush1.msra.mxu0 0.0
    %2192 = vmatprep.subr.mxu0 0.0
    %2193 = vmatpush1.msra.mxu0 0.0
    %2194 = vmatprep.subr.mxu0 0.0
    %2195 = vmatpush1.msra.mxu0 0.0
    %2196 = vmatprep.subr.mxu0 0.0
    %2197 = vmatpush1.msra.mxu0 0.0
    %2198 = vmatprep.subr.mxu0 0.0
    %2199 = vmatpush1.msra.mxu0 0.0
    %2200 = vmatprep.subr.mxu0 0.0
    %2201 = vmatpush1.msra.mxu0 0.0
    %2202 = vmatprep.subr.mxu0 0.0
    %2203 = vmatpush1.msra.mxu0 0.0
    %2204 = vmatprep.subr.mxu0 0.0
    %2205 = vmatpush1.msra.mxu0 0.0
    %2206 = vmatprep.subr.mxu0 0.0
    %2207 = vmatpush1.msra.mxu0 0.0
    %2208 = vmatprep.subr.mxu0 0.0
    %2209 = vmatpush1.msra.mxu0 0.0
    %2210 = vmatprep.mubr.f32.mxu0 0.0
    %2211 = vmatmul.mubr.f32.gmra.mrb[0].mxu0 %v2144
    %v2212 = vpop.f32.mrb[0].mxu0
    %v2213 = vadd.f32 %v100, %v2212
    %v2214 = vpop.f32.mrb[0].mxu0
    %2215 = vdwg.mxu0
    %v2216 = vmul.f32 %v2213, %v87
    %v2217 = vtanh.pop %v2216
    %v2218 = vmul.f32 %v2217, 0.5
    %v2219 = vadd.f32 %v2218, 0.5
    %v2220 = vsel %vm86, %v2217, %v2219
    %v2221 = vmul.f32 %v2220, %v1926
    %2223 = vrot.lane.b32.xlu0 %v2220, 64
    %v2224 = vpop.permute.xlu0 %2223
    %v2226 = vmul.f32 %v2220, %v2224
    %2228 = vrot.lane.b32.xlu0 %v2226, 32
    %v2229 = vpop.permute.xlu0 %2228
    %v2231 = vadd.f32 %v2221, %v2229
    %v2232 = vtanh.pop %v2231
    %2234 = vrot.lane.b32.xlu0 %v2232, 64
    %v2235 = vpop.permute.xlu0 %2234
    %v2237 = vmul.f32 %v2220, %v2235
    %v2238 = vld [vmem:[#allocation8] sm:$0xff]
    %v2239 = vld [vmem:[#allocation8 + $0x8] sm:$0xff]
    %v2240 = vld [vmem:[#allocation8 + $0x10] sm:$0xff]
    %v2241 = vld [vmem:[#allocation8 + $0x18] sm:$0xff]
    %2243 = vrot.lane.b32.xlu0 %v2237, 32
    %v2244 = vpop.permute.xlu0 %2243
    %v2245 = vsel %vm144, %v2244, 0
    %2247 = vmatprep.subr.mxu0 0.0
    %2248 = vmatpush1.msra.mxu0 %v2238
    %2249 = vmatprep.subr.mxu0 0.0
    %2250 = vmatpush1.msra.mxu0 %v2239
    %2251 = vmatprep.subr.mxu0 0.0
    %2252 = vmatpush1.msra.mxu0 %v2240
    %2253 = vmatprep.subr.mxu0 0.0
    %2254 = vmatpush1.msra.mxu0 %v2241
    %2255 = vmatprep.subr.mxu0 0.0
    %2256 = vmatpush1.msra.mxu0 0.0
    %2257 = vmatprep.subr.mxu0 0.0
    %2258 = vmatpush1.msra.mxu0 0.0
    %2259 = vmatprep.subr.mxu0 0.0
    %2260 = vmatpush1.msra.mxu0 0.0
    %2261 = vmatprep.subr.mxu0 0.0
    %2262 = vmatpush1.msra.mxu0 0.0
    %2263 = vmatprep.subr.mxu0 0.0
    %2264 = vmatpush1.msra.mxu0 0.0
    %2265 = vmatprep.subr.mxu0 0.0
    %2266 = vmatpush1.msra.mxu0 0.0
    %2267 = vmatprep.subr.mxu0 0.0
    %2268 = vmatpush1.msra.mxu0 0.0
    %2269 = vmatprep.subr.mxu0 0.0
    %2270 = vmatpush1.msra.mxu0 0.0
    %2271 = vmatprep.subr.mxu0 0.0
    %2272 = vmatpush1.msra.mxu0 0.0
    %2273 = vmatprep.subr.mxu0 0.0
    %2274 = vmatpush1.msra.mxu0 0.0
    %2275 = vmatprep.subr.mxu0 0.0
    %2276 = vmatpush1.msra.mxu0 0.0
    %2277 = vmatprep.subr.mxu0 0.0
    %2278 = vmatpush1.msra.mxu0 0.0
    %2279 = vmatprep.subr.mxu0 0.0
    %2280 = vmatpush1.msra.mxu0 0.0
    %2281 = vmatprep.subr.mxu0 0.0
    %2282 = vmatpush1.msra.mxu0 0.0
    %2283 = vmatprep.subr.mxu0 0.0
    %2284 = vmatpush1.msra.mxu0 0.0
    %2285 = vmatprep.subr.mxu0 0.0
    %2286 = vmatpush1.msra.mxu0 0.0
    %2287 = vmatprep.subr.mxu0 0.0
    %2288 = vmatpush1.msra.mxu0 0.0
    %2289 = vmatprep.subr.mxu0 0.0
    %2290 = vmatpush1.msra.mxu0 0.0
    %2291 = vmatprep.subr.mxu0 0.0
    %2292 = vmatpush1.msra.mxu0 0.0
    %2293 = vmatprep.subr.mxu0 0.0
    %2294 = vmatpush1.msra.mxu0 0.0
    %2295 = vmatprep.subr.mxu0 0.0
    %2296 = vmatpush1.msra.mxu0 0.0
    %2297 = vmatprep.subr.mxu0 0.0
    %2298 = vmatpush1.msra.mxu0 0.0
    %2299 = vmatprep.subr.mxu0 0.0
    %2300 = vmatpush1.msra.mxu0 0.0
    %2301 = vmatprep.subr.mxu0 0.0
    %2302 = vmatpush1.msra.mxu0 0.0
    %2303 = vmatprep.subr.mxu0 0.0
    %2304 = vmatpush1.msra.mxu0 0.0
    %2305 = vmatprep.subr.mxu0 0.0
    %2306 = vmatpush1.msra.mxu0 0.0
    %2307 = vmatprep.subr.mxu0 0.0
    %2308 = vmatpush1.msra.mxu0 0.0
    %2309 = vmatprep.subr.mxu0 0.0
    %2310 = vmatpush1.msra.mxu0 0.0
    %2311 = vmatprep.mubr.f32.mxu0 0.0
    %2312 = vmatmul.mubr.f32.gmra.mrb[0].mxu0 %v2245
    %v2313 = vpop.f32.mrb[0].mxu0
    %v2314 = vadd.f32 %v107, %v2313
    %v2315 = vpop.f32.mrb[0].mxu0
    %2316 = vdwg.mxu0
    %s2317 = scalar_lea.vmem [#allocation10], 8
    %2318 = vst [vmem:[%s2317] sm:$0xff] %v2314
    %v2319 = vld [vmem:[#allocation5] sm:$0xff]
    %v2320 = vld [vmem:[#allocation5 + $0x8] sm:$0xff]
    %v2321 = vld [vmem:[#allocation5 + $0x10] sm:$0xff]
    %v2322 = vld [vmem:[#allocation5 + $0x18] sm:$0xff]
    %v2323 = vld [vmem:[#allocation5 + $0x20] sm:$0xff]
    %v2324 = vld [vmem:[#allocation5 + $0x28] sm:$0xff]
    %v2325 = vld [vmem:[#allocation5 + $0x30] sm:$0xff]
    %v2326 = vld [vmem:[#allocation5 + $0x38] sm:$0xff]
    %v2327 = vld [vmem:[#allocation5 + $0x40] sm:$0xff]
    %v2328 = vld [vmem:[#allocation5 + $0x48] sm:$0xff]
    %v2329 = vld [vmem:[#allocation5 + $0x50] sm:$0xff]
    %v2330 = vld [vmem:[#allocation5 + $0x58] sm:$0xff]
    %v2331 = vld [vmem:[#allocation5 + $0x60] sm:$0xff]
    %v2332 = vld [vmem:[#allocation5 + $0x68] sm:$0xff]
    %v2333 = vld [vmem:[#allocation5 + $0x70] sm:$0xff]
    %v2334 = vld [vmem:[#allocation5 + $0x78] sm:$0xff]
    %v2335 = vld [vmem:[#allocation5 + $0x80] sm:$0xff]
    %v2336 = vld [vmem:[#allocation5 + $0x88] sm:$0xff]
    %v2337 = vld [vmem:[#allocation5 + $0x90] sm:$0xff]
    %v2338 = vld [vmem:[#allocation5 + $0x98] sm:$0xff]
    %v2339 = vsel %vm144, %v2129, 0
    %2341 = vmatprep.subr.mxu0 0.0
    %2342 = vmatpush1.msra.mxu0 %v2319
    %2343 = vmatprep.subr.mxu0 0.0
    %2344 = vmatpush1.msra.mxu0 %v2320
    %2345 = vmatprep.subr.mxu0 0.0
    %2346 = vmatpush1.msra.mxu0 %v2321
    %2347 = vmatprep.subr.mxu0 0.0
    %2348 = vmatpush1.msra.mxu0 %v2322
    %2349 = vmatprep.subr.mxu0 0.0
    %2350 = vmatpush1.msra.mxu0 %v2323
    %2351 = vmatprep.subr.mxu0 0.0
    %2352 = vmatpush1.msra.mxu0 %v2324
    %2353 = vmatprep.subr.mxu0 0.0
    %2354 = vmatpush1.msra.mxu0 %v2325
    %2355 = vmatprep.subr.mxu0 0.0
    %2356 = vmatpush1.msra.mxu0 %v2326
    %2357 = vmatprep.subr.mxu0 0.0
    %2358 = vmatpush1.msra.mxu0 %v2327
    %2359 = vmatprep.subr.mxu0 0.0
    %2360 = vmatpush1.msra.mxu0 %v2328
    %2361 = vmatprep.subr.mxu0 0.0
    %2362 = vmatpush1.msra.mxu0 %v2329
    %2363 = vmatprep.subr.mxu0 0.0
    %2364 = vmatpush1.msra.mxu0 %v2330
    %2365 = vmatprep.subr.mxu0 0.0
    %2366 = vmatpush1.msra.mxu0 %v2331
    %2367 = vmatprep.subr.mxu0 0.0
    %2368 = vmatpush1.msra.mxu0 %v2332
    %2369 = vmatprep.subr.mxu0 0.0
    %2370 = vmatpush1.msra.mxu0 %v2333
    %2371 = vmatprep.subr.mxu0 0.0
    %2372 = vmatpush1.msra.mxu0 %v2334
    %2373 = vmatprep.subr.mxu0 0.0
    %2374 = vmatpush1.msra.mxu0 %v2335
    %2375 = vmatprep.subr.mxu0 0.0
    %2376 = vmatpush1.msra.mxu0 %v2336
    %2377 = vmatprep.subr.mxu0 0.0
    %2378 = vmatpush1.msra.mxu0 %v2337
    %2379 = vmatprep.subr.mxu0 0.0
    %2380 = vmatpush1.msra.mxu0 %v2338
    %2381 = vmatprep.subr.mxu0 0.0
    %2382 = vmatpush1.msra.mxu0 0.0
    %2383 = vmatprep.subr.mxu0 0.0
    %2384 = vmatpush1.msra.mxu0 0.0
    %2385 = vmatprep.subr.mxu0 0.0
    %2386 = vmatpush1.msra.mxu0 0.0
    %2387 = vmatprep.subr.mxu0 0.0
    %2388 = vmatpush1.msra.mxu0 0.0
    %2389 = vmatprep.subr.mxu0 0.0
    %2390 = vmatpush1.msra.mxu0 0.0
    %2391 = vmatprep.subr.mxu0 0.0
    %2392 = vmatpush1.msra.mxu0 0.0
    %2393 = vmatprep.subr.mxu0 0.0
    %2394 = vmatpush1.msra.mxu0 0.0
    %2395 = vmatprep.subr.mxu0 0.0
    %2396 = vmatpush1.msra.mxu0 0.0
    %2397 = vmatprep.subr.mxu0 0.0
    %2398 = vmatpush1.msra.mxu0 0.0
    %2399 = vmatprep.subr.mxu0 0.0
    %2400 = vmatpush1.msra.mxu0 0.0
    %2401 = vmatprep.subr.mxu0 0.0
    %2402 = vmatpush1.msra.mxu0 0.0
    %2403 = vmatprep.subr.mxu0 0.0
    %2404 = vmatpush1.msra.mxu0 0.0
    %2405 = vmatprep.mubr.f32.mxu0 %v2339
    %2406 = vmatmul.mubr.f32.gmra.mrb[0].mxu0 %v2314
    %v2407 = vpop.f32.mrb[0].mxu0
    %v2408 = vadd.f32 %v93, %v2407
    %v2409 = vpop.f32.mrb[0].mxu0
    %2410 = vdwg.mxu0
    %v2411 = vmul.f32 %v2408, %v87
    %v2412 = vtanh.pop %v2411
    %v2413 = vmul.f32 %v2412, 0.5
    %v2414 = vadd.f32 %v2413, 0.5
    %v2415 = vsel %vm86, %v2412, %v2414
    %v2416 = vmul.f32 %v2415, %v2120
    %2418 = vrot.lane.b32.xlu0 %v2415, 64
    %v2419 = vpop.permute.xlu0 %2418
    %v2421 = vmul.f32 %v2415, %v2419
    %2423 = vrot.lane.b32.xlu0 %v2421, 32
    %v2424 = vpop.permute.xlu0 %2423
    %v2426 = vadd.f32 %v2416, %v2424
    %v2427 = vtanh.pop %v2426
    %2429 = vrot.lane.b32.xlu0 %v2427, 64
    %v2430 = vpop.permute.xlu0 %2429
    %v2432 = vmul.f32 %v2415, %v2430
    %2434 = vrot.lane.b32.xlu0 %v2432, 32
    %v2435 = vpop.permute.xlu0 %2434
    %2437 = vrot.lane.b32.xlu0 %v2237, 64
    %v2438 = vpop.permute.xlu0 %2437
    %v2440 = vsel %vm144, %v2435, %v2438
    %v2441 = vld [vmem:[#allocation7] sm:$0xff]
    %v2442 = vld [vmem:[#allocation7 + $0x8] sm:$0xff]
    %v2443 = vld [vmem:[#allocation7 + $0x10] sm:$0xff]
    %v2444 = vld [vmem:[#allocation7 + $0x18] sm:$0xff]
    %v2445 = vld [vmem:[#allocation7 + $0x20] sm:$0xff]
    %v2446 = vld [vmem:[#allocation7 + $0x28] sm:$0xff]
    %v2447 = vld [vmem:[#allocation7 + $0x30] sm:$0xff]
    %v2448 = vld [vmem:[#allocation7 + $0x38] sm:$0xff]
    %v2450 = vsel %vm929, %v2440, 0
    %2452 = vmatprep.subr.mxu0 0.0
    %2453 = vmatpush1.msra.mxu0 %v2441
    %2454 = vmatprep.subr.mxu0 0.0
    %2455 = vmatpush1.msra.mxu0 %v2442
    %2456 = vmatprep.subr.mxu0 0.0
    %2457 = vmatpush1.msra.mxu0 %v2443
    %2458 = vmatprep.subr.mxu0 0.0
    %2459 = vmatpush1.msra.mxu0 %v2444
    %2460 = vmatprep.subr.mxu0 0.0
    %2461 = vmatpush1.msra.mxu0 %v2445
    %2462 = vmatprep.subr.mxu0 0.0
    %2463 = vmatpush1.msra.mxu0 %v2446
    %2464 = vmatprep.subr.mxu0 0.0
    %2465 = vmatpush1.msra.mxu0 %v2447
    %2466 = vmatprep.subr.mxu0 0.0
    %2467 = vmatpush1.msra.mxu0 %v2448
    %2468 = vmatprep.subr.mxu0 0.0
    %2469 = vmatpush1.msra.mxu0 0.0
    %2470 = vmatprep.subr.mxu0 0.0
    %2471 = vmatpush1.msra.mxu0 0.0
    %2472 = vmatprep.subr.mxu0 0.0
    %2473 = vmatpush1.msra.mxu0 0.0
    %2474 = vmatprep.subr.mxu0 0.0
    %2475 = vmatpush1.msra.mxu0 0.0
    %2476 = vmatprep.subr.mxu0 0.0
    %2477 = vmatpush1.msra.mxu0 0.0
    %2478 = vmatprep.subr.mxu0 0.0
    %2479 = vmatpush1.msra.mxu0 0.0
    %2480 = vmatprep.subr.mxu0 0.0
    %2481 = vmatpush1.msra.mxu0 0.0
    %2482 = vmatprep.subr.mxu0 0.0
    %2483 = vmatpush1.msra.mxu0 0.0
    %2484 = vmatprep.subr.mxu0 0.0
    %2485 = vmatpush1.msra.mxu0 0.0
    %2486 = vmatprep.subr.mxu0 0.0
    %2487 = vmatpush1.msra.mxu0 0.0
    %2488 = vmatprep.subr.mxu0 0.0
    %2489 = vmatpush1.msra.mxu0 0.0
    %2490 = vmatprep.subr.mxu0 0.0
    %2491 = vmatpush1.msra.mxu0 0.0
    %2492 = vmatprep.subr.mxu0 0.0
    %2493 = vmatpush1.msra.mxu0 0.0
    %2494 = vmatprep.subr.mxu0 0.0
    %2495 = vmatpush1.msra.mxu0 0.0
    %2496 = vmatprep.subr.mxu0 0.0
    %2497 = vmatpush1.msra.mxu0 0.0
    %2498 = vmatprep.subr.mxu0 0.0
    %2499 = vmatpush1.msra.mxu0 0.0
    %2500 = vmatprep.subr.mxu0 0.0
    %2501 = vmatpush1.msra.mxu0 0.0
    %2502 = vmatprep.subr.mxu0 0.0
    %2503 = vmatpush1.msra.mxu0 0.0
    %2504 = vmatprep.subr.mxu0 0.0
    %2505 = vmatpush1.msra.mxu0 0.0
    %2506 = vmatprep.subr.mxu0 0.0
    %2507 = vmatpush1.msra.mxu0 0.0
    %2508 = vmatprep.subr.mxu0 0.0
    %2509 = vmatpush1.msra.mxu0 0.0
    %2510 = vmatprep.subr.mxu0 0.0
    %2511 = vmatpush1.msra.mxu0 0.0
    %2512 = vmatprep.subr.mxu0 0.0
    %2513 = vmatpush1.msra.mxu0 0.0
    %2514 = vmatprep.subr.mxu0 0.0
    %2515 = vmatpush1.msra.mxu0 0.0
    %2516 = vmatprep.mubr.f32.mxu0 0.0
    %2517 = vmatmul.mubr.f32.gmra.mrb[0].mxu0 %v2450
    %v2518 = vpop.f32.mrb[0].mxu0
    %v2519 = vadd.f32 %v100, %v2518
    %v2520 = vpop.f32.mrb[0].mxu0
    %2521 = vdwg.mxu0
    %v2522 = vmul.f32 %v2519, %v87
    %v2523 = vtanh.pop %v2522
    %v2524 = vmul.f32 %v2523, 0.5
    %v2525 = vadd.f32 %v2524, 0.5
    %v2526 = vsel %vm86, %v2523, %v2525
    %v2527 = vmul.f32 %v2526, %v2231
    %2529 = vrot.lane.b32.xlu0 %v2526, 64
    %v2530 = vpop.permute.xlu0 %2529
    %v2532 = vmul.f32 %v2526, %v2530
    %2534 = vrot.lane.b32.xlu0 %v2532, 32
    %v2535 = vpop.permute.xlu0 %2534
    %v2537 = vadd.f32 %v2527, %v2535
    %v2538 = vtanh.pop %v2537
    %2540 = vrot.lane.b32.xlu0 %v2538, 64
    %v2541 = vpop.permute.xlu0 %2540
    %v2543 = vmul.f32 %v2526, %v2541
    %v2544 = vld [vmem:[#allocation8] sm:$0xff]
    %v2545 = vld [vmem:[#allocation8 + $0x8] sm:$0xff]
    %v2546 = vld [vmem:[#allocation8 + $0x10] sm:$0xff]
    %v2547 = vld [vmem:[#allocation8 + $0x18] sm:$0xff]
    %2549 = vrot.lane.b32.xlu0 %v2543, 32
    %v2550 = vpop.permute.xlu0 %2549
    %v2551 = vsel %vm144, %v2550, 0
    %2553 = vmatprep.subr.mxu0 0.0
    %2554 = vmatpush1.msra.mxu0 %v2544
    %2555 = vmatprep.subr.mxu0 0.0
    %2556 = vmatpush1.msra.mxu0 %v2545
    %2557 = vmatprep.subr.mxu0 0.0
    %2558 = vmatpush1.msra.mxu0 %v2546
    %2559 = vmatprep.subr.mxu0 0.0
    %2560 = vmatpush1.msra.mxu0 %v2547
    %2561 = vmatprep.subr.mxu0 0.0
    %2562 = vmatpush1.msra.mxu0 0.0
    %2563 = vmatprep.subr.mxu0 0.0
    %2564 = vmatpush1.msra.mxu0 0.0
    %2565 = vmatprep.subr.mxu0 0.0
    %2566 = vmatpush1.msra.mxu0 0.0
    %2567 = vmatprep.subr.mxu0 0.0
    %2568 = vmatpush1.msra.mxu0 0.0
    %2569 = vmatprep.subr.mxu0 0.0
    %2570 = vmatpush1.msra.mxu0 0.0
    %2571 = vmatprep.subr.mxu0 0.0
    %2572 = vmatpush1.msra.mxu0 0.0
    %2573 = vmatprep.subr.mxu0 0.0
    %2574 = vmatpush1.msra.mxu0 0.0
    %2575 = vmatprep.subr.mxu0 0.0
    %2576 = vmatpush1.msra.mxu0 0.0
    %2577 = vmatprep.subr.mxu0 0.0
    %2578 = vmatpush1.msra.mxu0 0.0
    %2579 = vmatprep.subr.mxu0 0.0
    %2580 = vmatpush1.msra.mxu0 0.0
    %2581 = vmatprep.subr.mxu0 0.0
    %2582 = vmatpush1.msra.mxu0 0.0
    %2583 = vmatprep.subr.mxu0 0.0
    %2584 = vmatpush1.msra.mxu0 0.0
    %2585 = vmatprep.subr.mxu0 0.0
    %2586 = vmatpush1.msra.mxu0 0.0
    %2587 = vmatprep.subr.mxu0 0.0
    %2588 = vmatpush1.msra.mxu0 0.0
    %2589 = vmatprep.subr.mxu0 0.0
    %2590 = vmatpush1.msra.mxu0 0.0
    %2591 = vmatprep.subr.mxu0 0.0
    %2592 = vmatpush1.msra.mxu0 0.0
    %2593 = vmatprep.subr.mxu0 0.0
    %2594 = vmatpush1.msra.mxu0 0.0
    %2595 = vmatprep.subr.mxu0 0.0
    %2596 = vmatpush1.msra.mxu0 0.0
    %2597 = vmatprep.subr.mxu0 0.0
    %2598 = vmatpush1.msra.mxu0 0.0
    %2599 = vmatprep.subr.mxu0 0.0
    %2600 = vmatpush1.msra.mxu0 0.0
    %2601 = vmatprep.subr.mxu0 0.0
    %2602 = vmatpush1.msra.mxu0 0.0
    %2603 = vmatprep.subr.mxu0 0.0
    %2604 = vmatpush1.msra.mxu0 0.0
    %2605 = vmatprep.subr.mxu0 0.0
    %2606 = vmatpush1.msra.mxu0 0.0
    %2607 = vmatprep.subr.mxu0 0.0
    %2608 = vmatpush1.msra.mxu0 0.0
    %2609 = vmatprep.subr.mxu0 0.0
    %2610 = vmatpush1.msra.mxu0 0.0
    %2611 = vmatprep.subr.mxu0 0.0
    %2612 = vmatpush1.msra.mxu0 0.0
    %2613 = vmatprep.subr.mxu0 0.0
    %2614 = vmatpush1.msra.mxu0 0.0
    %2615 = vmatprep.subr.mxu0 0.0
    %2616 = vmatpush1.msra.mxu0 0.0
    %2617 = vmatprep.mubr.f32.mxu0 0.0
    %2618 = vmatmul.mubr.f32.gmra.mrb[0].mxu0 %v2551
    %v2619 = vpop.f32.mrb[0].mxu0
    %v2620 = vadd.f32 %v107, %v2619
    %v2621 = vpop.f32.mrb[0].mxu0
    %2622 = vdwg.mxu0
    %s2623 = scalar_lea.vmem [#allocation10], 16
    %2624 = vst [vmem:[%s2623] sm:$0xff] %v2620
    %v2625 = vld [vmem:[#allocation5] sm:$0xff]
    %v2626 = vld [vmem:[#allocation5 + $0x8] sm:$0xff]
    %v2627 = vld [vmem:[#allocation5 + $0x10] sm:$0xff]
    %v2628 = vld [vmem:[#allocation5 + $0x18] sm:$0xff]
    %v2629 = vld [vmem:[#allocation5 + $0x20] sm:$0xff]
    %v2630 = vld [vmem:[#allocation5 + $0x28] sm:$0xff]
    %v2631 = vld [vmem:[#allocation5 + $0x30] sm:$0xff]
    %v2632 = vld [vmem:[#allocation5 + $0x38] sm:$0xff]
    %v2633 = vld [vmem:[#allocation5 + $0x40] sm:$0xff]
    %v2634 = vld [vmem:[#allocation5 + $0x48] sm:$0xff]
    %v2635 = vld [vmem:[#allocation5 + $0x50] sm:$0xff]
    %v2636 = vld [vmem:[#allocation5 + $0x58] sm:$0xff]
    %v2637 = vld [vmem:[#allocation5 + $0x60] sm:$0xff]
    %v2638 = vld [vmem:[#allocation5 + $0x68] sm:$0xff]
    %v2639 = vld [vmem:[#allocation5 + $0x70] sm:$0xff]
    %v2640 = vld [vmem:[#allocation5 + $0x78] sm:$0xff]
    %v2641 = vld [vmem:[#allocation5 + $0x80] sm:$0xff]
    %v2642 = vld [vmem:[#allocation5 + $0x88] sm:$0xff]
    %v2643 = vld [vmem:[#allocation5 + $0x90] sm:$0xff]
    %v2644 = vld [vmem:[#allocation5 + $0x98] sm:$0xff]
    %v2645 = vsel %vm144, %v2435, 0
    %2647 = vmatprep.subr.mxu0 0.0
    %2648 = vmatpush1.msra.mxu0 %v2625
    %2649 = vmatprep.subr.mxu0 0.0
    %2650 = vmatpush1.msra.mxu0 %v2626
    %2651 = vmatprep.subr.mxu0 0.0
    %2652 = vmatpush1.msra.mxu0 %v2627
    %2653 = vmatprep.subr.mxu0 0.0
    %2654 = vmatpush1.msra.mxu0 %v2628
    %2655 = vmatprep.subr.mxu0 0.0
    %2656 = vmatpush1.msra.mxu0 %v2629
    %2657 = vmatprep.subr.mxu0 0.0
    %2658 = vmatpush1.msra.mxu0 %v2630
    %2659 = vmatprep.subr.mxu0 0.0
    %2660 = vmatpush1.msra.mxu0 %v2631
    %2661 = vmatprep.subr.mxu0 0.0
    %2662 = vmatpush1.msra.mxu0 %v2632
    %2663 = vmatprep.subr.mxu0 0.0
    %2664 = vmatpush1.msra.mxu0 %v2633
    %2665 = vmatprep.subr.mxu0 0.0
    %2666 = vmatpush1.msra.mxu0 %v2634
    %2667 = vmatprep.subr.mxu0 0.0
    %2668 = vmatpush1.msra.mxu0 %v2635
    %2669 = vmatprep.subr.mxu0 0.0
    %2670 = vmatpush1.msra.mxu0 %v2636
    %2671 = vmatprep.subr.mxu0 0.0
    %2672 = vmatpush1.msra.mxu0 %v2637
    %2673 = vmatprep.subr.mxu0 0.0
    %2674 = vmatpush1.msra.mxu0 %v2638
    %2675 = vmatprep.subr.mxu0 0.0
    %2676 = vmatpush1.msra.mxu0 %v2639
    %2677 = vmatprep.subr.mxu0 0.0
    %2678 = vmatpush1.msra.mxu0 %v2640
    %2679 = vmatprep.subr.mxu0 0.0
    %2680 = vmatpush1.msra.mxu0 %v2641
    %2681 = vmatprep.subr.mxu0 0.0
    %2682 = vmatpush1.msra.mxu0 %v2642
    %2683 = vmatprep.subr.mxu0 0.0
    %2684 = vmatpush1.msra.mxu0 %v2643
    %2685 = vmatprep.subr.mxu0 0.0
    %2686 = vmatpush1.msra.mxu0 %v2644
    %2687 = vmatprep.subr.mxu0 0.0
    %2688 = vmatpush1.msra.mxu0 0.0
    %2689 = vmatprep.subr.mxu0 0.0
    %2690 = vmatpush1.msra.mxu0 0.0
    %2691 = vmatprep.subr.mxu0 0.0
    %2692 = vmatpush1.msra.mxu0 0.0
    %2693 = vmatprep.subr.mxu0 0.0
    %2694 = vmatpush1.msra.mxu0 0.0
    %2695 = vmatprep.subr.mxu0 0.0
    %2696 = vmatpush1.msra.mxu0 0.0
    %2697 = vmatprep.subr.mxu0 0.0
    %2698 = vmatpush1.msra.mxu0 0.0
    %2699 = vmatprep.subr.mxu0 0.0
    %2700 = vmatpush1.msra.mxu0 0.0
    %2701 = vmatprep.subr.mxu0 0.0
    %2702 = vmatpush1.msra.mxu0 0.0
    %2703 = vmatprep.subr.mxu0 0.0
    %2704 = vmatpush1.msra.mxu0 0.0
    %2705 = vmatprep.subr.mxu0 0.0
    %2706 = vmatpush1.msra.mxu0 0.0
    %2707 = vmatprep.subr.mxu0 0.0
    %2708 = vmatpush1.msra.mxu0 0.0
    %2709 = vmatprep.subr.mxu0 0.0
    %2710 = vmatpush1.msra.mxu0 0.0
    %2711 = vmatprep.mubr.f32.mxu0 %v2645
    %2712 = vmatmul.mubr.f32.gmra.mrb[0].mxu0 %v2620
    %v2713 = vpop.f32.mrb[0].mxu0
    %v2714 = vadd.f32 %v93, %v2713
    %v2715 = vpop.f32.mrb[0].mxu0
    %2716 = vdwg.mxu0
    %v2717 = vmul.f32 %v2714, %v87
    %v2718 = vtanh.pop %v2717
    %v2719 = vmul.f32 %v2718, 0.5
    %v2720 = vadd.f32 %v2719, 0.5
    %v2721 = vsel %vm86, %v2718, %v2720
    %v2722 = vmul.f32 %v2721, %v2426
    %2724 = vrot.lane.b32.xlu0 %v2721, 64
    %v2725 = vpop.permute.xlu0 %2724
    %v2727 = vmul.f32 %v2721, %v2725
    %2729 = vrot.lane.b32.xlu0 %v2727, 32
    %v2730 = vpop.permute.xlu0 %2729
    %v2732 = vadd.f32 %v2722, %v2730
    %v2733 = vtanh.pop %v2732
    %2735 = vrot.lane.b32.xlu0 %v2733, 64
    %v2736 = vpop.permute.xlu0 %2735
    %v2738 = vmul.f32 %v2721, %v2736
    %2740 = vrot.lane.b32.xlu0 %v2738, 32
    %v2741 = vpop.permute.xlu0 %2740
    %2743 = vrot.lane.b32.xlu0 %v2543, 64
    %v2744 = vpop.permute.xlu0 %2743
    %v2746 = vsel %vm144, %v2741, %v2744
    %v2747 = vld [vmem:[#allocation7] sm:$0xff]
    %v2748 = vld [vmem:[#allocation7 + $0x8] sm:$0xff]
    %v2749 = vld [vmem:[#allocation7 + $0x10] sm:$0xff]
    %v2750 = vld [vmem:[#allocation7 + $0x18] sm:$0xff]
    %v2751 = vld [vmem:[#allocation7 + $0x20] sm:$0xff]
    %v2752 = vld [vmem:[#allocation7 + $0x28] sm:$0xff]
    %v2753 = vld [vmem:[#allocation7 + $0x30] sm:$0xff]
    %v2754 = vld [vmem:[#allocation7 + $0x38] sm:$0xff]
    %v2756 = vsel %vm929, %v2746, 0
    %2758 = vmatprep.subr.mxu0 0.0
    %2759 = vmatpush1.msra.mxu0 %v2747
    %2760 = vmatprep.subr.mxu0 0.0
    %2761 = vmatpush1.msra.mxu0 %v2748
    %2762 = vmatprep.subr.mxu0 0.0
    %2763 = vmatpush1.msra.mxu0 %v2749
    %2764 = vmatprep.subr.mxu0 0.0
    %2765 = vmatpush1.msra.mxu0 %v2750
    %2766 = vmatprep.subr.mxu0 0.0
    %2767 = vmatpush1.msra.mxu0 %v2751
    %2768 = vmatprep.subr.mxu0 0.0
    %2769 = vmatpush1.msra.mxu0 %v2752
    %2770 = vmatprep.subr.mxu0 0.0
    %2771 = vmatpush1.msra.mxu0 %v2753
    %2772 = vmatprep.subr.mxu0 0.0
    %2773 = vmatpush1.msra.mxu0 %v2754
    %2774 = vmatprep.subr.mxu0 0.0
    %2775 = vmatpush1.msra.mxu0 0.0
    %2776 = vmatprep.subr.mxu0 0.0
    %2777 = vmatpush1.msra.mxu0 0.0
    %2778 = vmatprep.subr.mxu0 0.0
    %2779 = vmatpush1.msra.mxu0 0.0
    %2780 = vmatprep.subr.mxu0 0.0
    %2781 = vmatpush1.msra.mxu0 0.0
    %2782 = vmatprep.subr.mxu0 0.0
    %2783 = vmatpush1.msra.mxu0 0.0
    %2784 = vmatprep.subr.mxu0 0.0
    %2785 = vmatpush1.msra.mxu0 0.0
    %2786 = vmatprep.subr.mxu0 0.0
    %2787 = vmatpush1.msra.mxu0 0.0
    %2788 = vmatprep.subr.mxu0 0.0
    %2789 = vmatpush1.msra.mxu0 0.0
    %2790 = vmatprep.subr.mxu0 0.0
    %2791 = vmatpush1.msra.mxu0 0.0
    %2792 = vmatprep.subr.mxu0 0.0
    %2793 = vmatpush1.msra.mxu0 0.0
    %2794 = vmatprep.subr.mxu0 0.0
    %2795 = vmatpush1.msra.mxu0 0.0
    %2796 = vmatprep.subr.mxu0 0.0
    %2797 = vmatpush1.msra.mxu0 0.0
    %2798 = vmatprep.subr.mxu0 0.0
    %2799 = vmatpush1.msra.mxu0 0.0
    %2800 = vmatprep.subr.mxu0 0.0
    %2801 = vmatpush1.msra.mxu0 0.0
    %2802 = vmatprep.subr.mxu0 0.0
    %2803 = vmatpush1.msra.mxu0 0.0
    %2804 = vmatprep.subr.mxu0 0.0
    %2805 = vmatpush1.msra.mxu0 0.0
    %2806 = vmatprep.subr.mxu0 0.0
    %2807 = vmatpush1.msra.mxu0 0.0
    %2808 = vmatprep.subr.mxu0 0.0
    %2809 = vmatpush1.msra.mxu0 0.0
    %2810 = vmatprep.subr.mxu0 0.0
    %2811 = vmatpush1.msra.mxu0 0.0
    %2812 = vmatprep.subr.mxu0 0.0
    %2813 = vmatpush1.msra.mxu0 0.0
    %2814 = vmatprep.subr.mxu0 0.0
    %2815 = vmatpush1.msra.mxu0 0.0
    %2816 = vmatprep.subr.mxu0 0.0
    %2817 = vmatpush1.msra.mxu0 0.0
    %2818 = vmatprep.subr.mxu0 0.0
    %2819 = vmatpush1.msra.mxu0 0.0
    %2820 = vmatprep.subr.mxu0 0.0
    %2821 = vmatpush1.msra.mxu0 0.0
    %2822 = vmatprep.mubr.f32.mxu0 0.0
    %2823 = vmatmul.mubr.f32.gmra.mrb[0].mxu0 %v2756
    %v2824 = vpop.f32.mrb[0].mxu0
    %v2825 = vadd.f32 %v100, %v2824
    %v2826 = vpop.f32.mrb[0].mxu0
    %2827 = vdwg.mxu0
    %v2828 = vmul.f32 %v2825, %v87
    %v2829 = vtanh.pop %v2828
    %v2830 = vmul.f32 %v2829, 0.5
    %v2831 = vadd.f32 %v2830, 0.5
    %v2832 = vsel %vm86, %v2829, %v2831
    %v2833 = vmul.f32 %v2832, %v2537
    %2835 = vrot.lane.b32.xlu0 %v2832, 64
    %v2836 = vpop.permute.xlu0 %2835
    %v2838 = vmul.f32 %v2832, %v2836
    %2840 = vrot.lane.b32.xlu0 %v2838, 32
    %v2841 = vpop.permute.xlu0 %2840
    %v2843 = vadd.f32 %v2833, %v2841
    %v2844 = vtanh.pop %v2843
    %2846 = vrot.lane.b32.xlu0 %v2844, 64
    %v2847 = vpop.permute.xlu0 %2846
    %v2849 = vmul.f32 %v2832, %v2847
    %v2850 = vld [vmem:[#allocation8] sm:$0xff]
    %v2851 = vld [vmem:[#allocation8 + $0x8] sm:$0xff]
    %v2852 = vld [vmem:[#allocation8 + $0x10] sm:$0xff]
    %v2853 = vld [vmem:[#allocation8 + $0x18] sm:$0xff]
    %2855 = vrot.lane.b32.xlu0 %v2849, 32
    %v2856 = vpop.permute.xlu0 %2855
    %v2857 = vsel %vm144, %v2856, 0
    %2859 = vmatprep.subr.mxu0 0.0
    %2860 = vmatpush1.msra.mxu0 %v2850
    %2861 = vmatprep.subr.mxu0 0.0
    %2862 = vmatpush1.msra.mxu0 %v2851
    %2863 = vmatprep.subr.mxu0 0.0
    %2864 = vmatpush1.msra.mxu0 %v2852
    %2865 = vmatprep.subr.mxu0 0.0
    %2866 = vmatpush1.msra.mxu0 %v2853
    %2867 = vmatprep.subr.mxu0 0.0
    %2868 = vmatpush1.msra.mxu0 0.0
    %2869 = vmatprep.subr.mxu0 0.0
    %2870 = vmatpush1.msra.mxu0 0.0
    %2871 = vmatprep.subr.mxu0 0.0
    %2872 = vmatpush1.msra.mxu0 0.0
    %2873 = vmatprep.subr.mxu0 0.0
    %2874 = vmatpush1.msra.mxu0 0.0
    %2875 = vmatprep.subr.mxu0 0.0
    %2876 = vmatpush1.msra.mxu0 0.0
    %2877 = vmatprep.subr.mxu0 0.0
    %2878 = vmatpush1.msra.mxu0 0.0
    %2879 = vmatprep.subr.mxu0 0.0
    %2880 = vmatpush1.msra.mxu0 0.0
    %2881 = vmatprep.subr.mxu0 0.0
    %2882 = vmatpush1.msra.mxu0 0.0
    %2883 = vmatprep.subr.mxu0 0.0
    %2884 = vmatpush1.msra.mxu0 0.0
    %2885 = vmatprep.subr.mxu0 0.0
    %2886 = vmatpush1.msra.mxu0 0.0
    %2887 = vmatprep.subr.mxu0 0.0
    %2888 = vmatpush1.msra.mxu0 0.0
    %2889 = vmatprep.subr.mxu0 0.0
    %2890 = vmatpush1.msra.mxu0 0.0
    %2891 = vmatprep.subr.mxu0 0.0
    %2892 = vmatpush1.msra.mxu0 0.0
    %2893 = vmatprep.subr.mxu0 0.0
    %2894 = vmatpush1.msra.mxu0 0.0
    %2895 = vmatprep.subr.mxu0 0.0
    %2896 = vmatpush1.msra.mxu0 0.0
    %2897 = vmatprep.subr.mxu0 0.0
    %2898 = vmatpush1.msra.mxu0 0.0
    %2899 = vmatprep.subr.mxu0 0.0
    %2900 = vmatpush1.msra.mxu0 0.0
    %2901 = vmatprep.subr.mxu0 0.0
    %2902 = vmatpush1.msra.mxu0 0.0
    %2903 = vmatprep.subr.mxu0 0.0
    %2904 = vmatpush1.msra.mxu0 0.0
    %2905 = vmatprep.subr.mxu0 0.0
    %2906 = vmatpush1.msra.mxu0 0.0
    %2907 = vmatprep.subr.mxu0 0.0
    %2908 = vmatpush1.msra.mxu0 0.0
    %2909 = vmatprep.subr.mxu0 0.0
    %2910 = vmatpush1.msra.mxu0 0.0
    %2911 = vmatprep.subr.mxu0 0.0
    %2912 = vmatpush1.msra.mxu0 0.0
    %2913 = vmatprep.subr.mxu0 0.0
    %2914 = vmatpush1.msra.mxu0 0.0
    %2915 = vmatprep.subr.mxu0 0.0
    %2916 = vmatpush1.msra.mxu0 0.0
    %2917 = vmatprep.subr.mxu0 0.0
    %2918 = vmatpush1.msra.mxu0 0.0
    %2919 = vmatprep.subr.mxu0 0.0
    %2920 = vmatpush1.msra.mxu0 0.0
    %2921 = vmatprep.subr.mxu0 0.0
    %2922 = vmatpush1.msra.mxu0 0.0
    %2923 = vmatprep.mubr.f32.mxu0 0.0
    %2924 = vmatmul.mubr.f32.gmra.mrb[0].mxu0 %v2857
    %v2925 = vpop.f32.mrb[0].mxu0
    %v2926 = vadd.f32 %v107, %v2925
    %v2927 = vpop.f32.mrb[0].mxu0
    %2928 = vdwg.mxu0
    %s2929 = scalar_lea.vmem [#allocation10], 24
    %2930 = vst [vmem:[%s2929] sm:$0xff] %v2926
    %v2931 = vld [vmem:[#allocation5] sm:$0xff]
    %v2932 = vld [vmem:[#allocation5 + $0x8] sm:$0xff]
    %v2933 = vld [vmem:[#allocation5 + $0x10] sm:$0xff]
    %v2934 = vld [vmem:[#allocation5 + $0x18] sm:$0xff]
    %v2935 = vld [vmem:[#allocation5 + $0x20] sm:$0xff]
    %v2936 = vld [vmem:[#allocation5 + $0x28] sm:$0xff]
    %v2937 = vld [vmem:[#allocation5 + $0x30] sm:$0xff]
    %v2938 = vld [vmem:[#allocation5 + $0x38] sm:$0xff]
    %v2939 = vld [vmem:[#allocation5 + $0x40] sm:$0xff]
    %v2940 = vld [vmem:[#allocation5 + $0x48] sm:$0xff]
    %v2941 = vld [vmem:[#allocation5 + $0x50] sm:$0xff]
    %v2942 = vld [vmem:[#allocation5 + $0x58] sm:$0xff]
    %v2943 = vld [vmem:[#allocation5 + $0x60] sm:$0xff]
    %v2944 = vld [vmem:[#allocation5 + $0x68] sm:$0xff]
    %v2945 = vld [vmem:[#allocation5 + $0x70] sm:$0xff]
    %v2946 = vld [vmem:[#allocation5 + $0x78] sm:$0xff]
    %v2947 = vld [vmem:[#allocation5 + $0x80] sm:$0xff]
    %v2948 = vld [vmem:[#allocation5 + $0x88] sm:$0xff]
    %v2949 = vld [vmem:[#allocation5 + $0x90] sm:$0xff]
    %v2950 = vld [vmem:[#allocation5 + $0x98] sm:$0xff]
    %v2951 = vsel %vm144, %v2741, 0
    %2953 = vmatprep.subr.mxu0 0.0
    %2954 = vmatpush1.msra.mxu0 %v2931
    %2955 = vmatprep.subr.mxu0 0.0
    %2956 = vmatpush1.msra.mxu0 %v2932
    %2957 = vmatprep.subr.mxu0 0.0
    %2958 = vmatpush1.msra.mxu0 %v2933
    %2959 = vmatprep.subr.mxu0 0.0
    %2960 = vmatpush1.msra.mxu0 %v2934
    %2961 = vmatprep.subr.mxu0 0.0
    %2962 = vmatpush1.msra.mxu0 %v2935
    %2963 = vmatprep.subr.mxu0 0.0
    %2964 = vmatpush1.msra.mxu0 %v2936
    %2965 = vmatprep.subr.mxu0 0.0
    %2966 = vmatpush1.msra.mxu0 %v2937
    %2967 = vmatprep.subr.mxu0 0.0
    %2968 = vmatpush1.msra.mxu0 %v2938
    %2969 = vmatprep.subr.mxu0 0.0
    %2970 = vmatpush1.msra.mxu0 %v2939
    %2971 = vmatprep.subr.mxu0 0.0
    %2972 = vmatpush1.msra.mxu0 %v2940
    %2973 = vmatprep.subr.mxu0 0.0
    %2974 = vmatpush1.msra.mxu0 %v2941
    %2975 = vmatprep.subr.mxu0 0.0
    %2976 = vmatpush1.msra.mxu0 %v2942
    %2977 = vmatprep.subr.mxu0 0.0
    %2978 = vmatpush1.msra.mxu0 %v2943
    %2979 = vmatprep.subr.mxu0 0.0
    %2980 = vmatpush1.msra.mxu0 %v2944
    %2981 = vmatprep.subr.mxu0 0.0
    %2982 = vmatpush1.msra.mxu0 %v2945
    %2983 = vmatprep.subr.mxu0 0.0
    %2984 = vmatpush1.msra.mxu0 %v2946
    %2985 = vmatprep.subr.mxu0 0.0
    %2986 = vmatpush1.msra.mxu0 %v2947
    %2987 = vmatprep.subr.mxu0 0.0
    %2988 = vmatpush1.msra.mxu0 %v2948
    %2989 = vmatprep.subr.mxu0 0.0
    %2990 = vmatpush1.msra.mxu0 %v2949
    %2991 = vmatprep.subr.mxu0 0.0
    %2992 = vmatpush1.msra.mxu0 %v2950
    %2993 = vmatprep.subr.mxu0 0.0
    %2994 = vmatpush1.msra.mxu0 0.0
    %2995 = vmatprep.subr.mxu0 0.0
    %2996 = vmatpush1.msra.mxu0 0.0
    %2997 = vmatprep.subr.mxu0 0.0
    %2998 = vmatpush1.msra.mxu0 0.0
    %2999 = vmatprep.subr.mxu0 0.0
    %3000 = vmatpush1.msra.mxu0 0.0
    %3001 = vmatprep.subr.mxu0 0.0
    %3002 = vmatpush1.msra.mxu0 0.0
    %3003 = vmatprep.subr.mxu0 0.0
    %3004 = vmatpush1.msra.mxu0 0.0
    %3005 = vmatprep.subr.mxu0 0.0
    %3006 = vmatpush1.msra.mxu0 0.0
    %3007 = vmatprep.subr.mxu0 0.0
    %3008 = vmatpush1.msra.mxu0 0.0
    %3009 = vmatprep.subr.mxu0 0.0
    %3010 = vmatpush1.msra.mxu0 0.0
    %3011 = vmatprep.subr.mxu0 0.0
    %3012 = vmatpush1.msra.mxu0 0.0
    %3013 = vmatprep.subr.mxu0 0.0
    %3014 = vmatpush1.msra.mxu0 0.0
    %3015 = vmatprep.subr.mxu0 0.0
    %3016 = vmatpush1.msra.mxu0 0.0
    %3017 = vmatprep.mubr.f32.mxu0 %v2951
    %3018 = vmatmul.mubr.f32.gmra.mrb[0].mxu0 %v2926
    %v3019 = vpop.f32.mrb[0].mxu0
    %v3020 = vadd.f32 %v93, %v3019
    %v3021 = vpop.f32.mrb[0].mxu0
    %3022 = vdwg.mxu0
    %v3023 = vmul.f32 %v3020, %v87
    %v3024 = vtanh.pop %v3023
    %v3025 = vmul.f32 %v3024, 0.5
    %v3026 = vadd.f32 %v3025, 0.5
    %v3027 = vsel %vm86, %v3024, %v3026
    %v3028 = vmul.f32 %v3027, %v2732
    %3030 = vrot.lane.b32.xlu0 %v3027, 64
    %v3031 = vpop.permute.xlu0 %3030
    %v3033 = vmul.f32 %v3027, %v3031
    %3035 = vrot.lane.b32.xlu0 %v3033, 32
    %v3036 = vpop.permute.xlu0 %3035
    %v3038 = vadd.f32 %v3028, %v3036
    %v3039 = vtanh.pop %v3038
    %3041 = vrot.lane.b32.xlu0 %v3039, 64
    %v3042 = vpop.permute.xlu0 %3041
    %v3044 = vmul.f32 %v3027, %v3042
    %3046 = vrot.lane.b32.xlu0 %v3044, 32
    %v3047 = vpop.permute.xlu0 %3046
    %3049 = vrot.lane.b32.xlu0 %v2849, 64
    %v3050 = vpop.permute.xlu0 %3049
    %v3052 = vsel %vm144, %v3047, %v3050
    %v3053 = vld [vmem:[#allocation7] sm:$0xff]
    %v3054 = vld [vmem:[#allocation7 + $0x8] sm:$0xff]
    %v3055 = vld [vmem:[#allocation7 + $0x10] sm:$0xff]
    %v3056 = vld [vmem:[#allocation7 + $0x18] sm:$0xff]
    %v3057 = vld [vmem:[#allocation7 + $0x20] sm:$0xff]
    %v3058 = vld [vmem:[#allocation7 + $0x28] sm:$0xff]
    %v3059 = vld [vmem:[#allocation7 + $0x30] sm:$0xff]
    %v3060 = vld [vmem:[#allocation7 + $0x38] sm:$0xff]
    %v3062 = vsel %vm929, %v3052, 0
    %3064 = vmatprep.subr.mxu0 0.0
    %3065 = vmatpush1.msra.mxu0 %v3053
    %3066 = vmatprep.subr.mxu0 0.0
    %3067 = vmatpush1.msra.mxu0 %v3054
    %3068 = vmatprep.subr.mxu0 0.0
    %3069 = vmatpush1.msra.mxu0 %v3055
    %3070 = vmatprep.subr.mxu0 0.0
    %3071 = vmatpush1.msra.mxu0 %v3056
    %3072 = vmatprep.subr.mxu0 0.0
    %3073 = vmatpush1.msra.mxu0 %v3057
    %3074 = vmatprep.subr.mxu0 0.0
    %3075 = vmatpush1.msra.mxu0 %v3058
    %3076 = vmatprep.subr.mxu0 0.0
    %3077 = vmatpush1.msra.mxu0 %v3059
    %3078 = vmatprep.subr.mxu0 0.0
    %3079 = vmatpush1.msra.mxu0 %v3060
    %3080 = vmatprep.subr.mxu0 0.0
    %3081 = vmatpush1.msra.mxu0 0.0
    %3082 = vmatprep.subr.mxu0 0.0
    %3083 = vmatpush1.msra.mxu0 0.0
    %3084 = vmatprep.subr.mxu0 0.0
    %3085 = vmatpush1.msra.mxu0 0.0
    %3086 = vmatprep.subr.mxu0 0.0
    %3087 = vmatpush1.msra.mxu0 0.0
    %3088 = vmatprep.subr.mxu0 0.0
    %3089 = vmatpush1.msra.mxu0 0.0
    %3090 = vmatprep.subr.mxu0 0.0
    %3091 = vmatpush1.msra.mxu0 0.0
    %3092 = vmatprep.subr.mxu0 0.0
    %3093 = vmatpush1.msra.mxu0 0.0
    %3094 = vmatprep.subr.mxu0 0.0
    %3095 = vmatpush1.msra.mxu0 0.0
    %3096 = vmatprep.subr.mxu0 0.0
    %3097 = vmatpush1.msra.mxu0 0.0
    %3098 = vmatprep.subr.mxu0 0.0
    %3099 = vmatpush1.msra.mxu0 0.0
    %3100 = vmatprep.subr.mxu0 0.0
    %3101 = vmatpush1.msra.mxu0 0.0
    %3102 = vmatprep.subr.mxu0 0.0
    %3103 = vmatpush1.msra.mxu0 0.0
    %3104 = vmatprep.subr.mxu0 0.0
    %3105 = vmatpush1.msra.mxu0 0.0
    %3106 = vmatprep.subr.mxu0 0.0
    %3107 = vmatpush1.msra.mxu0 0.0
    %3108 = vmatprep.subr.mxu0 0.0
    %3109 = vmatpush1.msra.mxu0 0.0
    %3110 = vmatprep.subr.mxu0 0.0
    %3111 = vmatpush1.msra.mxu0 0.0
    %3112 = vmatprep.subr.mxu0 0.0
    %3113 = vmatpush1.msra.mxu0 0.0
    %3114 = vmatprep.subr.mxu0 0.0
    %3115 = vmatpush1.msra.mxu0 0.0
    %3116 = vmatprep.subr.mxu0 0.0
    %3117 = vmatpush1.msra.mxu0 0.0
    %3118 = vmatprep.subr.mxu0 0.0
    %3119 = vmatpush1.msra.mxu0 0.0
    %3120 = vmatprep.subr.mxu0 0.0
    %3121 = vmatpush1.msra.mxu0 0.0
    %3122 = vmatprep.subr.mxu0 0.0
    %3123 = vmatpush1.msra.mxu0 0.0
    %3124 = vmatprep.subr.mxu0 0.0
    %3125 = vmatpush1.msra.mxu0 0.0
    %3126 = vmatprep.subr.mxu0 0.0
    %3127 = vmatpush1.msra.mxu0 0.0
    %3128 = vmatprep.mubr.f32.mxu0 0.0
    %3129 = vmatmul.mubr.f32.gmra.mrb[0].mxu0 %v3062
    %v3130 = vpop.f32.mrb[0].mxu0
    %v3131 = vadd.f32 %v100, %v3130
    %v3132 = vpop.f32.mrb[0].mxu0
    %3133 = vdwg.mxu0
    %v3134 = vmul.f32 %v3131, %v87
    %v3135 = vtanh.pop %v3134
    %v3136 = vmul.f32 %v3135, 0.5
    %v3137 = vadd.f32 %v3136, 0.5
    %v3138 = vsel %vm86, %v3135, %v3137
    %v3139 = vmul.f32 %v3138, %v2843
    %3141 = vrot.lane.b32.xlu0 %v3138, 64
    %v3142 = vpop.permute.xlu0 %3141
    %v3144 = vmul.f32 %v3138, %v3142
    %3146 = vrot.lane.b32.xlu0 %v3144, 32
    %v3147 = vpop.permute.xlu0 %3146
    %v3149 = vadd.f32 %v3139, %v3147
    %v3150 = vtanh.pop %v3149
    %3152 = vrot.lane.b32.xlu0 %v3150, 64
    %v3153 = vpop.permute.xlu0 %3152
    %v3155 = vmul.f32 %v3138, %v3153
    %v3156 = vld [vmem:[#allocation8] sm:$0xff]
    %v3157 = vld [vmem:[#allocation8 + $0x8] sm:$0xff]
    %v3158 = vld [vmem:[#allocation8 + $0x10] sm:$0xff]
    %v3159 = vld [vmem:[#allocation8 + $0x18] sm:$0xff]
    %3161 = vrot.lane.b32.xlu0 %v3155, 32
    %v3162 = vpop.permute.xlu0 %3161
    %v3163 = vsel %vm144, %v3162, 0
    %3165 = vmatprep.subr.mxu0 0.0
    %3166 = vmatpush1.msra.mxu0 %v3156
    %3167 = vmatprep.subr.mxu0 0.0
    %3168 = vmatpush1.msra.mxu0 %v3157
    %3169 = vmatprep.subr.mxu0 0.0
    %3170 = vmatpush1.msra.mxu0 %v3158
    %3171 = vmatprep.subr.mxu0 0.0
    %3172 = vmatpush1.msra.mxu0 %v3159
    %3173 = vmatprep.subr.mxu0 0.0
    %3174 = vmatpush1.msra.mxu0 0.0
    %3175 = vmatprep.subr.mxu0 0.0
    %3176 = vmatpush1.msra.mxu0 0.0
    %3177 = vmatprep.subr.mxu0 0.0
    %3178 = vmatpush1.msra.mxu0 0.0
    %3179 = vmatprep.subr.mxu0 0.0
    %3180 = vmatpush1.msra.mxu0 0.0
    %3181 = vmatprep.subr.mxu0 0.0
    %3182 = vmatpush1.msra.mxu0 0.0
    %3183 = vmatprep.subr.mxu0 0.0
    %3184 = vmatpush1.msra.mxu0 0.0
    %3185 = vmatprep.subr.mxu0 0.0
    %3186 = vmatpush1.msra.mxu0 0.0
    %3187 = vmatprep.subr.mxu0 0.0
    %3188 = vmatpush1.msra.mxu0 0.0
    %3189 = vmatprep.subr.mxu0 0.0
    %3190 = vmatpush1.msra.mxu0 0.0
    %3191 = vmatprep.subr.mxu0 0.0
    %3192 = vmatpush1.msra.mxu0 0.0
    %3193 = vmatprep.subr.mxu0 0.0
    %3194 = vmatpush1.msra.mxu0 0.0
    %3195 = vmatprep.subr.mxu0 0.0
    %3196 = vmatpush1.msra.mxu0 0.0
    %3197 = vmatprep.subr.mxu0 0.0
    %3198 = vmatpush1.msra.mxu0 0.0
    %3199 = vmatprep.subr.mxu0 0.0
    %3200 = vmatpush1.msra.mxu0 0.0
    %3201 = vmatprep.subr.mxu0 0.0
    %3202 = vmatpush1.msra.mxu0 0.0
    %3203 = vmatprep.subr.mxu0 0.0
    %3204 = vmatpush1.msra.mxu0 0.0
    %3205 = vmatprep.subr.mxu0 0.0
    %3206 = vmatpush1.msra.mxu0 0.0
    %3207 = vmatprep.subr.mxu0 0.0
    %3208 = vmatpush1.msra.mxu0 0.0
    %3209 = vmatprep.subr.mxu0 0.0
    %3210 = vmatpush1.msra.mxu0 0.0
    %3211 = vmatprep.subr.mxu0 0.0
    %3212 = vmatpush1.msra.mxu0 0.0
    %3213 = vmatprep.subr.mxu0 0.0
    %3214 = vmatpush1.msra.mxu0 0.0
    %3215 = vmatprep.subr.mxu0 0.0
    %3216 = vmatpush1.msra.mxu0 0.0
    %3217 = vmatprep.subr.mxu0 0.0
    %3218 = vmatpush1.msra.mxu0 0.0
    %3219 = vmatprep.subr.mxu0 0.0
    %3220 = vmatpush1.msra.mxu0 0.0
    %3221 = vmatprep.subr.mxu0 0.0
    %3222 = vmatpush1.msra.mxu0 0.0
    %3223 = vmatprep.subr.mxu0 0.0
    %3224 = vmatpush1.msra.mxu0 0.0
    %3225 = vmatprep.subr.mxu0 0.0
    %3226 = vmatpush1.msra.mxu0 0.0
    %3227 = vmatprep.subr.mxu0 0.0
    %3228 = vmatpush1.msra.mxu0 0.0
    %3229 = vmatprep.mubr.f32.mxu0 0.0
    %3230 = vmatmul.mubr.f32.gmra.mrb[0].mxu0 %v3163
    %v3231 = vpop.f32.mrb[0].mxu0
    %v3232 = vadd.f32 %v107, %v3231
    %v3233 = vpop.f32.mrb[0].mxu0
    %3234 = vdwg.mxu0
    %s3235 = scalar_lea.vmem [#allocation10], 32
    %3236 = vst [vmem:[%s3235] sm:$0xff] %v3232
    %v3237 = vld [vmem:[#allocation5] sm:$0xff]
    %v3238 = vld [vmem:[#allocation5 + $0x8] sm:$0xff]
    %v3239 = vld [vmem:[#allocation5 + $0x10] sm:$0xff]
    %v3240 = vld [vmem:[#allocation5 + $0x18] sm:$0xff]
    %v3241 = vld [vmem:[#allocation5 + $0x20] sm:$0xff]
    %v3242 = vld [vmem:[#allocation5 + $0x28] sm:$0xff]
    %v3243 = vld [vmem:[#allocation5 + $0x30] sm:$0xff]
    %v3244 = vld [vmem:[#allocation5 + $0x38] sm:$0xff]
    %v3245 = vld [vmem:[#allocation5 + $0x40] sm:$0xff]
    %v3246 = vld [vmem:[#allocation5 + $0x48] sm:$0xff]
    %v3247 = vld [vmem:[#allocation5 + $0x50] sm:$0xff]
    %v3248 = vld [vmem:[#allocation5 + $0x58] sm:$0xff]
    %v3249 = vld [vmem:[#allocation5 + $0x60] sm:$0xff]
    %v3250 = vld [vmem:[#allocation5 + $0x68] sm:$0xff]
    %v3251 = vld [vmem:[#allocation5 + $0x70] sm:$0xff]
    %v3252 = vld [vmem:[#allocation5 + $0x78] sm:$0xff]
    %v3253 = vld [vmem:[#allocation5 + $0x80] sm:$0xff]
    %v3254 = vld [vmem:[#allocation5 + $0x88] sm:$0xff]
    %v3255 = vld [vmem:[#allocation5 + $0x90] sm:$0xff]
    %v3256 = vld [vmem:[#allocation5 + $0x98] sm:$0xff]
    %v3257 = vsel %vm144, %v3047, 0
    %3259 = vmatprep.subr.mxu0 0.0
    %3260 = vmatpush1.msra.mxu0 %v3237
    %3261 = vmatprep.subr.mxu0 0.0
    %3262 = vmatpush1.msra.mxu0 %v3238
    %3263 = vmatprep.subr.mxu0 0.0
    %3264 = vmatpush1.msra.mxu0 %v3239
    %3265 = vmatprep.subr.mxu0 0.0
    %3266 = vmatpush1.msra.mxu0 %v3240
    %3267 = vmatprep.subr.mxu0 0.0
    %3268 = vmatpush1.msra.mxu0 %v3241
    %3269 = vmatprep.subr.mxu0 0.0
    %3270 = vmatpush1.msra.mxu0 %v3242
    %3271 = vmatprep.subr.mxu0 0.0
    %3272 = vmatpush1.msra.mxu0 %v3243
    %3273 = vmatprep.subr.mxu0 0.0
    %3274 = vmatpush1.msra.mxu0 %v3244
    %3275 = vmatprep.subr.mxu0 0.0
    %3276 = vmatpush1.msra.mxu0 %v3245
    %3277 = vmatprep.subr.mxu0 0.0
    %3278 = vmatpush1.msra.mxu0 %v3246
    %3279 = vmatprep.subr.mxu0 0.0
    %3280 = vmatpush1.msra.mxu0 %v3247
    %3281 = vmatprep.subr.mxu0 0.0
    %3282 = vmatpush1.msra.mxu0 %v3248
    %3283 = vmatprep.subr.mxu0 0.0
    %3284 = vmatpush1.msra.mxu0 %v3249
    %3285 = vmatprep.subr.mxu0 0.0
    %3286 = vmatpush1.msra.mxu0 %v3250
    %3287 = vmatprep.subr.mxu0 0.0
    %3288 = vmatpush1.msra.mxu0 %v3251
    %3289 = vmatprep.subr.mxu0 0.0
    %3290 = vmatpush1.msra.mxu0 %v3252
    %3291 = vmatprep.subr.mxu0 0.0
    %3292 = vmatpush1.msra.mxu0 %v3253
    %3293 = vmatprep.subr.mxu0 0.0
    %3294 = vmatpush1.msra.mxu0 %v3254
    %3295 = vmatprep.subr.mxu0 0.0
    %3296 = vmatpush1.msra.mxu0 %v3255
    %3297 = vmatprep.subr.mxu0 0.0
    %3298 = vmatpush1.msra.mxu0 %v3256
    %3299 = vmatprep.subr.mxu0 0.0
    %3300 = vmatpush1.msra.mxu0 0.0
    %3301 = vmatprep.subr.mxu0 0.0
    %3302 = vmatpush1.msra.mxu0 0.0
    %3303 = vmatprep.subr.mxu0 0.0
    %3304 = vmatpush1.msra.mxu0 0.0
    %3305 = vmatprep.subr.mxu0 0.0
    %3306 = vmatpush1.msra.mxu0 0.0
    %3307 = vmatprep.subr.mxu0 0.0
    %3308 = vmatpush1.msra.mxu0 0.0
    %3309 = vmatprep.subr.mxu0 0.0
    %3310 = vmatpush1.msra.mxu0 0.0
    %3311 = vmatprep.subr.mxu0 0.0
    %3312 = vmatpush1.msra.mxu0 0.0
    %3313 = vmatprep.subr.mxu0 0.0
    %3314 = vmatpush1.msra.mxu0 0.0
    %3315 = vmatprep.subr.mxu0 0.0
    %3316 = vmatpush1.msra.mxu0 0.0
    %3317 = vmatprep.subr.mxu0 0.0
    %3318 = vmatpush1.msra.mxu0 0.0
    %3319 = vmatprep.subr.mxu0 0.0
    %3320 = vmatpush1.msra.mxu0 0.0
    %3321 = vmatprep.subr.mxu0 0.0
    %3322 = vmatpush1.msra.mxu0 0.0
    %3323 = vmatprep.mubr.f32.mxu0 %v3257
    %3324 = vmatmul.mubr.f32.gmra.mrb[0].mxu0 %v3232
    %v3325 = vpop.f32.mrb[0].mxu0
    %v3326 = vadd.f32 %v93, %v3325
    %v3327 = vpop.f32.mrb[0].mxu0
    %3328 = vdwg.mxu0
    %v3329 = vmul.f32 %v3326, %v87
    %v3330 = vtanh.pop %v3329
    %v3331 = vmul.f32 %v3330, 0.5
    %v3332 = vadd.f32 %v3331, 0.5
    %v3333 = vsel %vm86, %v3330, %v3332
    %v3334 = vmul.f32 %v3333, %v3038
    %3336 = vrot.lane.b32.xlu0 %v3333, 64
    %v3337 = vpop.permute.xlu0 %3336
    %v3339 = vmul.f32 %v3333, %v3337
    %3341 = vrot.lane.b32.xlu0 %v3339, 32
    %v3342 = vpop.permute.xlu0 %3341
    %v3344 = vadd.f32 %v3334, %v3342
    %v3345 = vtanh.pop %v3344
    %3347 = vrot.lane.b32.xlu0 %v3345, 64
    %v3348 = vpop.permute.xlu0 %3347
    %v3350 = vmul.f32 %v3333, %v3348
    %3352 = vrot.lane.b32.xlu0 %v3350, 32
    %v3353 = vpop.permute.xlu0 %3352
    %3355 = vrot.lane.b32.xlu0 %v3155, 64
    %v3356 = vpop.permute.xlu0 %3355
    %v3358 = vsel %vm144, %v3353, %v3356
    %v3359 = vld [vmem:[#allocation7] sm:$0xff]
    %v3360 = vld [vmem:[#allocation7 + $0x8] sm:$0xff]
    %v3361 = vld [vmem:[#allocation7 + $0x10] sm:$0xff]
    %v3362 = vld [vmem:[#allocation7 + $0x18] sm:$0xff]
    %v3363 = vld [vmem:[#allocation7 + $0x20] sm:$0xff]
    %v3364 = vld [vmem:[#allocation7 + $0x28] sm:$0xff]
    %v3365 = vld [vmem:[#allocation7 + $0x30] sm:$0xff]
    %v3366 = vld [vmem:[#allocation7 + $0x38] sm:$0xff]
    %v3368 = vsel %vm929, %v3358, 0
    %3370 = vmatprep.subr.mxu0 0.0
    %3371 = vmatpush1.msra.mxu0 %v3359
    %3372 = vmatprep.subr.mxu0 0.0
    %3373 = vmatpush1.msra.mxu0 %v3360
    %3374 = vmatprep.subr.mxu0 0.0
    %3375 = vmatpush1.msra.mxu0 %v3361
    %3376 = vmatprep.subr.mxu0 0.0
    %3377 = vmatpush1.msra.mxu0 %v3362
    %3378 = vmatprep.subr.mxu0 0.0
    %3379 = vmatpush1.msra.mxu0 %v3363
    %3380 = vmatprep.subr.mxu0 0.0
    %3381 = vmatpush1.msra.mxu0 %v3364
    %3382 = vmatprep.subr.mxu0 0.0
    %3383 = vmatpush1.msra.mxu0 %v3365
    %3384 = vmatprep.subr.mxu0 0.0
    %3385 = vmatpush1.msra.mxu0 %v3366
    %3386 = vmatprep.subr.mxu0 0.0
    %3387 = vmatpush1.msra.mxu0 0.0
    %3388 = vmatprep.subr.mxu0 0.0
    %3389 = vmatpush1.msra.mxu0 0.0
    %3390 = vmatprep.subr.mxu0 0.0
    %3391 = vmatpush1.msra.mxu0 0.0
    %3392 = vmatprep.subr.mxu0 0.0
    %3393 = vmatpush1.msra.mxu0 0.0
    %3394 = vmatprep.subr.mxu0 0.0
    %3395 = vmatpush1.msra.mxu0 0.0
    %3396 = vmatprep.subr.mxu0 0.0
    %3397 = vmatpush1.msra.mxu0 0.0
    %3398 = vmatprep.subr.mxu0 0.0
    %3399 = vmatpush1.msra.mxu0 0.0
    %3400 = vmatprep.subr.mxu0 0.0
    %3401 = vmatpush1.msra.mxu0 0.0
    %3402 = vmatprep.subr.mxu0 0.0
    %3403 = vmatpush1.msra.mxu0 0.0
    %3404 = vmatprep.subr.mxu0 0.0
    %3405 = vmatpush1.msra.mxu0 0.0
    %3406 = vmatprep.subr.mxu0 0.0
    %3407 = vmatpush1.msra.mxu0 0.0
    %3408 = vmatprep.subr.mxu0 0.0
    %3409 = vmatpush1.msra.mxu0 0.0
    %3410 = vmatprep.subr.mxu0 0.0
    %3411 = vmatpush1.msra.mxu0 0.0
    %3412 = vmatprep.subr.mxu0 0.0
    %3413 = vmatpush1.msra.mxu0 0.0
    %3414 = vmatprep.subr.mxu0 0.0
    %3415 = vmatpush1.msra.mxu0 0.0
    %3416 = vmatprep.subr.mxu0 0.0
    %3417 = vmatpush1.msra.mxu0 0.0
    %3418 = vmatprep.subr.mxu0 0.0
    %3419 = vmatpush1.msra.mxu0 0.0
    %3420 = vmatprep.subr.mxu0 0.0
    %3421 = vmatpush1.msra.mxu0 0.0
    %3422 = vmatprep.subr.mxu0 0.0
    %3423 = vmatpush1.msra.mxu0 0.0
    %3424 = vmatprep.subr.mxu0 0.0
    %3425 = vmatpush1.msra.mxu0 0.0
    %3426 = vmatprep.subr.mxu0 0.0
    %3427 = vmatpush1.msra.mxu0 0.0
    %3428 = vmatprep.subr.mxu0 0.0
    %3429 = vmatpush1.msra.mxu0 0.0
    %3430 = vmatprep.subr.mxu0 0.0
    %3431 = vmatpush1.msra.mxu0 0.0
    %3432 = vmatprep.subr.mxu0 0.0
    %3433 = vmatpush1.msra.mxu0 0.0
    %3434 = vmatprep.mubr.f32.mxu0 0.0
    %3435 = vmatmul.mubr.f32.gmra.mrb[0].mxu0 %v3368
    %v3436 = vpop.f32.mrb[0].mxu0
    %v3437 = vadd.f32 %v100, %v3436
    %v3438 = vpop.f32.mrb[0].mxu0
    %3439 = vdwg.mxu0
    %v3440 = vmul.f32 %v3437, %v87
    %v3441 = vtanh.pop %v3440
    %v3442 = vmul.f32 %v3441, 0.5
    %v3443 = vadd.f32 %v3442, 0.5
    %v3444 = vsel %vm86, %v3441, %v3443
    %v3445 = vmul.f32 %v3444, %v3149
    %3447 = vrot.lane.b32.xlu0 %v3444, 64
    %v3448 = vpop.permute.xlu0 %3447
    %v3450 = vmul.f32 %v3444, %v3448
    %3452 = vrot.lane.b32.xlu0 %v3450, 32
    %v3453 = vpop.permute.xlu0 %3452
    %v3455 = vadd.f32 %v3445, %v3453
    %v3456 = vtanh.pop %v3455
    %3458 = vrot.lane.b32.xlu0 %v3456, 64
    %v3459 = vpop.permute.xlu0 %3458
    %v3461 = vmul.f32 %v3444, %v3459
    %v3462 = vld [vmem:[#allocation8] sm:$0xff]
    %v3463 = vld [vmem:[#allocation8 + $0x8] sm:$0xff]
    %v3464 = vld [vmem:[#allocation8 + $0x10] sm:$0xff]
    %v3465 = vld [vmem:[#allocation8 + $0x18] sm:$0xff]
    %3467 = vrot.lane.b32.xlu0 %v3461, 32
    %v3468 = vpop.permute.xlu0 %3467
    %v3469 = vsel %vm144, %v3468, 0
    %3471 = vmatprep.subr.mxu0 0.0
    %3472 = vmatpush1.msra.mxu0 %v3462
    %3473 = vmatprep.subr.mxu0 0.0
    %3474 = vmatpush1.msra.mxu0 %v3463
    %3475 = vmatprep.subr.mxu0 0.0
    %3476 = vmatpush1.msra.mxu0 %v3464
    %3477 = vmatprep.subr.mxu0 0.0
    %3478 = vmatpush1.msra.mxu0 %v3465
    %3479 = vmatprep.subr.mxu0 0.0
    %3480 = vmatpush1.msra.mxu0 0.0
    %3481 = vmatprep.subr.mxu0 0.0
    %3482 = vmatpush1.msra.mxu0 0.0
    %3483 = vmatprep.subr.mxu0 0.0
    %3484 = vmatpush1.msra.mxu0 0.0
    %3485 = vmatprep.subr.mxu0 0.0
    %3486 = vmatpush1.msra.mxu0 0.0
    %3487 = vmatprep.subr.mxu0 0.0
    %3488 = vmatpush1.msra.mxu0 0.0
    %3489 = vmatprep.subr.mxu0 0.0
    %3490 = vmatpush1.msra.mxu0 0.0
    %3491 = vmatprep.subr.mxu0 0.0
    %3492 = vmatpush1.msra.mxu0 0.0
    %3493 = vmatprep.subr.mxu0 0.0
    %3494 = vmatpush1.msra.mxu0 0.0
    %3495 = vmatprep.subr.mxu0 0.0
    %3496 = vmatpush1.msra.mxu0 0.0
    %3497 = vmatprep.subr.mxu0 0.0
    %3498 = vmatpush1.msra.mxu0 0.0
    %3499 = vmatprep.subr.mxu0 0.0
    %3500 = vmatpush1.msra.mxu0 0.0
    %3501 = vmatprep.subr.mxu0 0.0
    %3502 = vmatpush1.msra.mxu0 0.0
    %3503 = vmatprep.subr.mxu0 0.0
    %3504 = vmatpush1.msra.mxu0 0.0
    %3505 = vmatprep.subr.mxu0 0.0
    %3506 = vmatpush1.msra.mxu0 0.0
    %3507 = vmatprep.subr.mxu0 0.0
    %3508 = vmatpush1.msra.mxu0 0.0
    %3509 = vmatprep.subr.mxu0 0.0
    %3510 = vmatpush1.msra.mxu0 0.0
    %3511 = vmatprep.subr.mxu0 0.0
    %3512 = vmatpush1.msra.mxu0 0.0
    %3513 = vmatprep.subr.mxu0 0.0
    %3514 = vmatpush1.msra.mxu0 0.0
    %3515 = vmatprep.subr.mxu0 0.0
    %3516 = vmatpush1.msra.mxu0 0.0
    %3517 = vmatprep.subr.mxu0 0.0
    %3518 = vmatpush1.msra.mxu0 0.0
    %3519 = vmatprep.subr.mxu0 0.0
    %3520 = vmatpush1.msra.mxu0 0.0
    %3521 = vmatprep.subr.mxu0 0.0
    %3522 = vmatpush1.msra.mxu0 0.0
    %3523 = vmatprep.subr.mxu0 0.0
    %3524 = vmatpush1.msra.mxu0 0.0
    %3525 = vmatprep.subr.mxu0 0.0
    %3526 = vmatpush1.msra.mxu0 0.0
    %3527 = vmatprep.subr.mxu0 0.0
    %3528 = vmatpush1.msra.mxu0 0.0
    %3529 = vmatprep.subr.mxu0 0.0
    %3530 = vmatpush1.msra.mxu0 0.0
    %3531 = vmatprep.subr.mxu0 0.0
    %3532 = vmatpush1.msra.mxu0 0.0
    %3533 = vmatprep.subr.mxu0 0.0
    %3534 = vmatpush1.msra.mxu0 0.0
    %3535 = vmatprep.mubr.f32.mxu0 0.0
    %3536 = vmatmul.mubr.f32.gmra.mrb[0].mxu0 %v3469
    %v3537 = vpop.f32.mrb[0].mxu0
    %v3538 = vadd.f32 %v107, %v3537
    %v3539 = vpop.f32.mrb[0].mxu0
    %3540 = vdwg.mxu0
    %s3541 = scalar_lea.vmem [#allocation10], 40
    %3542 = vst [vmem:[%s3541] sm:$0xff] %v3538
    %v3543 = vld [vmem:[#allocation5] sm:$0xff]
    %v3544 = vld [vmem:[#allocation5 + $0x8] sm:$0xff]
    %v3545 = vld [vmem:[#allocation5 + $0x10] sm:$0xff]
    %v3546 = vld [vmem:[#allocation5 + $0x18] sm:$0xff]
    %v3547 = vld [vmem:[#allocation5 + $0x20] sm:$0xff]
    %v3548 = vld [vmem:[#allocation5 + $0x28] sm:$0xff]
    %v3549 = vld [vmem:[#allocation5 + $0x30] sm:$0xff]
    %v3550 = vld [vmem:[#allocation5 + $0x38] sm:$0xff]
    %v3551 = vld [vmem:[#allocation5 + $0x40] sm:$0xff]
    %v3552 = vld [vmem:[#allocation5 + $0x48] sm:$0xff]
    %v3553 = vld [vmem:[#allocation5 + $0x50] sm:$0xff]
    %v3554 = vld [vmem:[#allocation5 + $0x58] sm:$0xff]
    %v3555 = vld [vmem:[#allocation5 + $0x60] sm:$0xff]
    %v3556 = vld [vmem:[#allocation5 + $0x68] sm:$0xff]
    %v3557 = vld [vmem:[#allocation5 + $0x70] sm:$0xff]
    %v3558 = vld [vmem:[#allocation5 + $0x78] sm:$0xff]
    %v3559 = vld [vmem:[#allocation5 + $0x80] sm:$0xff]
    %v3560 = vld [vmem:[#allocation5 + $0x88] sm:$0xff]
    %v3561 = vld [vmem:[#allocation5 + $0x90] sm:$0xff]
    %v3562 = vld [vmem:[#allocation5 + $0x98] sm:$0xff]
    %v3563 = vsel %vm144, %v3353, 0
    %3565 = vmatprep.subr.mxu0 0.0
    %3566 = vmatpush1.msra.mxu0 %v3543
    %3567 = vmatprep.subr.mxu0 0.0
    %3568 = vmatpush1.msra.mxu0 %v3544
    %3569 = vmatprep.subr.mxu0 0.0
    %3570 = vmatpush1.msra.mxu0 %v3545
    %3571 = vmatprep.subr.mxu0 0.0
    %3572 = vmatpush1.msra.mxu0 %v3546
    %3573 = vmatprep.subr.mxu0 0.0
    %3574 = vmatpush1.msra.mxu0 %v3547
    %3575 = vmatprep.subr.mxu0 0.0
    %3576 = vmatpush1.msra.mxu0 %v3548
    %3577 = vmatprep.subr.mxu0 0.0
    %3578 = vmatpush1.msra.mxu0 %v3549
    %3579 = vmatprep.subr.mxu0 0.0
    %3580 = vmatpush1.msra.mxu0 %v3550
    %3581 = vmatprep.subr.mxu0 0.0
    %3582 = vmatpush1.msra.mxu0 %v3551
    %3583 = vmatprep.subr.mxu0 0.0
    %3584 = vmatpush1.msra.mxu0 %v3552
    %3585 = vmatprep.subr.mxu0 0.0
    %3586 = vmatpush1.msra.mxu0 %v3553
    %3587 = vmatprep.subr.mxu0 0.0
    %3588 = vmatpush1.msra.mxu0 %v3554
    %3589 = vmatprep.subr.mxu0 0.0
    %3590 = vmatpush1.msra.mxu0 %v3555
    %3591 = vmatprep.subr.mxu0 0.0
    %3592 = vmatpush1.msra.mxu0 %v3556
    %3593 = vmatprep.subr.mxu0 0.0
    %3594 = vmatpush1.msra.mxu0 %v3557
    %3595 = vmatprep.subr.mxu0 0.0
    %3596 = vmatpush1.msra.mxu0 %v3558
    %3597 = vmatprep.subr.mxu0 0.0
    %3598 = vmatpush1.msra.mxu0 %v3559
    %3599 = vmatprep.subr.mxu0 0.0
    %3600 = vmatpush1.msra.mxu0 %v3560
    %3601 = vmatprep.subr.mxu0 0.0
    %3602 = vmatpush1.msra.mxu0 %v3561
    %3603 = vmatprep.subr.mxu0 0.0
    %3604 = vmatpush1.msra.mxu0 %v3562
    %3605 = vmatprep.subr.mxu0 0.0
    %3606 = vmatpush1.msra.mxu0 0.0
    %3607 = vmatprep.subr.mxu0 0.0
    %3608 = vmatpush1.msra.mxu0 0.0
    %3609 = vmatprep.subr.mxu0 0.0
    %3610 = vmatpush1.msra.mxu0 0.0
    %3611 = vmatprep.subr.mxu0 0.0
    %3612 = vmatpush1.msra.mxu0 0.0
    %3613 = vmatprep.subr.mxu0 0.0
    %3614 = vmatpush1.msra.mxu0 0.0
    %3615 = vmatprep.subr.mxu0 0.0
    %3616 = vmatpush1.msra.mxu0 0.0
    %3617 = vmatprep.subr.mxu0 0.0
    %3618 = vmatpush1.msra.mxu0 0.0
    %3619 = vmatprep.subr.mxu0 0.0
    %3620 = vmatpush1.msra.mxu0 0.0
    %3621 = vmatprep.subr.mxu0 0.0
    %3622 = vmatpush1.msra.mxu0 0.0
    %3623 = vmatprep.subr.mxu0 0.0
    %3624 = vmatpush1.msra.mxu0 0.0
    %3625 = vmatprep.subr.mxu0 0.0
    %3626 = vmatpush1.msra.mxu0 0.0
    %3627 = vmatprep.subr.mxu0 0.0
    %3628 = vmatpush1.msra.mxu0 0.0
    %3629 = vmatprep.mubr.f32.mxu0 %v3563
    %3630 = vmatmul.mubr.f32.gmra.mrb[0].mxu0 %v3538
    %v3631 = vpop.f32.mrb[0].mxu0
    %v3632 = vadd.f32 %v93, %v3631
    %v3633 = vpop.f32.mrb[0].mxu0
    %3634 = vdwg.mxu0
    %v3635 = vmul.f32 %v3632, %v87
    %v3636 = vtanh.pop %v3635
    %v3637 = vmul.f32 %v3636, 0.5
    %v3638 = vadd.f32 %v3637, 0.5
    %v3639 = vsel %vm86, %v3636, %v3638
    %v3640 = vmul.f32 %v3639, %v3344
    %3642 = vrot.lane.b32.xlu0 %v3639, 64
    %v3643 = vpop.permute.xlu0 %3642
    %v3645 = vmul.f32 %v3639, %v3643
    %3647 = vrot.lane.b32.xlu0 %v3645, 32
    %v3648 = vpop.permute.xlu0 %3647
    %v3650 = vadd.f32 %v3640, %v3648
    %v3651 = vtanh.pop %v3650
    %3653 = vrot.lane.b32.xlu0 %v3651, 64
    %v3654 = vpop.permute.xlu0 %3653
    %v3656 = vmul.f32 %v3639, %v3654
    %3658 = vrot.lane.b32.xlu0 %v3656, 32
    %v3659 = vpop.permute.xlu0 %3658
    %3661 = vrot.lane.b32.xlu0 %v3461, 64
    %v3662 = vpop.permute.xlu0 %3661
    %v3664 = vsel %vm144, %v3659, %v3662
    %v3665 = vld [vmem:[#allocation7] sm:$0xff]
    %v3666 = vld [vmem:[#allocation7 + $0x8] sm:$0xff]
    %v3667 = vld [vmem:[#allocation7 + $0x10] sm:$0xff]
    %v3668 = vld [vmem:[#allocation7 + $0x18] sm:$0xff]
    %v3669 = vld [vmem:[#allocation7 + $0x20] sm:$0xff]
    %v3670 = vld [vmem:[#allocation7 + $0x28] sm:$0xff]
    %v3671 = vld [vmem:[#allocation7 + $0x30] sm:$0xff]
    %v3672 = vld [vmem:[#allocation7 + $0x38] sm:$0xff]
    %v3674 = vsel %vm929, %v3664, 0
    %3676 = vmatprep.subr.mxu0 0.0
    %3677 = vmatpush1.msra.mxu0 %v3665
    %3678 = vmatprep.subr.mxu0 0.0
    %3679 = vmatpush1.msra.mxu0 %v3666
    %3680 = vmatprep.subr.mxu0 0.0
    %3681 = vmatpush1.msra.mxu0 %v3667
    %3682 = vmatprep.subr.mxu0 0.0
    %3683 = vmatpush1.msra.mxu0 %v3668
    %3684 = vmatprep.subr.mxu0 0.0
    %3685 = vmatpush1.msra.mxu0 %v3669
    %3686 = vmatprep.subr.mxu0 0.0
    %3687 = vmatpush1.msra.mxu0 %v3670
    %3688 = vmatprep.subr.mxu0 0.0
    %3689 = vmatpush1.msra.mxu0 %v3671
    %3690 = vmatprep.subr.mxu0 0.0
    %3691 = vmatpush1.msra.mxu0 %v3672
    %3692 = vmatprep.subr.mxu0 0.0
    %3693 = vmatpush1.msra.mxu0 0.0
    %3694 = vmatprep.subr.mxu0 0.0
    %3695 = vmatpush1.msra.mxu0 0.0
    %3696 = vmatprep.subr.mxu0 0.0
    %3697 = vmatpush1.msra.mxu0 0.0
    %3698 = vmatprep.subr.mxu0 0.0
    %3699 = vmatpush1.msra.mxu0 0.0
    %3700 = vmatprep.subr.mxu0 0.0
    %3701 = vmatpush1.msra.mxu0 0.0
    %3702 = vmatprep.subr.mxu0 0.0
    %3703 = vmatpush1.msra.mxu0 0.0
    %3704 = vmatprep.subr.mxu0 0.0
    %3705 = vmatpush1.msra.mxu0 0.0
    %3706 = vmatprep.subr.mxu0 0.0
    %3707 = vmatpush1.msra.mxu0 0.0
    %3708 = vmatprep.subr.mxu0 0.0
    %3709 = vmatpush1.msra.mxu0 0.0
    %3710 = vmatprep.subr.mxu0 0.0
    %3711 = vmatpush1.msra.mxu0 0.0
    %3712 = vmatprep.subr.mxu0 0.0
    %3713 = vmatpush1.msra.mxu0 0.0
    %3714 = vmatprep.subr.mxu0 0.0
    %3715 = vmatpush1.msra.mxu0 0.0
    %3716 = vmatprep.subr.mxu0 0.0
    %3717 = vmatpush1.msra.mxu0 0.0
    %3718 = vmatprep.subr.mxu0 0.0
    %3719 = vmatpush1.msra.mxu0 0.0
    %3720 = vmatprep.subr.mxu0 0.0
    %3721 = vmatpush1.msra.mxu0 0.0
    %3722 = vmatprep.subr.mxu0 0.0
    %3723 = vmatpush1.msra.mxu0 0.0
    %3724 = vmatprep.subr.mxu0 0.0
    %3725 = vmatpush1.msra.mxu0 0.0
    %3726 = vmatprep.subr.mxu0 0.0
    %3727 = vmatpush1.msra.mxu0 0.0
    %3728 = vmatprep.subr.mxu0 0.0
    %3729 = vmatpush1.msra.mxu0 0.0
    %3730 = vmatprep.subr.mxu0 0.0
    %3731 = vmatpush1.msra.mxu0 0.0
    %3732 = vmatprep.subr.mxu0 0.0
    %3733 = vmatpush1.msra.mxu0 0.0
    %3734 = vmatprep.subr.mxu0 0.0
    %3735 = vmatpush1.msra.mxu0 0.0
    %3736 = vmatprep.subr.mxu0 0.0
    %3737 = vmatpush1.msra.mxu0 0.0
    %3738 = vmatprep.subr.mxu0 0.0
    %3739 = vmatpush1.msra.mxu0 0.0
    %3740 = vmatprep.mubr.f32.mxu0 0.0
    %3741 = vmatmul.mubr.f32.gmra.mrb[0].mxu0 %v3674
    %v3742 = vpop.f32.mrb[0].mxu0
    %v3743 = vadd.f32 %v100, %v3742
    %v3744 = vpop.f32.mrb[0].mxu0
    %3745 = vdwg.mxu0
    %v3746 = vmul.f32 %v3743, %v87
    %v3747 = vtanh.pop %v3746
    %v3748 = vmul.f32 %v3747, 0.5
    %v3749 = vadd.f32 %v3748, 0.5
    %v3750 = vsel %vm86, %v3747, %v3749
    %v3751 = vmul.f32 %v3750, %v3455
    %3753 = vrot.lane.b32.xlu0 %v3750, 64
    %v3754 = vpop.permute.xlu0 %3753
    %v3756 = vmul.f32 %v3750, %v3754
    %3758 = vrot.lane.b32.xlu0 %v3756, 32
    %v3759 = vpop.permute.xlu0 %3758
    %v3761 = vadd.f32 %v3751, %v3759
    %v3762 = vtanh.pop %v3761
    %3764 = vrot.lane.b32.xlu0 %v3762, 64
    %v3765 = vpop.permute.xlu0 %3764
    %v3767 = vmul.f32 %v3750, %v3765
    %v3768 = vld [vmem:[#allocation8] sm:$0xff]
    %v3769 = vld [vmem:[#allocation8 + $0x8] sm:$0xff]
    %v3770 = vld [vmem:[#allocation8 + $0x10] sm:$0xff]
    %v3771 = vld [vmem:[#allocation8 + $0x18] sm:$0xff]
    %3773 = vrot.lane.b32.xlu0 %v3767, 32
    %v3774 = vpop.permute.xlu0 %3773
    %v3775 = vsel %vm144, %v3774, 0
    %3777 = vmatprep.subr.mxu0 0.0
    %3778 = vmatpush1.msra.mxu0 %v3768
    %3779 = vmatprep.subr.mxu0 0.0
    %3780 = vmatpush1.msra.mxu0 %v3769
    %3781 = vmatprep.subr.mxu0 0.0
    %3782 = vmatpush1.msra.mxu0 %v3770
    %3783 = vmatprep.subr.mxu0 0.0
    %3784 = vmatpush1.msra.mxu0 %v3771
    %3785 = vmatprep.subr.mxu0 0.0
    %3786 = vmatpush1.msra.mxu0 0.0
    %3787 = vmatprep.subr.mxu0 0.0
    %3788 = vmatpush1.msra.mxu0 0.0
    %3789 = vmatprep.subr.mxu0 0.0
    %3790 = vmatpush1.msra.mxu0 0.0
    %3791 = vmatprep.subr.mxu0 0.0
    %3792 = vmatpush1.msra.mxu0 0.0
    %3793 = vmatprep.subr.mxu0 0.0
    %3794 = vmatpush1.msra.mxu0 0.0
    %3795 = vmatprep.subr.mxu0 0.0
    %3796 = vmatpush1.msra.mxu0 0.0
    %3797 = vmatprep.subr.mxu0 0.0
    %3798 = vmatpush1.msra.mxu0 0.0
    %3799 = vmatprep.subr.mxu0 0.0
    %3800 = vmatpush1.msra.mxu0 0.0
    %3801 = vmatprep.subr.mxu0 0.0
    %3802 = vmatpush1.msra.mxu0 0.0
    %3803 = vmatprep.subr.mxu0 0.0
    %3804 = vmatpush1.msra.mxu0 0.0
    %3805 = vmatprep.subr.mxu0 0.0
    %3806 = vmatpush1.msra.mxu0 0.0
    %3807 = vmatprep.subr.mxu0 0.0
    %3808 = vmatpush1.msra.mxu0 0.0
    %3809 = vmatprep.subr.mxu0 0.0
    %3810 = vmatpush1.msra.mxu0 0.0
    %3811 = vmatprep.subr.mxu0 0.0
    %3812 = vmatpush1.msra.mxu0 0.0
    %3813 = vmatprep.subr.mxu0 0.0
    %3814 = vmatpush1.msra.mxu0 0.0
    %3815 = vmatprep.subr.mxu0 0.0
    %3816 = vmatpush1.msra.mxu0 0.0
    %3817 = vmatprep.subr.mxu0 0.0
    %3818 = vmatpush1.msra.mxu0 0.0
    %3819 = vmatprep.subr.mxu0 0.0
    %3820 = vmatpush1.msra.mxu0 0.0
    %3821 = vmatprep.subr.mxu0 0.0
    %3822 = vmatpush1.msra.mxu0 0.0
    %3823 = vmatprep.subr.mxu0 0.0
    %3824 = vmatpush1.msra.mxu0 0.0
    %3825 = vmatprep.subr.mxu0 0.0
    %3826 = vmatpush1.msra.mxu0 0.0
    %3827 = vmatprep.subr.mxu0 0.0
    %3828 = vmatpush1.msra.mxu0 0.0
    %3829 = vmatprep.subr.mxu0 0.0
    %3830 = vmatpush1.msra.mxu0 0.0
    %3831 = vmatprep.subr.mxu0 0.0
    %3832 = vmatpush1.msra.mxu0 0.0
    %3833 = vmatprep.subr.mxu0 0.0
    %3834 = vmatpush1.msra.mxu0 0.0
    %3835 = vmatprep.subr.mxu0 0.0
    %3836 = vmatpush1.msra.mxu0 0.0
    %3837 = vmatprep.subr.mxu0 0.0
    %3838 = vmatpush1.msra.mxu0 0.0
    %3839 = vmatprep.subr.mxu0 0.0
    %3840 = vmatpush1.msra.mxu0 0.0
    %3841 = vmatprep.mubr.f32.mxu0 0.0
    %3842 = vmatmul.mubr.f32.gmra.mrb[0].mxu0 %v3775
    %v3843 = vpop.f32.mrb[0].mxu0
    %v3844 = vadd.f32 %v107, %v3843
    %v3845 = vpop.f32.mrb[0].mxu0
    %3846 = vdwg.mxu0
    %s3847 = scalar_lea.vmem [#allocation10], 48
    %3848 = vst [vmem:[%s3847] sm:$0xff] %v3844
    %v3849 = vld [vmem:[#allocation5] sm:$0xff]
    %v3850 = vld [vmem:[#allocation5 + $0x8] sm:$0xff]
    %v3851 = vld [vmem:[#allocation5 + $0x10] sm:$0xff]
    %v3852 = vld [vmem:[#allocation5 + $0x18] sm:$0xff]
    %v3853 = vld [vmem:[#allocation5 + $0x20] sm:$0xff]
    %v3854 = vld [vmem:[#allocation5 + $0x28] sm:$0xff]
    %v3855 = vld [vmem:[#allocation5 + $0x30] sm:$0xff]
    %v3856 = vld [vmem:[#allocation5 + $0x38] sm:$0xff]
    %v3857 = vld [vmem:[#allocation5 + $0x40] sm:$0xff]
    %v3858 = vld [vmem:[#allocation5 + $0x48] sm:$0xff]
    %v3859 = vld [vmem:[#allocation5 + $0x50] sm:$0xff]
    %v3860 = vld [vmem:[#allocation5 + $0x58] sm:$0xff]
    %v3861 = vld [vmem:[#allocation5 + $0x60] sm:$0xff]
    %v3862 = vld [vmem:[#allocation5 + $0x68] sm:$0xff]
    %v3863 = vld [vmem:[#allocation5 + $0x70] sm:$0xff]
    %v3864 = vld [vmem:[#allocation5 + $0x78] sm:$0xff]
    %v3865 = vld [vmem:[#allocation5 + $0x80] sm:$0xff]
    %v3866 = vld [vmem:[#allocation5 + $0x88] sm:$0xff]
    %v3867 = vld [vmem:[#allocation5 + $0x90] sm:$0xff]
    %v3868 = vld [vmem:[#allocation5 + $0x98] sm:$0xff]
    %v3869 = vsel %vm144, %v3659, 0
    %3871 = vmatprep.subr.mxu0 0.0
    %3872 = vmatpush1.msra.mxu0 %v3849
    %3873 = vmatprep.subr.mxu0 0.0
    %3874 = vmatpush1.msra.mxu0 %v3850
    %3875 = vmatprep.subr.mxu0 0.0
    %3876 = vmatpush1.msra.mxu0 %v3851
    %3877 = vmatprep.subr.mxu0 0.0
    %3878 = vmatpush1.msra.mxu0 %v3852
    %3879 = vmatprep.subr.mxu0 0.0
    %3880 = vmatpush1.msra.mxu0 %v3853
    %3881 = vmatprep.subr.mxu0 0.0
    %3882 = vmatpush1.msra.mxu0 %v3854
    %3883 = vmatprep.subr.mxu0 0.0
    %3884 = vmatpush1.msra.mxu0 %v3855
    %3885 = vmatprep.subr.mxu0 0.0
    %3886 = vmatpush1.msra.mxu0 %v3856
    %3887 = vmatprep.subr.mxu0 0.0
    %3888 = vmatpush1.msra.mxu0 %v3857
    %3889 = vmatprep.subr.mxu0 0.0
    %3890 = vmatpush1.msra.mxu0 %v3858
    %3891 = vmatprep.subr.mxu0 0.0
    %3892 = vmatpush1.msra.mxu0 %v3859
    %3893 = vmatprep.subr.mxu0 0.0
    %3894 = vmatpush1.msra.mxu0 %v3860
    %3895 = vmatprep.subr.mxu0 0.0
    %3896 = vmatpush1.msra.mxu0 %v3861
    %3897 = vmatprep.subr.mxu0 0.0
    %3898 = vmatpush1.msra.mxu0 %v3862
    %3899 = vmatprep.subr.mxu0 0.0
    %3900 = vmatpush1.msra.mxu0 %v3863
    %3901 = vmatprep.subr.mxu0 0.0
    %3902 = vmatpush1.msra.mxu0 %v3864
    %3903 = vmatprep.subr.mxu0 0.0
    %3904 = vmatpush1.msra.mxu0 %v3865
    %3905 = vmatprep.subr.mxu0 0.0
    %3906 = vmatpush1.msra.mxu0 %v3866
    %3907 = vmatprep.subr.mxu0 0.0
    %3908 = vmatpush1.msra.mxu0 %v3867
    %3909 = vmatprep.subr.mxu0 0.0
    %3910 = vmatpush1.msra.mxu0 %v3868
    %3911 = vmatprep.subr.mxu0 0.0
    %3912 = vmatpush1.msra.mxu0 0.0
    %3913 = vmatprep.subr.mxu0 0.0
    %3914 = vmatpush1.msra.mxu0 0.0
    %3915 = vmatprep.subr.mxu0 0.0
    %3916 = vmatpush1.msra.mxu0 0.0
    %3917 = vmatprep.subr.mxu0 0.0
    %3918 = vmatpush1.msra.mxu0 0.0
    %3919 = vmatprep.subr.mxu0 0.0
    %3920 = vmatpush1.msra.mxu0 0.0
    %3921 = vmatprep.subr.mxu0 0.0
    %3922 = vmatpush1.msra.mxu0 0.0
    %3923 = vmatprep.subr.mxu0 0.0
    %3924 = vmatpush1.msra.mxu0 0.0
    %3925 = vmatprep.subr.mxu0 0.0
    %3926 = vmatpush1.msra.mxu0 0.0
    %3927 = vmatprep.subr.mxu0 0.0
    %3928 = vmatpush1.msra.mxu0 0.0
    %3929 = vmatprep.subr.mxu0 0.0
    %3930 = vmatpush1.msra.mxu0 0.0
    %3931 = vmatprep.subr.mxu0 0.0
    %3932 = vmatpush1.msra.mxu0 0.0
    %3933 = vmatprep.subr.mxu0 0.0
    %3934 = vmatpush1.msra.mxu0 0.0
    %3935 = vmatprep.mubr.f32.mxu0 %v3869
    %3936 = vmatmul.mubr.f32.gmra.mrb[0].mxu0 %v3844
    %v3937 = vpop.f32.mrb[0].mxu0
    %v3938 = vadd.f32 %v93, %v3937
    %v3939 = vpop.f32.mrb[0].mxu0
    %3940 = vdwg.mxu0
    %v3941 = vmul.f32 %v3938, %v87
    %v3942 = vtanh.pop %v3941
    %v3943 = vmul.f32 %v3942, 0.5
    %v3944 = vadd.f32 %v3943, 0.5
    %v3945 = vsel %vm86, %v3942, %v3944
    %v3946 = vmul.f32 %v3945, %v3650
    %3948 = vrot.lane.b32.xlu0 %v3945, 64
    %v3949 = vpop.permute.xlu0 %3948
    %v3951 = vmul.f32 %v3945, %v3949
    %3953 = vrot.lane.b32.xlu0 %v3951, 32
    %v3954 = vpop.permute.xlu0 %3953
    %v3956 = vadd.f32 %v3946, %v3954
    %v3957 = vtanh.pop %v3956
    %3959 = vrot.lane.b32.xlu0 %v3957, 64
    %v3960 = vpop.permute.xlu0 %3959
    %v3962 = vmul.f32 %v3945, %v3960
    %3964 = vrot.lane.b32.xlu0 %v3962, 32
    %v3965 = vpop.permute.xlu0 %3964
    %3967 = vrot.lane.b32.xlu0 %v3767, 64
    %v3968 = vpop.permute.xlu0 %3967
    %v3970 = vsel %vm144, %v3965, %v3968
    %v3971 = vld [vmem:[#allocation7] sm:$0xff]
    %v3972 = vld [vmem:[#allocation7 + $0x8] sm:$0xff]
    %v3973 = vld [vmem:[#allocation7 + $0x10] sm:$0xff]
    %v3974 = vld [vmem:[#allocation7 + $0x18] sm:$0xff]
    %v3975 = vld [vmem:[#allocation7 + $0x20] sm:$0xff]
    %v3976 = vld [vmem:[#allocation7 + $0x28] sm:$0xff]
    %v3977 = vld [vmem:[#allocation7 + $0x30] sm:$0xff]
    %v3978 = vld [vmem:[#allocation7 + $0x38] sm:$0xff]
    %v3980 = vsel %vm929, %v3970, 0
    %3982 = vmatprep.subr.mxu0 0.0
    %3983 = vmatpush1.msra.mxu0 %v3971
    %3984 = vmatprep.subr.mxu0 0.0
    %3985 = vmatpush1.msra.mxu0 %v3972
    %3986 = vmatprep.subr.mxu0 0.0
    %3987 = vmatpush1.msra.mxu0 %v3973
    %3988 = vmatprep.subr.mxu0 0.0
    %3989 = vmatpush1.msra.mxu0 %v3974
    %3990 = vmatprep.subr.mxu0 0.0
    %3991 = vmatpush1.msra.mxu0 %v3975
    %3992 = vmatprep.subr.mxu0 0.0
    %3993 = vmatpush1.msra.mxu0 %v3976
    %3994 = vmatprep.subr.mxu0 0.0
    %3995 = vmatpush1.msra.mxu0 %v3977
    %3996 = vmatprep.subr.mxu0 0.0
    %3997 = vmatpush1.msra.mxu0 %v3978
    %3998 = vmatprep.subr.mxu0 0.0
    %3999 = vmatpush1.msra.mxu0 0.0
    %4000 = vmatprep.subr.mxu0 0.0
    %4001 = vmatpush1.msra.mxu0 0.0
    %4002 = vmatprep.subr.mxu0 0.0
    %4003 = vmatpush1.msra.mxu0 0.0
    %4004 = vmatprep.subr.mxu0 0.0
    %4005 = vmatpush1.msra.mxu0 0.0
    %4006 = vmatprep.subr.mxu0 0.0
    %4007 = vmatpush1.msra.mxu0 0.0
    %4008 = vmatprep.subr.mxu0 0.0
    %4009 = vmatpush1.msra.mxu0 0.0
    %4010 = vmatprep.subr.mxu0 0.0
    %4011 = vmatpush1.msra.mxu0 0.0
    %4012 = vmatprep.subr.mxu0 0.0
    %4013 = vmatpush1.msra.mxu0 0.0
    %4014 = vmatprep.subr.mxu0 0.0
    %4015 = vmatpush1.msra.mxu0 0.0
    %4016 = vmatprep.subr.mxu0 0.0
    %4017 = vmatpush1.msra.mxu0 0.0
    %4018 = vmatprep.subr.mxu0 0.0
    %4019 = vmatpush1.msra.mxu0 0.0
    %4020 = vmatprep.subr.mxu0 0.0
    %4021 = vmatpush1.msra.mxu0 0.0
    %4022 = vmatprep.subr.mxu0 0.0
    %4023 = vmatpush1.msra.mxu0 0.0
    %4024 = vmatprep.subr.mxu0 0.0
    %4025 = vmatpush1.msra.mxu0 0.0
    %4026 = vmatprep.subr.mxu0 0.0
    %4027 = vmatpush1.msra.mxu0 0.0
    %4028 = vmatprep.subr.mxu0 0.0
    %4029 = vmatpush1.msra.mxu0 0.0
    %4030 = vmatprep.subr.mxu0 0.0
    %4031 = vmatpush1.msra.mxu0 0.0
    %4032 = vmatprep.subr.mxu0 0.0
    %4033 = vmatpush1.msra.mxu0 0.0
    %4034 = vmatprep.subr.mxu0 0.0
    %4035 = vmatpush1.msra.mxu0 0.0
    %4036 = vmatprep.subr.mxu0 0.0
    %4037 = vmatpush1.msra.mxu0 0.0
    %4038 = vmatprep.subr.mxu0 0.0
    %4039 = vmatpush1.msra.mxu0 0.0
    %4040 = vmatprep.subr.mxu0 0.0
    %4041 = vmatpush1.msra.mxu0 0.0
    %4042 = vmatprep.subr.mxu0 0.0
    %4043 = vmatpush1.msra.mxu0 0.0
    %4044 = vmatprep.subr.mxu0 0.0
    %4045 = vmatpush1.msra.mxu0 0.0
    %4046 = vmatprep.mubr.f32.mxu0 0.0
    %4047 = vmatmul.mubr.f32.gmra.mrb[0].mxu0 %v3980
    %v4048 = vpop.f32.mrb[0].mxu0
    %v4049 = vadd.f32 %v100, %v4048
    %v4050 = vpop.f32.mrb[0].mxu0
    %4051 = vdwg.mxu0
    %v4052 = vmul.f32 %v4049, %v87
    %v4053 = vtanh.pop %v4052
    %v4054 = vmul.f32 %v4053, 0.5
    %v4055 = vadd.f32 %v4054, 0.5
    %v4056 = vsel %vm86, %v4053, %v4055
    %v4057 = vmul.f32 %v4056, %v3761
    %4059 = vrot.lane.b32.xlu0 %v4056, 64
    %v4060 = vpop.permute.xlu0 %4059
    %v4062 = vmul.f32 %v4056, %v4060
    %4064 = vrot.lane.b32.xlu0 %v4062, 32
    %v4065 = vpop.permute.xlu0 %4064
    %v4067 = vadd.f32 %v4057, %v4065
    %v4068 = vtanh.pop %v4067
    %4070 = vrot.lane.b32.xlu0 %v4068, 64
    %v4071 = vpop.permute.xlu0 %4070
    %v4073 = vmul.f32 %v4056, %v4071
    %v4074 = vld [vmem:[#allocation8] sm:$0xff]
    %v4075 = vld [vmem:[#allocation8 + $0x8] sm:$0xff]
    %v4076 = vld [vmem:[#allocation8 + $0x10] sm:$0xff]
    %v4077 = vld [vmem:[#allocation8 + $0x18] sm:$0xff]
    %4079 = vrot.lane.b32.xlu0 %v4073, 32
    %v4080 = vpop.permute.xlu0 %4079
    %v4081 = vsel %vm144, %v4080, 0
    %4083 = vmatprep.subr.mxu0 0.0
    %4084 = vmatpush1.msra.mxu0 %v4074
    %4085 = vmatprep.subr.mxu0 0.0
    %4086 = vmatpush1.msra.mxu0 %v4075
    %4087 = vmatprep.subr.mxu0 0.0
    %4088 = vmatpush1.msra.mxu0 %v4076
    %4089 = vmatprep.subr.mxu0 0.0
    %4090 = vmatpush1.msra.mxu0 %v4077
    %4091 = vmatprep.subr.mxu0 0.0
    %4092 = vmatpush1.msra.mxu0 0.0
    %4093 = vmatprep.subr.mxu0 0.0
    %4094 = vmatpush1.msra.mxu0 0.0
    %4095 = vmatprep.subr.mxu0 0.0
    %4096 = vmatpush1.msra.mxu0 0.0
    %4097 = vmatprep.subr.mxu0 0.0
    %4098 = vmatpush1.msra.mxu0 0.0
    %4099 = vmatprep.subr.mxu0 0.0
    %4100 = vmatpush1.msra.mxu0 0.0
    %4101 = vmatprep.subr.mxu0 0.0
    %4102 = vmatpush1.msra.mxu0 0.0
    %4103 = vmatprep.subr.mxu0 0.0
    %4104 = vmatpush1.msra.mxu0 0.0
    %4105 = vmatprep.subr.mxu0 0.0
    %4106 = vmatpush1.msra.mxu0 0.0
    %4107 = vmatprep.subr.mxu0 0.0
    %4108 = vmatpush1.msra.mxu0 0.0
    %4109 = vmatprep.subr.mxu0 0.0
    %4110 = vmatpush1.msra.mxu0 0.0
    %4111 = vmatprep.subr.mxu0 0.0
    %4112 = vmatpush1.msra.mxu0 0.0
    %4113 = vmatprep.subr.mxu0 0.0
    %4114 = vmatpush1.msra.mxu0 0.0
    %4115 = vmatprep.subr.mxu0 0.0
    %4116 = vmatpush1.msra.mxu0 0.0
    %4117 = vmatprep.subr.mxu0 0.0
    %4118 = vmatpush1.msra.mxu0 0.0
    %4119 = vmatprep.subr.mxu0 0.0
    %4120 = vmatpush1.msra.mxu0 0.0
    %4121 = vmatprep.subr.mxu0 0.0
    %4122 = vmatpush1.msra.mxu0 0.0
    %4123 = vmatprep.subr.mxu0 0.0
    %4124 = vmatpush1.msra.mxu0 0.0
    %4125 = vmatprep.subr.mxu0 0.0
    %4126 = vmatpush1.msra.mxu0 0.0
    %4127 = vmatprep.subr.mxu0 0.0
    %4128 = vmatpush1.msra.mxu0 0.0
    %4129 = vmatprep.subr.mxu0 0.0
    %4130 = vmatpush1.msra.mxu0 0.0
    %4131 = vmatprep.subr.mxu0 0.0
    %4132 = vmatpush1.msra.mxu0 0.0
    %4133 = vmatprep.subr.mxu0 0.0
    %4134 = vmatpush1.msra.mxu0 0.0
    %4135 = vmatprep.subr.mxu0 0.0
    %4136 = vmatpush1.msra.mxu0 0.0
    %4137 = vmatprep.subr.mxu0 0.0
    %4138 = vmatpush1.msra.mxu0 0.0
    %4139 = vmatprep.subr.mxu0 0.0
    %4140 = vmatpush1.msra.mxu0 0.0
    %4141 = vmatprep.subr.mxu0 0.0
    %4142 = vmatpush1.msra.mxu0 0.0
    %4143 = vmatprep.subr.mxu0 0.0
    %4144 = vmatpush1.msra.mxu0 0.0
    %4145 = vmatprep.subr.mxu0 0.0
    %4146 = vmatpush1.msra.mxu0 0.0
    %4147 = vmatprep.mubr.f32.mxu0 0.0
    %4148 = vmatmul.mubr.f32.gmra.mrb[0].mxu0 %v4081
    %v4149 = vpop.f32.mrb[0].mxu0
    %v4150 = vadd.f32 %v107, %v4149
    %v4151 = vpop.f32.mrb[0].mxu0
    %4152 = vdwg.mxu0
    %s4153 = scalar_lea.vmem [#allocation10], 56
    %4154 = vst [vmem:[%s4153] sm:$0xff] %v4150
    // Predicated region
    $region46: #{tpu_custom_call.1} parent=1 // pred_check
      _
    $region47: #{tpu_custom_call.1} parent=1 // pred_check_branch
      %4156 = sbr.rel (0) target = $region49
    $region48: #{tpu_custom_call.1} parent=1 // pred_region
      %s4158 = ssub.s32 1024, 1024
      %4159 = vsyncadd [#allocation4], %s4158
      %s4160 = sshll.u32 [#allocation10], 4
      %s4161 = int_to_ptr.vmem [resolvable:$true] %s4160
      %4166 = dma.vmem_to_hbm [thread:$0]  %s4161, 1024, %s7, [#allocation4], 128, 128, 8
    $region49: #{tpu_custom_call.1} parent=1 // pred_fallthru
      _
    // Predicated region
    $region50: #{tpu_custom_call.1} parent=1 // pred_check
      _
    $region51: #{tpu_custom_call.1} parent=1 // pred_check_branch
      %4168 = sbr.rel (0) target = $region53
    $region52: #{tpu_custom_call.1} parent=1 // pred_region
      %4169 = dma.done [#allocation4], 1024
    $region53: #{tpu_custom_call.1} parent=1 // pred_fallthru
      _
    %4170 = vsyncpa [#allocation3], 1
    %4171 = vsyncpa [#allocation6], 1
    %4172 = vsyncpa [#allocation9], 1
    %4173 = vsyncpa [#allocation4], 1

</llo_original>
